<compile_context>
chip_gen: v5e
topology: v5e:2x2
jax: 0.10.0
libtpu: 0.0.40
codegen_flags: <defaults>
</compile_context>

<pallas_src>
import functools

import jax
import jax.numpy as jnp
from jax import lax
from jax.experimental import pallas as pl
from jax.experimental.pallas import tpu as pltpu

_MASK_VALUE = -1e9


def _layer_norm(x, gamma, beta, eps=1e-5):
    mean = jnp.mean(x, axis=-1, keepdims=True)
    var = jnp.mean((x - mean) ** 2, axis=-1, keepdims=True)
    return (x - mean) * lax.rsqrt(var + eps) * gamma + beta


# ---------------------------------------------------------------------------
# Stand-alone LayerNorm kernel (Decoder.output_norm; input_norm is fused into
# the first decoder layer).
# ---------------------------------------------------------------------------
def _ln_kernel(x_ref, g_ref, b_ref, o_ref):
    xf = x_ref[...].astype(jnp.float32)
    o_ref[...] = _layer_norm(xf, g_ref[0, :], b_ref[0, :]).astype(o_ref.dtype)


def layer_norm(x, gamma=None, beta=None):
    B, S, H = x.shape
    g = (jnp.ones((1, H), jnp.float32) if gamma is None
         else jnp.asarray(gamma, jnp.float32).reshape(1, H))
    b = (jnp.zeros((1, H), jnp.float32) if beta is None
         else jnp.asarray(beta, jnp.float32).reshape(1, H))
    return pl.pallas_call(
        _ln_kernel,
        out_shape=jax.ShapeDtypeStruct((B, S, H), x.dtype),
        grid_spec=pltpu.PrefetchScalarGridSpec(
            num_scalar_prefetch=0,
            grid=(B,),
            in_specs=[pl.BlockSpec((None, S, H), lambda i: (i, 0, 0)),
                      pl.BlockSpec((1, H), lambda i: (0, 0)),
                      pl.BlockSpec((1, H), lambda i: (0, 0))],
            out_specs=pl.BlockSpec((None, S, H), lambda i: (i, 0, 0)),
        ),
        compiler_params=pltpu.CompilerParams(dimension_semantics=("parallel",)),
    )(x, g, b)


# ---------------------------------------------------------------------------
# One DecoderLayer as a single pallas_call.
# ---------------------------------------------------------------------------
def decoder_layer_kernel(num_heads, tq, tk, fuse_input_norm, compute_dtype,
                         x_ref, fac_ref,
                         wq_ref, wk_ref, wv_ref, wo_ref,
                         w1_ref, w2_ref, w3_ref,
                         ln_g_ref, ln_b_ref,
                         xpa_ref, xpf_ref, pre_ref, ff_ref,
                         k_s, v_s):
    # x_ref: (S, H); fac_ref: (NH,1,1) ALiBi factors; k_s/v_s: (NH, S, hd).
    qt = pl.program_id(1)
    S, H = x_ref.shape
    NH = num_heads
    hd = H // NH
    scale = float(hd) ** (-0.5)
    num_kv = S // tk

    # --- once per batch element: full-sequence K/V into head-major scratch ---
    # NOTE: relies on the qt grid axis being sequential ("arbitrary") so qt==0
    # runs before the other query tiles of the same batch element.
    @pl.when(qt == 0)
    def _():
        xf = x_ref[...].astype(jnp.float32)
        if fuse_input_norm:
            xf = _layer_norm(xf, 1.0, 0.0)          # Decoder.input_norm (no affine)
        xn = _layer_norm(xf, ln_g_ref[0, :], ln_b_ref[0, :]).astype(compute_dtype)
        for w_ref, dst in ((wk_ref, k_s), (wv_ref, v_s)):
            proj = jnp.dot(xn, w_ref[...],
                           preferred_element_type=jnp.float32)          # (S, H)
            dst[...] = proj.reshape(S, NH, hd).transpose(
                1, 0, 2).astype(compute_dtype)                          # (NH, S, hd)

    # --- per-tile residual stream and Q projection (only tq rows per step) ---
    row0 = pl.multiple_of(qt * tq, tq)
    x_tile = x_ref[pl.ds(row0, tq), :].astype(jnp.float32)              # (tq, H)
    if fuse_input_norm:
        x_tile = _layer_norm(x_tile, 1.0, 0.0)
    xn_tile = _layer_norm(x_tile, ln_g_ref[0, :],
                          ln_b_ref[0, :]).astype(compute_dtype)
    q = jnp.dot(xn_tile, wq_ref[...], preferred_element_type=jnp.float32)
    qh = q.reshape(tq, NH, hd).transpose(1, 0, 2).astype(compute_dtype)  # (NH, tq, hd)

    # --- in-kernel causal + ALiBi bias helpers (hoisted out of the KV loop) ---
    fac = fac_ref[...]                                                   # (NH, 1, 1)
    q_pos = row0 + lax.broadcasted_iota(jnp.int32, (tq, tk), 0)
    k_rel = lax.broadcasted_iota(jnp.int32, (tq, tk), 1)
    d0 = k_rel - q_pos                                                   # k_pos - q_pos - col0

    # --- flash-style online softmax over KV chunks (bounds the score slab) ---
    def kv_step(c, carry):
        m, l, acc = carry
        col0 = pl.multiple_of(c * tk, tk)
        kh = k_s[:, pl.ds(col0, tk), :]                                  # (NH, tk, hd)
        vh = v_s[:, pl.ds(col0, tk), :]
        s = jnp.einsum('hqd,hkd->hqk', qh, kh,
                       preferred_element_type=jnp.float32) * scale       # (NH, tq, tk)
        diff = d0 + col0                                                 # k_pos - q_pos
        bias = (jnp.where(diff > 0, _MASK_VALUE, 0.0)
                + fac * diff.astype(jnp.float32))                        # (NH, tq, tk)
        s = s + bias
        m_new = jnp.maximum(m, jnp.max(s, axis=-1, keepdims=True))
        alpha = jnp.exp(m - m_new)
        p = jnp.exp(s - m_new)
        l_new = alpha * l + jnp.sum(p, axis=-1, keepdims=True)
        ctx = jnp.einsum('hqk,hkd->hqd', p.astype(compute_dtype), vh,
                         preferred_element_type=jnp.float32)             # (NH, tq, hd)
        return m_new, l_new, alpha * acc + ctx

    carry0 = (jnp.full((NH, tq, 1), -1e30, jnp.float32),
              jnp.zeros((NH, tq, 1), jnp.float32),
              jnp.zeros((NH, tq, hd), jnp.float32))
    _, l_fin, acc = lax.fori_loop(0, num_kv, kv_step, carry0)

    ctx = acc * pl.reciprocal(l_fin, approx=True)                        # (NH, tq, hd)
    attn_pre = ctx.transpose(1, 0, 2).reshape(tq, H)                     # (tq, H) f32

    attn_out = jnp.dot(attn_pre.astype(compute_dtype), wo_ref[...],
                       preferred_element_type=jnp.float32)
    x_post_attn = x_tile + _layer_norm(attn_out, ln_g_ref[1, :], ln_b_ref[1, :])

    # --- bilinear feed-forward on the tile ---
    xn2 = _layer_norm(x_post_attn, ln_g_ref[2, :],
                      ln_b_ref[2, :]).astype(compute_dtype)
    x1 = jnp.dot(xn2, w1_ref[...], preferred_element_type=jnp.float32)
    x2 = jnp.dot(xn2, w2_ref[...], preferred_element_type=jnp.float32)
    ff = jnp.dot((x1 * x2).astype(compute_dtype), w3_ref[...],
                 preferred_element_type=jnp.float32)
    x_post_ff = x_post_attn + _layer_norm(ff, ln_g_ref[3, :], ln_b_ref[3, :])

    xpa_ref[...] = x_post_attn.astype(xpa_ref.dtype)
    xpf_ref[...] = x_post_ff.astype(xpf_ref.dtype)
    pre_ref[...] = attn_pre.astype(pre_ref.dtype)
    ff_ref[...] = ff.astype(ff_ref.dtype)


def _pick_tile(S, candidates):
    for c in candidates:
        if S >= c and S % c == 0:
            return c
    return S


def _vmem_limit_bytes(S, H, NH, tq, tk, x_dtype, compute_dtype, single_buf_w):
    cw = jnp.dtype(compute_dtype).itemsize
    xw = jnp.dtype(x_dtype).itemsize
    wbuf = 1 if single_buf_w else 2
    weights = wbuf * (16 * H * H * cw + 2 * 4 * H * 4 + NH * 4)
    io = 2 * S * H * xw + 2 * 4 * tq * H * xw       # x (dbl-buf) + 4 tiled outputs
    scratch = 2 * S * H * cw                        # persistent K + V scratch
    live = (2 * NH * tq * tk * 4 + NH * tq * (H // NH) * 4
            + 2 * tq * 4 * H * 4 + 2 * tq * tk * 4)
    est = weights + io + scratch + live + (4 << 20)
    try:
        cap = int(pltpu.get_tpu_info().vmem_capacity_bytes) * 3 // 4
    except Exception:  # e.g. interpret mode / no TPU info available
        cap = 96 << 20
    return int(min(cap, max(32 << 20, est)))


def decoder_layer(x, lp, num_heads, *, fuse_input_norm=False,
                  compute_dtype=jnp.bfloat16, tq=None, tk=None):
    B, S, H = x.shape
    NH = num_heads
    assert H % NH == 0
    hd = H // NH
    if tq is None:
        # TODO(synk): for large S not divisible by 128, pad S instead of tq=S.
        tq = _pick_tile(S, (128,))
    assert S % tq == 0
    if tk is None:
        tk = _pick_tile(S, (512, 256, 128))
    assert S % tk == 0
    QT = S // tq
    dt = x.dtype
    cd = compute_dtype

    kernel = functools.partial(decoder_layer_kernel, NH, tq, tk,
                               fuse_input_norm, cd)

    def build(single_buf_w):
        def _const(shape):
            n = len(shape)
            kwargs = {}
            if single_buf_w:
                # constant index_map -> double-buffering is pure VMEM waste
                kwargs["pipeline_mode"] = pl.Buffered(1)
            return pl.BlockSpec(shape, lambda b, q: (0,) * n, **kwargs)

        in_specs = [
            pl.BlockSpec((None, S, H), lambda b, q: (b, 0, 0)),  # x (full seq)
            _const((NH, 1, 1)),                                  # ALiBi factors
            _const((H, H)), _const((H, H)), _const((H, H)), _const((H, H)),
            _const((H, 4 * H)), _const((H, 4 * H)), _const((4 * H, H)),
            _const((4, H)), _const((4, H)),
        ]
        out_spec = pl.BlockSpec((None, tq, H), lambda b, q: (b, q, 0))
        return pl.pallas_call(
            kernel,
            out_shape=[jax.ShapeDtypeStruct((B, S, H), dt)] * 4,
            grid_spec=pltpu.PrefetchScalarGridSpec(
                num_scalar_prefetch=0,
                grid=(B, QT),
                in_specs=in_specs,
                out_specs=[out_spec] * 4,
                scratch_shapes=[pltpu.VMEM((NH, S, hd), cd)] * 2,
            ),
            compiler_params=pltpu.CompilerParams(
                dimension_semantics=("parallel", "arbitrary"),
                vmem_limit_bytes=_vmem_limit_bytes(
                    S, H, NH, tq, tk, dt, cd, single_buf_w),
            ),
        )

    alibi_fac = jnp.logspace(0.0, -8.0, num=NH, base=2.0,
                             dtype=jnp.float32).reshape(NH, 1, 1)
    args = (x, alibi_fac,
            jnp.asarray(lp["wq"], cd), jnp.asarray(lp["wk"], cd),
            jnp.asarray(lp["wv"], cd), jnp.asarray(lp["wo"], cd),
            jnp.asarray(lp["w1"], cd), jnp.asarray(lp["w2"], cd),
            jnp.asarray(lp["w3"], cd),
            jnp.asarray(lp["ln_gamma"], jnp.float32),
            jnp.asarray(lp["ln_beta"], jnp.float32))

    want_single = hasattr(pl, "Buffered")
    try:
        return build(want_single)(*args)
    except Exception:
        if not want_single:
            raise
        # Fallback if Buffered(1) single-buffering is rejected on this backend.
        return build(False)(*args)


# ---------------------------------------------------------------------------
# Full Decoder forward: (fused) input_norm -> layer stack -> output_norm.
# ---------------------------------------------------------------------------
def decoder_forward(x, params, num_heads, compute_dtype=jnp.bfloat16, tq=None):
    layers = params["layers"]
    h = x if layers else layer_norm(x)
    post_attn, post_ff, attn_pres, ffs = [], [], [], []
    for li, lp in enumerate(layers):
        xpa, xpf, pre, ff = decoder_layer(
            h, lp, num_heads,
            fuse_input_norm=(li == 0),        # Decoder.input_norm fused in layer 0
            compute_dtype=compute_dtype, tq=tq)
        post_attn.append(xpa)
        post_ff.append(xpf)
        attn_pres.append(pre)
        ffs.append(ff)
        h = xpf
    final = layer_norm(h, params["out_gamma"], params["out_beta"])
    return {
        "residuals_post_attn": tuple(post_attn),
        "residuals_post_ff": tuple(post_ff),
        "attn_outputs_prelinear": tuple(attn_pres),
        "ff_outputs": tuple(ffs),
        "final_hidden_state": final,
    }


# ---------------------------------------------------------------------------
# Pure-JAX f32 reference mirroring the PyTorch Decoder (dropout=identity).
# ---------------------------------------------------------------------------
def build_attn_bias(seq_len, num_heads, dtype=jnp.float32):
    factors = jnp.logspace(0.0, -8.0, num=num_heads, base=2.0, dtype=jnp.float32)
    idx = jnp.arange(seq_len)
    alibi = (idx[None, :] - idx[:, None]).astype(jnp.float32)     # [q, k] = k - q
    mask = jnp.where(idx[None, :] > idx[:, None], _MASK_VALUE, 0.0)
    bias = mask[None, :, :] + factors[:, None, None] * alibi[None, :, :]
    return bias[None].astype(dtype)


def decoder_ref(x, params, num_heads):
    B, S, H = x.shape
    NH = num_heads
    hd = H // NH
    scale = float(hd) ** (-0.5)
    attn_bias = build_attn_bias(S, NH)

    h = _layer_norm(x, 1.0, 0.0)
    post_attn, post_ff, attn_pres, ffs = [], [], [], []
    for lp in params["layers"]:
        g, bt = (jnp.asarray(lp["ln_gamma"], jnp.float32),
                 jnp.asarray(lp["ln_beta"], jnp.float32))
        wq, wk, wv, wo = (jnp.asarray(lp[k], jnp.float32)
                          for k in ("wq", "wk", "wv", "wo"))
        w1, w2, w3 = (jnp.asarray(lp[k], jnp.float32) for k in ("w1", "w2", "w3"))
        xn = _layer_norm(h, g[0], bt[0])
        q = (xn @ wq).reshape(B, S, NH, hd)
        k = (xn @ wk).reshape(B, S, NH, hd)
        v = (xn @ wv).reshape(B, S, NH, hd)
        attn = jnp.einsum('bqhd,bkhd->bhqk', q, k) * scale + attn_bias
        attn = jax.nn.softmax(attn, axis=-1)
        pre = jnp.einsum('bhqk,bkhd->bqhd', attn, v).reshape(B, S, H)
        attn_out = pre @ wo
        x_post_attn = h + _layer_norm(attn_out, g[1], bt[1])
        xn2 = _layer_norm(x_post_attn, g[2], bt[2])
        ff = ((xn2 @ w1) * (xn2 @ w2)) @ w3
        x_post_ff = x_post_attn + _layer_norm(ff, g[3], bt[3])
        post_attn.append(x_post_attn)
        post_ff.append(x_post_ff)
        attn_pres.append(pre)
        ffs.append(ff)
        h = x_post_ff
    final = _layer_norm(h, params["out_gamma"], params["out_beta"])
    return {
        "residuals_post_attn": tuple(post_attn),
        "residuals_post_ff": tuple(post_ff),
        "attn_outputs_prelinear": tuple(attn_pres),
        "ff_outputs": tuple(ffs),
        "final_hidden_state": final,
    }


if __name__ == "__main__":
    B, S, H, NH, L = 2, 8, 32, 4, 2   # batch=2, seq=8, hidden=32, heads=4, layers=2

    key = jax.random.PRNGKey(0)
    ks = jax.random.split(key, L + 1)

    def make_layer(k):
        kk = jax.random.split(k, 9)

        def init(kw, shape, fan_in):
            w = jax.random.uniform(kw, shape, jnp.float32, -1.0, 1.0) * (fan_in ** -0.5)
            return w.astype(jnp.bfloat16)   # pre-cast: params live in compute dtype

        return {
            # Linear weights stored as (in, out) so kernels do y = x @ W.
            "wq": init(kk[0], (H, H), H),
            "wk": init(kk[1], (H, H), H),
            "wv": init(kk[2], (H, H), H),
            "wo": init(kk[3], (H, H), H),
            "w1": init(kk[4], (H, 4 * H), H),
            "w2": init(kk[5], (H, 4 * H), H),
            "w3": init(kk[6], (4 * H, H), 4 * H),
            # 4 LayerNorms (attn_in, attn_out, ff_in, ff_out).
            "ln_gamma": 1.0 + 0.1 * jax.random.normal(kk[7], (4, H), jnp.float32),
            "ln_beta": 0.1 * jax.random.normal(kk[8], (4, H), jnp.float32),
        }

    params = {
        "layers": [make_layer(ks[i]) for i in range(L)],
        "out_gamma": jnp.ones((H,), jnp.float32),
        "out_beta": jnp.zeros((H,), jnp.float32),
    }
    x = jax.random.normal(ks[L], (B, S, H), jnp.float32)

    out = decoder_forward(x, params, NH)
    out = jax.block_until_ready(out)
    ref = decoder_ref(x, params, NH)

    def check(name, got, ref_v, tol=1e-1):
        # bf16 MXU inputs with f32 accumulation -> loose relative-to-max check.
        assert got.shape == ref_v.shape, (name, got.shape, ref_v.shape)
        err = float(jnp.max(jnp.abs(got.astype(jnp.float32) - ref_v)) /
                    (jnp.max(jnp.abs(ref_v)) + 1e-9))
        assert err < tol, (name, err)

    for field in ("residuals_post_attn", "residuals_post_ff",
                  "attn_outputs_prelinear", "ff_outputs"):
        for li, (g_arr, r_arr) in enumerate(zip(out[field], ref[field])):
            check(f"{field}[{li}]", g_arr, r_arr)
    check("final_hidden_state", out["final_hidden_state"],
          ref["final_hidden_state"])

    print("KERNEL_OK")
</pallas_src>

<mosaic_0001>
module attributes {stable_mosaic.version = 11 : i64} {
  func.func @decoder_layer_kernel(%arg0: i32, %arg1: i32, %arg2: memref<1x8x32xf32, #tpu.memory_space<vmem>>, %arg3: memref<4x1x1xf32, #tpu.memory_space<vmem>>, %arg4: memref<32x32xbf16, #tpu.memory_space<vmem>>, %arg5: memref<32x32xbf16, #tpu.memory_space<vmem>>, %arg6: memref<32x32xbf16, #tpu.memory_space<vmem>>, %arg7: memref<32x32xbf16, #tpu.memory_space<vmem>>, %arg8: memref<32x128xbf16, #tpu.memory_space<vmem>>, %arg9: memref<32x128xbf16, #tpu.memory_space<vmem>>, %arg10: memref<128x32xbf16, #tpu.memory_space<vmem>>, %arg11: memref<4x32xf32, #tpu.memory_space<vmem>>, %arg12: memref<4x32xf32, #tpu.memory_space<vmem>>, %arg13: memref<1x8x32xf32, #tpu.memory_space<vmem>>, %arg14: memref<1x8x32xf32, #tpu.memory_space<vmem>>, %arg15: memref<1x8x32xf32, #tpu.memory_space<vmem>>, %arg16: memref<1x8x32xf32, #tpu.memory_space<vmem>>, %arg17: memref<4x8x8xbf16, #tpu.memory_space<vmem>>, %arg18: memref<4x8x8xbf16, #tpu.memory_space<vmem>>) attributes {dimension_semantics = [#tpu.dimension_semantics<parallel>, #tpu.dimension_semantics<arbitrary>], iteration_bounds = array<i64: 2, 1>, scalar_prefetch = 0 : i64, scratch_operands = 2 : i64, tpu.core_type = #tpu.core_type<tc>, window_params = [{transform_indices = @transform_0, window_bounds = array<i64: 1, 8, 32>}, {pipeline_mode = #tpu.pipeline_mode<synchronous>, transform_indices = @transform_1, window_bounds = array<i64: 4, 1, 1>}, {pipeline_mode = #tpu.pipeline_mode<synchronous>, transform_indices = @transform_2, window_bounds = array<i64: 32, 32>}, {pipeline_mode = #tpu.pipeline_mode<synchronous>, transform_indices = @transform_3, window_bounds = array<i64: 32, 32>}, {pipeline_mode = #tpu.pipeline_mode<synchronous>, transform_indices = @transform_4, window_bounds = array<i64: 32, 32>}, {pipeline_mode = #tpu.pipeline_mode<synchronous>, transform_indices = @transform_5, window_bounds = array<i64: 32, 32>}, {pipeline_mode = #tpu.pipeline_mode<synchronous>, transform_indices = @transform_6, window_bounds = array<i64: 32, 128>}, {pipeline_mode = #tpu.pipeline_mode<synchronous>, transform_indices = @transform_7, window_bounds = array<i64: 32, 128>}, {pipeline_mode = #tpu.pipeline_mode<synchronous>, transform_indices = @transform_8, window_bounds = array<i64: 128, 32>}, {pipeline_mode = #tpu.pipeline_mode<synchronous>, transform_indices = @transform_9, window_bounds = array<i64: 4, 32>}, {pipeline_mode = #tpu.pipeline_mode<synchronous>, transform_indices = @transform_10, window_bounds = array<i64: 4, 32>}, {transform_indices = @transform_11, window_bounds = array<i64: 1, 8, 32>}, {transform_indices = @transform_12, window_bounds = array<i64: 1, 8, 32>}, {transform_indices = @transform_13, window_bounds = array<i64: 1, 8, 32>}, {transform_indices = @transform_14, window_bounds = array<i64: 1, 8, 32>}]} {
    %c0_i32 = arith.constant 0 : i32
    %0 = arith.cmpi eq, %arg1, %c0_i32 : i32
    %1 = arith.extui %0 : i1 to i32
    %c0_i32_0 = arith.constant 0 : i32
    %2 = arith.cmpi ne, %1, %c0_i32_0 : i32
    scf.if %2 {
      %c0_88 = arith.constant 0 : index
      %c0_89 = arith.constant 0 : index
      %c0_90 = arith.constant 0 : index
      %230 = vector.load %arg2[%c0_88, %c0_89, %c0_90] : memref<1x8x32xf32, #tpu.memory_space<vmem>>, vector<1x8x32xf32>
      %231 = vector.shape_cast %230 : vector<1x8x32xf32> to vector<8x32xf32>
      %cst_91 = arith.constant dense<0.000000e+00> : vector<8xf32>
      %232 = vector.multi_reduction <add>, %231, %cst_91 [1] : vector<8x32xf32> to vector<8xf32>
      %233 = vector.shape_cast %232 : vector<8xf32> to vector<8x1xf32>
      %cst_92 = arith.constant 3.200000e+01 : f32
      %234 = vector.broadcast %cst_92 : f32 to vector<8x1xf32>
      %235 = arith.divf %233, %234 : vector<8x1xf32>
      %236 = vector.broadcast %235 : vector<8x1xf32> to vector<8x32xf32>
      %237 = arith.subf %231, %236 : vector<8x32xf32>
      %238 = arith.mulf %237, %237 : vector<8x32xf32>
      %cst_93 = arith.constant dense<0.000000e+00> : vector<8xf32>
      %239 = vector.multi_reduction <add>, %238, %cst_93 [1] : vector<8x32xf32> to vector<8xf32>
      %240 = vector.shape_cast %239 : vector<8xf32> to vector<8x1xf32>
      %cst_94 = arith.constant 3.200000e+01 : f32
      %241 = vector.broadcast %cst_94 : f32 to vector<8x1xf32>
      %242 = arith.divf %240, %241 : vector<8x1xf32>
      %243 = vector.broadcast %235 : vector<8x1xf32> to vector<8x32xf32>
      %244 = arith.subf %231, %243 : vector<8x32xf32>
      %cst_95 = arith.constant 9.99999974E-6 : f32
      %245 = vector.broadcast %cst_95 : f32 to vector<8x1xf32>
      %246 = arith.addf %242, %245 : vector<8x1xf32>
      %247 = math.rsqrt %246 : vector<8x1xf32>
      %248 = vector.broadcast %247 : vector<8x1xf32> to vector<8x32xf32>
      %249 = arith.mulf %244, %248 : vector<8x32xf32>
      %cst_96 = arith.constant 1.000000e+00 : f32
      %250 = vector.broadcast %cst_96 : f32 to vector<8x32xf32>
      %251 = arith.mulf %249, %250 : vector<8x32xf32>
      %cst_97 = arith.constant 0.000000e+00 : f32
      %252 = vector.broadcast %cst_97 : f32 to vector<8x32xf32>
      %253 = arith.addf %251, %252 : vector<8x32xf32>
      %c0_98 = arith.constant 0 : index
      %c0_99 = arith.constant 0 : index
      %254 = vector.load %arg11[%c0_98, %c0_99] : memref<4x32xf32, #tpu.memory_space<vmem>>, vector<1x32xf32>
      %255 = vector.shape_cast %254 : vector<1x32xf32> to vector<32xf32>
      %c0_100 = arith.constant 0 : index
      %c0_101 = arith.constant 0 : index
      %256 = vector.load %arg12[%c0_100, %c0_101] : memref<4x32xf32, #tpu.memory_space<vmem>>, vector<1x32xf32>
      %257 = vector.shape_cast %256 : vector<1x32xf32> to vector<32xf32>
      %cst_102 = arith.constant dense<0.000000e+00> : vector<8xf32>
      %258 = vector.multi_reduction <add>, %253, %cst_102 [1] : vector<8x32xf32> to vector<8xf32>
      %259 = vector.shape_cast %258 : vector<8xf32> to vector<8x1xf32>
      %cst_103 = arith.constant 3.200000e+01 : f32
      %260 = vector.broadcast %cst_103 : f32 to vector<8x1xf32>
      %261 = arith.divf %259, %260 : vector<8x1xf32>
      %262 = vector.broadcast %261 : vector<8x1xf32> to vector<8x32xf32>
      %263 = arith.subf %253, %262 : vector<8x32xf32>
      %264 = arith.mulf %263, %263 : vector<8x32xf32>
      %cst_104 = arith.constant dense<0.000000e+00> : vector<8xf32>
      %265 = vector.multi_reduction <add>, %264, %cst_104 [1] : vector<8x32xf32> to vector<8xf32>
      %266 = vector.shape_cast %265 : vector<8xf32> to vector<8x1xf32>
      %cst_105 = arith.constant 3.200000e+01 : f32
      %267 = vector.broadcast %cst_105 : f32 to vector<8x1xf32>
      %268 = arith.divf %266, %267 : vector<8x1xf32>
      %269 = vector.broadcast %261 : vector<8x1xf32> to vector<8x32xf32>
      %270 = arith.subf %253, %269 : vector<8x32xf32>
      %cst_106 = arith.constant 9.99999974E-6 : f32
      %271 = vector.broadcast %cst_106 : f32 to vector<8x1xf32>
      %272 = arith.addf %268, %271 : vector<8x1xf32>
      %273 = math.rsqrt %272 : vector<8x1xf32>
      %274 = vector.broadcast %273 : vector<8x1xf32> to vector<8x32xf32>
      %275 = arith.mulf %270, %274 : vector<8x32xf32>
      %276 = vector.shape_cast %255 : vector<32xf32> to vector<1x32xf32>
      %277 = vector.broadcast %276 : vector<1x32xf32> to vector<8x32xf32>
      %278 = arith.mulf %275, %277 : vector<8x32xf32>
      %279 = vector.shape_cast %257 : vector<32xf32> to vector<1x32xf32>
      %280 = vector.broadcast %279 : vector<1x32xf32> to vector<8x32xf32>
      %281 = arith.addf %278, %280 : vector<8x32xf32>
      %282 = arith.truncf %281 : vector<8x32xf32> to vector<8x32xbf16>
      %c0_107 = arith.constant 0 : index
      %c0_108 = arith.constant 0 : index
      %283 = vector.load %arg5[%c0_107, %c0_108] : memref<32x32xbf16, #tpu.memory_space<vmem>>, vector<32x32xbf16>
      %cst_109 = arith.constant dense<0.000000e+00> : vector<8x32xf32>
      %284 = tpu.matmul %282, %283, %cst_109 {dimension_numbers = #tpu.dot_dimension_numbers<[1], [0], [0], [1], [0, 0, 1, 1], [], []>} : vector<8x32xbf16>, vector<32x32xbf16>, vector<8x32xf32> -> vector<8x32xf32>
      %285 = vector.shape_cast %284 : vector<8x32xf32> to vector<8x4x8xf32>
      %286 = tpu.transpose %285, [1, 0, 2] : vector<8x4x8xf32> -> vector<4x8x8xf32>
      %287 = arith.truncf %286 : vector<4x8x8xf32> to vector<4x8x8xbf16>
      %c0_110 = arith.constant 0 : index
      %c0_111 = arith.constant 0 : index
      %c0_112 = arith.constant 0 : index
      %288 = vector.load %arg17[%c0_110, %c0_111, %c0_112] : memref<4x8x8xbf16, #tpu.memory_space<vmem>>, vector<4x8x8xbf16>
      tpu.vector_store %arg17[%c0_110, %c0_111, %c0_112], %287 {strides = array<i32>} : memref<4x8x8xbf16, #tpu.memory_space<vmem>>, vector<4x8x8xbf16>,
      %c0_113 = arith.constant 0 : index
      %c0_114 = arith.constant 0 : index
      %289 = vector.load %arg6[%c0_113, %c0_114] : memref<32x32xbf16, #tpu.memory_space<vmem>>, vector<32x32xbf16>
      %cst_115 = arith.constant dense<0.000000e+00> : vector<8x32xf32>
      %290 = tpu.matmul %282, %289, %cst_115 {dimension_numbers = #tpu.dot_dimension_numbers<[1], [0], [0], [1], [0, 0, 1, 1], [], []>} : vector<8x32xbf16>, vector<32x32xbf16>, vector<8x32xf32> -> vector<8x32xf32>
      %291 = vector.shape_cast %290 : vector<8x32xf32> to vector<8x4x8xf32>
      %292 = tpu.transpose %291, [1, 0, 2] : vector<8x4x8xf32> -> vector<4x8x8xf32>
      %293 = arith.truncf %292 : vector<4x8x8xf32> to vector<4x8x8xbf16>
      %c0_116 = arith.constant 0 : index
      %c0_117 = arith.constant 0 : index
      %c0_118 = arith.constant 0 : index
      %294 = vector.load %arg18[%c0_116, %c0_117, %c0_118] : memref<4x8x8xbf16, #tpu.memory_space<vmem>>, vector<4x8x8xbf16>
      tpu.vector_store %arg18[%c0_116, %c0_117, %c0_118], %293 {strides = array<i32>} : memref<4x8x8xbf16, #tpu.memory_space<vmem>>, vector<4x8x8xbf16>,
    } else {
    }
    %c8_i32 = arith.constant 8 : i32
    %3 = arith.muli %arg1, %c8_i32 : i32
    %4 = tpu.assume_multiple %3, 8 : i32
    %c0 = arith.constant 0 : index
    %5 = arith.index_cast %4 : i32 to index
    %c0_1 = arith.constant 0 : index
    %6 = vector.load %arg2[%c0, %5, %c0_1] : memref<1x8x32xf32, #tpu.memory_space<vmem>>, vector<1x8x32xf32>
    %7 = vector.shape_cast %6 : vector<1x8x32xf32> to vector<8x32xf32>
    %cst = arith.constant dense<0.000000e+00> : vector<8xf32>
    %8 = vector.multi_reduction <add>, %7, %cst [1] : vector<8x32xf32> to vector<8xf32>
    %9 = vector.shape_cast %8 : vector<8xf32> to vector<8x1xf32>
    %cst_2 = arith.constant 3.200000e+01 : f32
    %10 = vector.broadcast %cst_2 : f32 to vector<8x1xf32>
    %11 = arith.divf %9, %10 : vector<8x1xf32>
    %12 = vector.broadcast %11 : vector<8x1xf32> to vector<8x32xf32>
    %13 = arith.subf %7, %12 : vector<8x32xf32>
    %14 = arith.mulf %13, %13 : vector<8x32xf32>
    %cst_3 = arith.constant dense<0.000000e+00> : vector<8xf32>
    %15 = vector.multi_reduction <add>, %14, %cst_3 [1] : vector<8x32xf32> to vector<8xf32>
    %16 = vector.shape_cast %15 : vector<8xf32> to vector<8x1xf32>
    %cst_4 = arith.constant 3.200000e+01 : f32
    %17 = vector.broadcast %cst_4 : f32 to vector<8x1xf32>
    %18 = arith.divf %16, %17 : vector<8x1xf32>
    %19 = vector.broadcast %11 : vector<8x1xf32> to vector<8x32xf32>
    %20 = arith.subf %7, %19 : vector<8x32xf32>
    %cst_5 = arith.constant 9.99999974E-6 : f32
    %21 = vector.broadcast %cst_5 : f32 to vector<8x1xf32>
    %22 = arith.addf %18, %21 : vector<8x1xf32>
    %23 = math.rsqrt %22 : vector<8x1xf32>
    %24 = vector.broadcast %23 : vector<8x1xf32> to vector<8x32xf32>
    %25 = arith.mulf %20, %24 : vector<8x32xf32>
    %cst_6 = arith.constant 1.000000e+00 : f32
    %26 = vector.broadcast %cst_6 : f32 to vector<8x32xf32>
    %27 = arith.mulf %25, %26 : vector<8x32xf32>
    %cst_7 = arith.constant 0.000000e+00 : f32
    %28 = vector.broadcast %cst_7 : f32 to vector<8x32xf32>
    %29 = arith.addf %27, %28 : vector<8x32xf32>
    %c0_8 = arith.constant 0 : index
    %c0_9 = arith.constant 0 : index
    %30 = vector.load %arg11[%c0_8, %c0_9] : memref<4x32xf32, #tpu.memory_space<vmem>>, vector<1x32xf32>
    %31 = vector.shape_cast %30 : vector<1x32xf32> to vector<32xf32>
    %c0_10 = arith.constant 0 : index
    %c0_11 = arith.constant 0 : index
    %32 = vector.load %arg12[%c0_10, %c0_11] : memref<4x32xf32, #tpu.memory_space<vmem>>, vector<1x32xf32>
    %33 = vector.shape_cast %32 : vector<1x32xf32> to vector<32xf32>
    %cst_12 = arith.constant dense<0.000000e+00> : vector<8xf32>
    %34 = vector.multi_reduction <add>, %29, %cst_12 [1] : vector<8x32xf32> to vector<8xf32>
    %35 = vector.shape_cast %34 : vector<8xf32> to vector<8x1xf32>
    %cst_13 = arith.constant 3.200000e+01 : f32
    %36 = vector.broadcast %cst_13 : f32 to vector<8x1xf32>
    %37 = arith.divf %35, %36 : vector<8x1xf32>
    %38 = vector.broadcast %37 : vector<8x1xf32> to vector<8x32xf32>
    %39 = arith.subf %29, %38 : vector<8x32xf32>
    %40 = arith.mulf %39, %39 : vector<8x32xf32>
    %cst_14 = arith.constant dense<0.000000e+00> : vector<8xf32>
    %41 = vector.multi_reduction <add>, %40, %cst_14 [1] : vector<8x32xf32> to vector<8xf32>
    %42 = vector.shape_cast %41 : vector<8xf32> to vector<8x1xf32>
    %cst_15 = arith.constant 3.200000e+01 : f32
    %43 = vector.broadcast %cst_15 : f32 to vector<8x1xf32>
    %44 = arith.divf %42, %43 : vector<8x1xf32>
    %45 = vector.broadcast %37 : vector<8x1xf32> to vector<8x32xf32>
    %46 = arith.subf %29, %45 : vector<8x32xf32>
    %cst_16 = arith.constant 9.99999974E-6 : f32
    %47 = vector.broadcast %cst_16 : f32 to vector<8x1xf32>
    %48 = arith.addf %44, %47 : vector<8x1xf32>
    %49 = math.rsqrt %48 : vector<8x1xf32>
    %50 = vector.broadcast %49 : vector<8x1xf32> to vector<8x32xf32>
    %51 = arith.mulf %46, %50 : vector<8x32xf32>
    %52 = vector.shape_cast %31 : vector<32xf32> to vector<1x32xf32>
    %53 = vector.broadcast %52 : vector<1x32xf32> to vector<8x32xf32>
    %54 = arith.mulf %51, %53 : vector<8x32xf32>
    %55 = vector.shape_cast %33 : vector<32xf32> to vector<1x32xf32>
    %56 = vector.broadcast %55 : vector<1x32xf32> to vector<8x32xf32>
    %57 = arith.addf %54, %56 : vector<8x32xf32>
    %58 = arith.truncf %57 : vector<8x32xf32> to vector<8x32xbf16>
    %c0_17 = arith.constant 0 : index
    %c0_18 = arith.constant 0 : index
    %59 = vector.load %arg4[%c0_17, %c0_18] : memref<32x32xbf16, #tpu.memory_space<vmem>>, vector<32x32xbf16>
    %cst_19 = arith.constant dense<0.000000e+00> : vector<8x32xf32>
    %60 = tpu.matmul %58, %59, %cst_19 {dimension_numbers = #tpu.dot_dimension_numbers<[1], [0], [0], [1], [0, 0, 1, 1], [], []>} : vector<8x32xbf16>, vector<32x32xbf16>, vector<8x32xf32> -> vector<8x32xf32>
    %61 = vector.shape_cast %60 : vector<8x32xf32> to vector<8x4x8xf32>
    %62 = tpu.transpose %61, [1, 0, 2] : vector<8x4x8xf32> -> vector<4x8x8xf32>
    %63 = arith.truncf %62 : vector<4x8x8xf32> to vector<4x8x8xbf16>
    %c0_20 = arith.constant 0 : index
    %c0_21 = arith.constant 0 : index
    %c0_22 = arith.constant 0 : index
    %64 = vector.load %arg3[%c0_20, %c0_21, %c0_22] : memref<4x1x1xf32, #tpu.memory_space<vmem>>, vector<4x1x1xf32>
    %65 = tpu.iota {dimensions = array<i32: 0>} : vector<8x8xi32>
    %66 = vector.broadcast %4 : i32 to vector<8x8xi32>
    %67 = arith.addi %66, %65 : vector<8x8xi32>
    %68 = tpu.iota {dimensions = array<i32: 1>} : vector<8x8xi32>
    %69 = arith.subi %68, %67 : vector<8x8xi32>
    %cst_23 = arith.constant -1.000000e+30 : f32
    %70 = vector.broadcast %cst_23 : f32 to vector<4x8x1xf32>
    %cst_24 = arith.constant 0.000000e+00 : f32
    %71 = vector.broadcast %cst_24 : f32 to vector<4x8x1xf32>
    %cst_25 = arith.constant 0.000000e+00 : f32
    %72 = vector.broadcast %cst_25 : f32 to vector<4x8x8xf32>
    %c0_i32_26 = arith.constant 0 : i32
    %c8_i32_27 = arith.constant 8 : i32
    %73 = arith.muli %c0_i32_26, %c8_i32_27 : i32
    %74 = tpu.assume_multiple %73, 8 : i32
    %c0_28 = arith.constant 0 : index
    %75 = arith.index_cast %74 : i32 to index
    %c0_29 = arith.constant 0 : index
    %76 = vector.load %arg17[%c0_28, %75, %c0_29] : memref<4x8x8xbf16, #tpu.memory_space<vmem>>, vector<4x8x8xbf16>
    %c0_30 = arith.constant 0 : index
    %77 = arith.index_cast %74 : i32 to index
    %c0_31 = arith.constant 0 : index
    %78 = vector.load %arg18[%c0_30, %77, %c0_31] : memref<4x8x8xbf16, #tpu.memory_space<vmem>>, vector<4x8x8xbf16>
    "tpu.trace_start"() <{level = 10 : i32, message = "hqd,hkd->hqk"}> : () -> ()
    %cst_32 = arith.constant dense<0.000000e+00> : vector<4x8x8xf32>
    %79 = tpu.matmul %63, %76, %cst_32 {dimension_numbers = #tpu.dot_dimension_numbers<[2], [2], [1], [1], [0, 0, 0, 1, 1, 1], [0], [0]>} : vector<4x8x8xbf16>, vector<4x8x8xbf16>, vector<4x8x8xf32> -> vector<4x8x8xf32>
    "tpu.trace_stop"() : () -> ()
    %cst_33 = arith.constant 0.353553385 : f32
    %80 = vector.broadcast %cst_33 : f32 to vector<4x8x8xf32>
    %81 = arith.mulf %79, %80 : vector<4x8x8xf32>
    %82 = vector.broadcast %74 : i32 to vector<8x8xi32>
    %83 = arith.addi %69, %82 : vector<8x8xi32>
    %c0_i32_34 = arith.constant 0 : i32
    %84 = vector.broadcast %c0_i32_34 : i32 to vector<8x8xi32>
    %85 = arith.cmpi sgt, %83, %84 : vector<8x8xi32>
    %cst_35 = arith.constant -1.000000e+09 : f32
    %cst_36 = arith.constant 0.000000e+00 : f32
    %86 = vector.broadcast %cst_35 : f32 to vector<8x8xf32>
    %87 = vector.broadcast %cst_36 : f32 to vector<8x8xf32>
    %88 = arith.select %85, %86, %87 : vector<8x8xi1>, vector<8x8xf32>
    %89 = arith.sitofp %83 : vector<8x8xi32> to vector<8x8xf32>
    %90 = vector.shape_cast %89 : vector<8x8xf32> to vector<1x8x8xf32>
    %91 = vector.broadcast %64 : vector<4x1x1xf32> to vector<4x8x8xf32>
    %92 = vector.broadcast %90 : vector<1x8x8xf32> to vector<4x8x8xf32>
    %93 = arith.mulf %91, %92 : vector<4x8x8xf32>
    %94 = vector.shape_cast %88 : vector<8x8xf32> to vector<1x8x8xf32>
    %95 = vector.broadcast %94 : vector<1x8x8xf32> to vector<4x8x8xf32>
    %96 = arith.addf %95, %93 : vector<4x8x8xf32>
    %97 = arith.addf %81, %96 : vector<4x8x8xf32>
    %cst_37 = arith.constant dense<0xFF800000> : vector<4x8xf32>
    %98 = vector.multi_reduction <maximumf>, %97, %cst_37 [2] : vector<4x8x8xf32> to vector<4x8xf32>
    %99 = vector.shape_cast %98 : vector<4x8xf32> to vector<4x8x1xf32>
    %100 = arith.maximumf %70, %99 : vector<4x8x1xf32>
    %101 = arith.subf %70, %100 : vector<4x8x1xf32>
    %102 = math.exp %101 : vector<4x8x1xf32>
    %103 = vector.broadcast %100 : vector<4x8x1xf32> to vector<4x8x8xf32>
    %104 = arith.subf %97, %103 : vector<4x8x8xf32>
    %105 = math.exp %104 : vector<4x8x8xf32>
    %106 = arith.mulf %102, %71 : vector<4x8x1xf32>
    %cst_38 = arith.constant dense<0.000000e+00> : vector<4x8xf32>
    %107 = vector.multi_reduction <add>, %105, %cst_38 [2] : vector<4x8x8xf32> to vector<4x8xf32>
    %108 = vector.shape_cast %107 : vector<4x8xf32> to vector<4x8x1xf32>
    %109 = arith.addf %106, %108 : vector<4x8x1xf32>
    %110 = arith.truncf %105 : vector<4x8x8xf32> to vector<4x8x8xbf16>
    "tpu.trace_start"() <{level = 10 : i32, message = "hqk,hkd->hqd"}> : () -> ()
    %cst_39 = arith.constant dense<0.000000e+00> : vector<4x8x8xf32>
    %111 = tpu.matmul %110, %78, %cst_39 {dimension_numbers = #tpu.dot_dimension_numbers<[2], [1], [1], [2], [0, 0, 0, 1, 1, 2], [0], [0]>} : vector<4x8x8xbf16>, vector<4x8x8xbf16>, vector<4x8x8xf32> -> vector<4x8x8xf32>
    "tpu.trace_stop"() : () -> ()
    %112 = vector.broadcast %102 : vector<4x8x1xf32> to vector<4x8x8xf32>
    %113 = arith.mulf %112, %72 : vector<4x8x8xf32>
    %114 = arith.addf %113, %111 : vector<4x8x8xf32>
    %c1_i32 = arith.constant 1 : i32
    %115 = tpu.reciprocal %109 {approx = true} : vector<4x8x1xf32> -> vector<4x8x1xf32>
    %116 = vector.broadcast %115 : vector<4x8x1xf32> to vector<4x8x8xf32>
    %117 = arith.mulf %114, %116 : vector<4x8x8xf32>
    %118 = tpu.transpose %117, [1, 0, 2] : vector<4x8x8xf32> -> vector<8x4x8xf32>
    %119 = vector.shape_cast %118 : vector<8x4x8xf32> to vector<8x32xf32>
    %120 = arith.truncf %119 : vector<8x32xf32> to vector<8x32xbf16>
    %c0_40 = arith.constant 0 : index
    %c0_41 = arith.constant 0 : index
    %121 = vector.load %arg7[%c0_40, %c0_41] : memref<32x32xbf16, #tpu.memory_space<vmem>>, vector<32x32xbf16>
    %cst_42 = arith.constant dense<0.000000e+00> : vector<8x32xf32>
    %122 = tpu.matmul %120, %121, %cst_42 {dimension_numbers = #tpu.dot_dimension_numbers<[1], [0], [0], [1], [0, 0, 1, 1], [], []>} : vector<8x32xbf16>, vector<32x32xbf16>, vector<8x32xf32> -> vector<8x32xf32>
    %c1 = arith.constant 1 : index
    %c0_43 = arith.constant 0 : index
    %123 = vector.load %arg11[%c1, %c0_43] : memref<4x32xf32, #tpu.memory_space<vmem>>, vector<1x32xf32>
    %124 = vector.shape_cast %123 : vector<1x32xf32> to vector<32xf32>
    %c1_44 = arith.constant 1 : index
    %c0_45 = arith.constant 0 : index
    %125 = vector.load %arg12[%c1_44, %c0_45] : memref<4x32xf32, #tpu.memory_space<vmem>>, vector<1x32xf32>
    %126 = vector.shape_cast %125 : vector<1x32xf32> to vector<32xf32>
    %cst_46 = arith.constant dense<0.000000e+00> : vector<8xf32>
    %127 = vector.multi_reduction <add>, %122, %cst_46 [1] : vector<8x32xf32> to vector<8xf32>
    %128 = vector.shape_cast %127 : vector<8xf32> to vector<8x1xf32>
    %cst_47 = arith.constant 3.200000e+01 : f32
    %129 = vector.broadcast %cst_47 : f32 to vector<8x1xf32>
    %130 = arith.divf %128, %129 : vector<8x1xf32>
    %131 = vector.broadcast %130 : vector<8x1xf32> to vector<8x32xf32>
    %132 = arith.subf %122, %131 : vector<8x32xf32>
    %133 = arith.mulf %132, %132 : vector<8x32xf32>
    %cst_48 = arith.constant dense<0.000000e+00> : vector<8xf32>
    %134 = vector.multi_reduction <add>, %133, %cst_48 [1] : vector<8x32xf32> to vector<8xf32>
    %135 = vector.shape_cast %134 : vector<8xf32> to vector<8x1xf32>
    %cst_49 = arith.constant 3.200000e+01 : f32
    %136 = vector.broadcast %cst_49 : f32 to vector<8x1xf32>
    %137 = arith.divf %135, %136 : vector<8x1xf32>
    %138 = vector.broadcast %130 : vector<8x1xf32> to vector<8x32xf32>
    %139 = arith.subf %122, %138 : vector<8x32xf32>
    %cst_50 = arith.constant 9.99999974E-6 : f32
    %140 = vector.broadcast %cst_50 : f32 to vector<8x1xf32>
    %141 = arith.addf %137, %140 : vector<8x1xf32>
    %142 = math.rsqrt %141 : vector<8x1xf32>
    %143 = vector.broadcast %142 : vector<8x1xf32> to vector<8x32xf32>
    %144 = arith.mulf %139, %143 : vector<8x32xf32>
    %145 = vector.shape_cast %124 : vector<32xf32> to vector<1x32xf32>
    %146 = vector.broadcast %145 : vector<1x32xf32> to vector<8x32xf32>
    %147 = arith.mulf %144, %146 : vector<8x32xf32>
    %148 = vector.shape_cast %126 : vector<32xf32> to vector<1x32xf32>
    %149 = vector.broadcast %148 : vector<1x32xf32> to vector<8x32xf32>
    %150 = arith.addf %147, %149 : vector<8x32xf32>
    %151 = arith.addf %29, %150 : vector<8x32xf32>
    %c2 = arith.constant 2 : index
    %c0_51 = arith.constant 0 : index
    %152 = vector.load %arg11[%c2, %c0_51] : memref<4x32xf32, #tpu.memory_space<vmem>>, vector<1x32xf32>
    %153 = vector.shape_cast %152 : vector<1x32xf32> to vector<32xf32>
    %c2_52 = arith.constant 2 : index
    %c0_53 = arith.constant 0 : index
    %154 = vector.load %arg12[%c2_52, %c0_53] : memref<4x32xf32, #tpu.memory_space<vmem>>, vector<1x32xf32>
    %155 = vector.shape_cast %154 : vector<1x32xf32> to vector<32xf32>
    %cst_54 = arith.constant dense<0.000000e+00> : vector<8xf32>
    %156 = vector.multi_reduction <add>, %151, %cst_54 [1] : vector<8x32xf32> to vector<8xf32>
    %157 = vector.shape_cast %156 : vector<8xf32> to vector<8x1xf32>
    %cst_55 = arith.constant 3.200000e+01 : f32
    %158 = vector.broadcast %cst_55 : f32 to vector<8x1xf32>
    %159 = arith.divf %157, %158 : vector<8x1xf32>
    %160 = vector.broadcast %159 : vector<8x1xf32> to vector<8x32xf32>
    %161 = arith.subf %151, %160 : vector<8x32xf32>
    %162 = arith.mulf %161, %161 : vector<8x32xf32>
    %cst_56 = arith.constant dense<0.000000e+00> : vector<8xf32>
    %163 = vector.multi_reduction <add>, %162, %cst_56 [1] : vector<8x32xf32> to vector<8xf32>
    %164 = vector.shape_cast %163 : vector<8xf32> to vector<8x1xf32>
    %cst_57 = arith.constant 3.200000e+01 : f32
    %165 = vector.broadcast %cst_57 : f32 to vector<8x1xf32>
    %166 = arith.divf %164, %165 : vector<8x1xf32>
    %167 = vector.broadcast %159 : vector<8x1xf32> to vector<8x32xf32>
    %168 = arith.subf %151, %167 : vector<8x32xf32>
    %cst_58 = arith.constant 9.99999974E-6 : f32
    %169 = vector.broadcast %cst_58 : f32 to vector<8x1xf32>
    %170 = arith.addf %166, %169 : vector<8x1xf32>
    %171 = math.rsqrt %170 : vector<8x1xf32>
    %172 = vector.broadcast %171 : vector<8x1xf32> to vector<8x32xf32>
    %173 = arith.mulf %168, %172 : vector<8x32xf32>
    %174 = vector.shape_cast %153 : vector<32xf32> to vector<1x32xf32>
    %175 = vector.broadcast %174 : vector<1x32xf32> to vector<8x32xf32>
    %176 = arith.mulf %173, %175 : vector<8x32xf32>
    %177 = vector.shape_cast %155 : vector<32xf32> to vector<1x32xf32>
    %178 = vector.broadcast %177 : vector<1x32xf32> to vector<8x32xf32>
    %179 = arith.addf %176, %178 : vector<8x32xf32>
    %180 = arith.truncf %179 : vector<8x32xf32> to vector<8x32xbf16>
    %c0_59 = arith.constant 0 : index
    %c0_60 = arith.constant 0 : index
    %181 = vector.load %arg8[%c0_59, %c0_60] : memref<32x128xbf16, #tpu.memory_space<vmem>>, vector<32x128xbf16>
    %cst_61 = arith.constant dense<0.000000e+00> : vector<8x128xf32>
    %182 = tpu.matmul %180, %181, %cst_61 {dimension_numbers = #tpu.dot_dimension_numbers<[1], [0], [0], [1], [0, 0, 1, 1], [], []>} : vector<8x32xbf16>, vector<32x128xbf16>, vector<8x128xf32> -> vector<8x128xf32>
    %c0_62 = arith.constant 0 : index
    %c0_63 = arith.constant 0 : index
    %183 = vector.load %arg9[%c0_62, %c0_63] : memref<32x128xbf16, #tpu.memory_space<vmem>>, vector<32x128xbf16>
    %cst_64 = arith.constant dense<0.000000e+00> : vector<8x128xf32>
    %184 = tpu.matmul %180, %183, %cst_64 {dimension_numbers = #tpu.dot_dimension_numbers<[1], [0], [0], [1], [0, 0, 1, 1], [], []>} : vector<8x32xbf16>, vector<32x128xbf16>, vector<8x128xf32> -> vector<8x128xf32>
    %185 = arith.mulf %182, %184 : vector<8x128xf32>
    %186 = arith.truncf %185 : vector<8x128xf32> to vector<8x128xbf16>
    %c0_65 = arith.constant 0 : index
    %c0_66 = arith.constant 0 : index
    %187 = vector.load %arg10[%c0_65, %c0_66] : memref<128x32xbf16, #tpu.memory_space<vmem>>, vector<128x32xbf16>
    %cst_67 = arith.constant dense<0.000000e+00> : vector<8x32xf32>
    %188 = tpu.matmul %186, %187, %cst_67 {dimension_numbers = #tpu.dot_dimension_numbers<[1], [0], [0], [1], [0, 0, 1, 1], [], []>} : vector<8x128xbf16>, vector<128x32xbf16>, vector<8x32xf32> -> vector<8x32xf32>
    %c3 = arith.constant 3 : index
    %c0_68 = arith.constant 0 : index
    %189 = vector.load %arg11[%c3, %c0_68] : memref<4x32xf32, #tpu.memory_space<vmem>>, vector<1x32xf32>
    %190 = vector.shape_cast %189 : vector<1x32xf32> to vector<32xf32>
    %c3_69 = arith.constant 3 : index
    %c0_70 = arith.constant 0 : index
    %191 = vector.load %arg12[%c3_69, %c0_70] : memref<4x32xf32, #tpu.memory_space<vmem>>, vector<1x32xf32>
    %192 = vector.shape_cast %191 : vector<1x32xf32> to vector<32xf32>
    %cst_71 = arith.constant dense<0.000000e+00> : vector<8xf32>
    %193 = vector.multi_reduction <add>, %188, %cst_71 [1] : vector<8x32xf32> to vector<8xf32>
    %194 = vector.shape_cast %193 : vector<8xf32> to vector<8x1xf32>
    %cst_72 = arith.constant 3.200000e+01 : f32
    %195 = vector.broadcast %cst_72 : f32 to vector<8x1xf32>
    %196 = arith.divf %194, %195 : vector<8x1xf32>
    %197 = vector.broadcast %196 : vector<8x1xf32> to vector<8x32xf32>
    %198 = arith.subf %188, %197 : vector<8x32xf32>
    %199 = arith.mulf %198, %198 : vector<8x32xf32>
    %cst_73 = arith.constant dense<0.000000e+00> : vector<8xf32>
    %200 = vector.multi_reduction <add>, %199, %cst_73 [1] : vector<8x32xf32> to vector<8xf32>
    %201 = vector.shape_cast %200 : vector<8xf32> to vector<8x1xf32>
    %cst_74 = arith.constant 3.200000e+01 : f32
    %202 = vector.broadcast %cst_74 : f32 to vector<8x1xf32>
    %203 = arith.divf %201, %202 : vector<8x1xf32>
    %204 = vector.broadcast %196 : vector<8x1xf32> to vector<8x32xf32>
    %205 = arith.subf %188, %204 : vector<8x32xf32>
    %cst_75 = arith.constant 9.99999974E-6 : f32
    %206 = vector.broadcast %cst_75 : f32 to vector<8x1xf32>
    %207 = arith.addf %203, %206 : vector<8x1xf32>
    %208 = math.rsqrt %207 : vector<8x1xf32>
    %209 = vector.broadcast %208 : vector<8x1xf32> to vector<8x32xf32>
    %210 = arith.mulf %205, %209 : vector<8x32xf32>
    %211 = vector.shape_cast %190 : vector<32xf32> to vector<1x32xf32>
    %212 = vector.broadcast %211 : vector<1x32xf32> to vector<8x32xf32>
    %213 = arith.mulf %210, %212 : vector<8x32xf32>
    %214 = vector.shape_cast %192 : vector<32xf32> to vector<1x32xf32>
    %215 = vector.broadcast %214 : vector<1x32xf32> to vector<8x32xf32>
    %216 = arith.addf %213, %215 : vector<8x32xf32>
    %217 = arith.addf %151, %216 : vector<8x32xf32>
    %c0_76 = arith.constant 0 : index
    %c0_77 = arith.constant 0 : index
    %c0_78 = arith.constant 0 : index
    %218 = vector.load %arg13[%c0_76, %c0_77, %c0_78] : memref<1x8x32xf32, #tpu.memory_space<vmem>>, vector<1x8x32xf32>
    %219 = vector.shape_cast %218 : vector<1x8x32xf32> to vector<8x32xf32>
    %220 = vector.shape_cast %151 : vector<8x32xf32> to vector<1x8x32xf32>
    tpu.vector_store %arg13[%c0_76, %c0_77, %c0_78], %220 {strides = array<i32>} : memref<1x8x32xf32, #tpu.memory_space<vmem>>, vector<1x8x32xf32>,
    %c0_79 = arith.constant 0 : index
    %c0_80 = arith.constant 0 : index
    %c0_81 = arith.constant 0 : index
    %221 = vector.load %arg14[%c0_79, %c0_80, %c0_81] : memref<1x8x32xf32, #tpu.memory_space<vmem>>, vector<1x8x32xf32>
    %222 = vector.shape_cast %221 : vector<1x8x32xf32> to vector<8x32xf32>
    %223 = vector.shape_cast %217 : vector<8x32xf32> to vector<1x8x32xf32>
    tpu.vector_store %arg14[%c0_79, %c0_80, %c0_81], %223 {strides = array<i32>} : memref<1x8x32xf32, #tpu.memory_space<vmem>>, vector<1x8x32xf32>,
    %c0_82 = arith.constant 0 : index
    %c0_83 = arith.constant 0 : index
    %c0_84 = arith.constant 0 : index
    %224 = vector.load %arg15[%c0_82, %c0_83, %c0_84] : memref<1x8x32xf32, #tpu.memory_space<vmem>>, vector<1x8x32xf32>
    %225 = vector.shape_cast %224 : vector<1x8x32xf32> to vector<8x32xf32>
    %226 = vector.shape_cast %119 : vector<8x32xf32> to vector<1x8x32xf32>
    tpu.vector_store %arg15[%c0_82, %c0_83, %c0_84], %226 {strides = array<i32>} : memref<1x8x32xf32, #tpu.memory_space<vmem>>, vector<1x8x32xf32>,
    %c0_85 = arith.constant 0 : index
    %c0_86 = arith.constant 0 : index
    %c0_87 = arith.constant 0 : index
    %227 = vector.load %arg16[%c0_85, %c0_86, %c0_87] : memref<1x8x32xf32, #tpu.memory_space<vmem>>, vector<1x8x32xf32>
    %228 = vector.shape_cast %227 : vector<1x8x32xf32> to vector<8x32xf32>
    %229 = vector.shape_cast %188 : vector<8x32xf32> to vector<1x8x32xf32>
    tpu.vector_store %arg16[%c0_85, %c0_86, %c0_87], %229 {strides = array<i32>} : memref<1x8x32xf32, #tpu.memory_space<vmem>>, vector<1x8x32xf32>,
    return
  }
  func.func @transform_0(%arg0: i32, %arg1: i32) -> (i32, i32, i32) {
    %c0_i32 = arith.constant 0 : i32
    %c0_i32_0 = arith.constant 0 : i32
    %c0_i32_1 = arith.constant 0 : i32
    return %arg0, %c0_i32, %c0_i32_0 : i32, i32, i32
  }
  func.func @transform_1(%arg0: i32, %arg1: i32) -> (i32, i32, i32) {
    %c0_i32 = arith.constant 0 : i32
    %c0_i32_0 = arith.constant 0 : i32
    %c0_i32_1 = arith.constant 0 : i32
    %c0_i32_2 = arith.constant 0 : i32
    return %c0_i32, %c0_i32_0, %c0_i32_1 : i32, i32, i32
  }
  func.func @transform_2(%arg0: i32, %arg1: i32) -> (i32, i32) {
    %c0_i32 = arith.constant 0 : i32
    %c0_i32_0 = arith.constant 0 : i32
    %c0_i32_1 = arith.constant 0 : i32
    return %c0_i32, %c0_i32_0 : i32, i32
  }
  func.func @transform_3(%arg0: i32, %arg1: i32) -> (i32, i32) {
    %c0_i32 = arith.constant 0 : i32
    %c0_i32_0 = arith.constant 0 : i32
    %c0_i32_1 = arith.constant 0 : i32
    return %c0_i32, %c0_i32_0 : i32, i32
  }
  func.func @transform_4(%arg0: i32, %arg1: i32) -> (i32, i32) {
    %c0_i32 = arith.constant 0 : i32
    %c0_i32_0 = arith.constant 0 : i32
    %c0_i32_1 = arith.constant 0 : i32
    return %c0_i32, %c0_i32_0 : i32, i32
  }
  func.func @transform_5(%arg0: i32, %arg1: i32) -> (i32, i32) {
    %c0_i32 = arith.constant 0 : i32
    %c0_i32_0 = arith.constant 0 : i32
    %c0_i32_1 = arith.constant 0 : i32
    return %c0_i32, %c0_i32_0 : i32, i32
  }
  func.func @transform_6(%arg0: i32, %arg1: i32) -> (i32, i32) {
    %c0_i32 = arith.constant 0 : i32
    %c0_i32_0 = arith.constant 0 : i32
    %c0_i32_1 = arith.constant 0 : i32
    return %c0_i32, %c0_i32_0 : i32, i32
  }
  func.func @transform_7(%arg0: i32, %arg1: i32) -> (i32, i32) {
    %c0_i32 = arith.constant 0 : i32
    %c0_i32_0 = arith.constant 0 : i32
    %c0_i32_1 = arith.constant 0 : i32
    return %c0_i32, %c0_i32_0 : i32, i32
  }
  func.func @transform_8(%arg0: i32, %arg1: i32) -> (i32, i32) {
    %c0_i32 = arith.constant 0 : i32
    %c0_i32_0 = arith.constant 0 : i32
    %c0_i32_1 = arith.constant 0 : i32
    return %c0_i32, %c0_i32_0 : i32, i32
  }
  func.func @transform_9(%arg0: i32, %arg1: i32) -> (i32, i32) {
    %c0_i32 = arith.constant 0 : i32
    %c0_i32_0 = arith.constant 0 : i32
    %c0_i32_1 = arith.constant 0 : i32
    return %c0_i32, %c0_i32_0 : i32, i32
  }
  func.func @transform_10(%arg0: i32, %arg1: i32) -> (i32, i32) {
    %c0_i32 = arith.constant 0 : i32
    %c0_i32_0 = arith.constant 0 : i32
    %c0_i32_1 = arith.constant 0 : i32
    return %c0_i32, %c0_i32_0 : i32, i32
  }
  func.func @transform_11(%arg0: i32, %arg1: i32) -> (i32, i32, i32) {
    %c0_i32 = arith.constant 0 : i32
    %c0_i32_0 = arith.constant 0 : i32
    return %arg0, %arg1, %c0_i32 : i32, i32, i32
  }
  func.func @transform_12(%arg0: i32, %arg1: i32) -> (i32, i32, i32) {
    %c0_i32 = arith.constant 0 : i32
    %c0_i32_0 = arith.constant 0 : i32
    return %arg0, %arg1, %c0_i32 : i32, i32, i32
  }
  func.func @transform_13(%arg0: i32, %arg1: i32) -> (i32, i32, i32) {
    %c0_i32 = arith.constant 0 : i32
    %c0_i32_0 = arith.constant 0 : i32
    return %arg0, %arg1, %c0_i32 : i32, i32, i32
  }
  func.func @transform_14(%arg0: i32, %arg1: i32) -> (i32, i32, i32) {
    %c0_i32 = arith.constant 0 : i32
    %c0_i32_0 = arith.constant 0 : i32
    return %arg0, %arg1, %c0_i32 : i32, i32, i32
  }
}

module attributes {stable_mosaic.version = 11 : i64} {
  func.func @decoder_layer_kernel(%arg0: i32, %arg1: i32, %arg2: memref<1x8x32xf32, #tpu.memory_space<vmem>>, %arg3: memref<4x1x1xf32, #tpu.memory_space<vmem>>, %arg4: memref<32x32xbf16, #tpu.memory_space<vmem>>, %arg5: memref<32x32xbf16, #tpu.memory_space<vmem>>, %arg6: memref<32x32xbf16, #tpu.memory_space<vmem>>, %arg7: memref<32x32xbf16, #tpu.memory_space<vmem>>, %arg8: memref<32x128xbf16, #tpu.memory_space<vmem>>, %arg9: memref<32x128xbf16, #tpu.memory_space<vmem>>, %arg10: memref<128x32xbf16, #tpu.memory_space<vmem>>, %arg11: memref<4x32xf32, #tpu.memory_space<vmem>>, %arg12: memref<4x32xf32, #tpu.memory_space<vmem>>, %arg13: memref<1x8x32xf32, #tpu.memory_space<vmem>>, %arg14: memref<1x8x32xf32, #tpu.memory_space<vmem>>, %arg15: memref<1x8x32xf32, #tpu.memory_space<vmem>>, %arg16: memref<1x8x32xf32, #tpu.memory_space<vmem>>, %arg17: memref<4x8x8xbf16, #tpu.memory_space<vmem>>, %arg18: memref<4x8x8xbf16, #tpu.memory_space<vmem>>) attributes {dimension_semantics = [#tpu.dimension_semantics<parallel>, #tpu.dimension_semantics<arbitrary>], iteration_bounds = array<i64: 2, 1>, scalar_prefetch = 0 : i64, scratch_operands = 2 : i64, tpu.core_type = #tpu.core_type<tc>, window_params = [{transform_indices = @transform_0, window_bounds = array<i64: 1, 8, 32>}, {pipeline_mode = #tpu.pipeline_mode<synchronous>, transform_indices = @transform_1, window_bounds = array<i64: 4, 1, 1>}, {pipeline_mode = #tpu.pipeline_mode<synchronous>, transform_indices = @transform_2, window_bounds = array<i64: 32, 32>}, {pipeline_mode = #tpu.pipeline_mode<synchronous>, transform_indices = @transform_3, window_bounds = array<i64: 32, 32>}, {pipeline_mode = #tpu.pipeline_mode<synchronous>, transform_indices = @transform_4, window_bounds = array<i64: 32, 32>}, {pipeline_mode = #tpu.pipeline_mode<synchronous>, transform_indices = @transform_5, window_bounds = array<i64: 32, 32>}, {pipeline_mode = #tpu.pipeline_mode<synchronous>, transform_indices = @transform_6, window_bounds = array<i64: 32, 128>}, {pipeline_mode = #tpu.pipeline_mode<synchronous>, transform_indices = @transform_7, window_bounds = array<i64: 32, 128>}, {pipeline_mode = #tpu.pipeline_mode<synchronous>, transform_indices = @transform_8, window_bounds = array<i64: 128, 32>}, {pipeline_mode = #tpu.pipeline_mode<synchronous>, transform_indices = @transform_9, window_bounds = array<i64: 4, 32>}, {pipeline_mode = #tpu.pipeline_mode<synchronous>, transform_indices = @transform_10, window_bounds = array<i64: 4, 32>}, {transform_indices = @transform_11, window_bounds = array<i64: 1, 8, 32>}, {transform_indices = @transform_12, window_bounds = array<i64: 1, 8, 32>}, {transform_indices = @transform_13, window_bounds = array<i64: 1, 8, 32>}, {transform_indices = @transform_14, window_bounds = array<i64: 1, 8, 32>}]} {
    %c0_i32 = arith.constant 0 : i32
    %0 = arith.cmpi eq, %arg1, %c0_i32 : i32
    %1 = arith.extui %0 : i1 to i32
    %c0_i32_0 = arith.constant 0 : i32
    %2 = arith.cmpi ne, %1, %c0_i32_0 : i32
    scf.if %2 {
      %c0_88 = arith.constant 0 : index
      %c0_89 = arith.constant 0 : index
      %c0_90 = arith.constant 0 : index
      %230 = vector.load %arg2[%c0_88, %c0_89, %c0_90] : memref<1x8x32xf32, #tpu.memory_space<vmem>>, vector<1x8x32xf32>
      %231 = vector.shape_cast %230 : vector<1x8x32xf32> to vector<8x32xf32>
      %cst_91 = arith.constant dense<0.000000e+00> : vector<8xf32>
      %232 = vector.multi_reduction <add>, %231, %cst_91 [1] : vector<8x32xf32> to vector<8xf32>
      %233 = vector.shape_cast %232 : vector<8xf32> to vector<8x1xf32>
      %cst_92 = arith.constant 3.200000e+01 : f32
      %234 = vector.broadcast %cst_92 : f32 to vector<8x1xf32>
      %235 = arith.divf %233, %234 : vector<8x1xf32>
      %236 = vector.broadcast %235 : vector<8x1xf32> to vector<8x32xf32>
      %237 = arith.subf %231, %236 : vector<8x32xf32>
      %238 = arith.mulf %237, %237 : vector<8x32xf32>
      %cst_93 = arith.constant dense<0.000000e+00> : vector<8xf32>
      %239 = vector.multi_reduction <add>, %238, %cst_93 [1] : vector<8x32xf32> to vector<8xf32>
      %240 = vector.shape_cast %239 : vector<8xf32> to vector<8x1xf32>
      %cst_94 = arith.constant 3.200000e+01 : f32
      %241 = vector.broadcast %cst_94 : f32 to vector<8x1xf32>
      %242 = arith.divf %240, %241 : vector<8x1xf32>
      %243 = vector.broadcast %235 : vector<8x1xf32> to vector<8x32xf32>
      %244 = arith.subf %231, %243 : vector<8x32xf32>
      %cst_95 = arith.constant 9.99999974E-6 : f32
      %245 = vector.broadcast %cst_95 : f32 to vector<8x1xf32>
      %246 = arith.addf %242, %245 : vector<8x1xf32>
      %247 = math.rsqrt %246 : vector<8x1xf32>
      %248 = vector.broadcast %247 : vector<8x1xf32> to vector<8x32xf32>
      %249 = arith.mulf %244, %248 : vector<8x32xf32>
      %cst_96 = arith.constant 1.000000e+00 : f32
      %250 = vector.broadcast %cst_96 : f32 to vector<8x32xf32>
      %251 = arith.mulf %249, %250 : vector<8x32xf32>
      %cst_97 = arith.constant 0.000000e+00 : f32
      %252 = vector.broadcast %cst_97 : f32 to vector<8x32xf32>
      %253 = arith.addf %251, %252 : vector<8x32xf32>
      %c0_98 = arith.constant 0 : index
      %c0_99 = arith.constant 0 : index
      %254 = vector.load %arg11[%c0_98, %c0_99] : memref<4x32xf32, #tpu.memory_space<vmem>>, vector<1x32xf32>
      %255 = vector.shape_cast %254 : vector<1x32xf32> to vector<32xf32>
      %c0_100 = arith.constant 0 : index
      %c0_101 = arith.constant 0 : index
      %256 = vector.load %arg12[%c0_100, %c0_101] : memref<4x32xf32, #tpu.memory_space<vmem>>, vector<1x32xf32>
      %257 = vector.shape_cast %256 : vector<1x32xf32> to vector<32xf32>
      %cst_102 = arith.constant dense<0.000000e+00> : vector<8xf32>
      %258 = vector.multi_reduction <add>, %253, %cst_102 [1] : vector<8x32xf32> to vector<8xf32>
      %259 = vector.shape_cast %258 : vector<8xf32> to vector<8x1xf32>
      %cst_103 = arith.constant 3.200000e+01 : f32
      %260 = vector.broadcast %cst_103 : f32 to vector<8x1xf32>
      %261 = arith.divf %259, %260 : vector<8x1xf32>
      %262 = vector.broadcast %261 : vector<8x1xf32> to vector<8x32xf32>
      %263 = arith.subf %253, %262 : vector<8x32xf32>
      %264 = arith.mulf %263, %263 : vector<8x32xf32>
      %cst_104 = arith.constant dense<0.000000e+00> : vector<8xf32>
      %265 = vector.multi_reduction <add>, %264, %cst_104 [1] : vector<8x32xf32> to vector<8xf32>
      %266 = vector.shape_cast %265 : vector<8xf32> to vector<8x1xf32>
      %cst_105 = arith.constant 3.200000e+01 : f32
      %267 = vector.broadcast %cst_105 : f32 to vector<8x1xf32>
      %268 = arith.divf %266, %267 : vector<8x1xf32>
      %269 = vector.broadcast %261 : vector<8x1xf32> to vector<8x32xf32>
      %270 = arith.subf %253, %269 : vector<8x32xf32>
      %cst_106 = arith.constant 9.99999974E-6 : f32
      %271 = vector.broadcast %cst_106 : f32 to vector<8x1xf32>
      %272 = arith.addf %268, %271 : vector<8x1xf32>
      %273 = math.rsqrt %272 : vector<8x1xf32>
      %274 = vector.broadcast %273 : vector<8x1xf32> to vector<8x32xf32>
      %275 = arith.mulf %270, %274 : vector<8x32xf32>
      %276 = vector.shape_cast %255 : vector<32xf32> to vector<1x32xf32>
      %277 = vector.broadcast %276 : vector<1x32xf32> to vector<8x32xf32>
      %278 = arith.mulf %275, %277 : vector<8x32xf32>
      %279 = vector.shape_cast %257 : vector<32xf32> to vector<1x32xf32>
      %280 = vector.broadcast %279 : vector<1x32xf32> to vector<8x32xf32>
      %281 = arith.addf %278, %280 : vector<8x32xf32>
      %282 = arith.truncf %281 : vector<8x32xf32> to vector<8x32xbf16>
      %c0_107 = arith.constant 0 : index
      %c0_108 = arith.constant 0 : index
      %283 = vector.load %arg5[%c0_107, %c0_108] : memref<32x32xbf16, #tpu.memory_space<vmem>>, vector<32x32xbf16>
      %cst_109 = arith.constant dense<0.000000e+00> : vector<8x32xf32>
      %284 = tpu.matmul %282, %283, %cst_109 {dimension_numbers = #tpu.dot_dimension_numbers<[1], [0], [0], [1], [0, 0, 1, 1], [], []>} : vector<8x32xbf16>, vector<32x32xbf16>, vector<8x32xf32> -> vector<8x32xf32>
      %285 = vector.shape_cast %284 : vector<8x32xf32> to vector<8x4x8xf32>
      %286 = tpu.transpose %285, [1, 0, 2] : vector<8x4x8xf32> -> vector<4x8x8xf32>
      %287 = arith.truncf %286 : vector<4x8x8xf32> to vector<4x8x8xbf16>
      %c0_110 = arith.constant 0 : index
      %c0_111 = arith.constant 0 : index
      %c0_112 = arith.constant 0 : index
      %288 = vector.load %arg17[%c0_110, %c0_111, %c0_112] : memref<4x8x8xbf16, #tpu.memory_space<vmem>>, vector<4x8x8xbf16>
      tpu.vector_store %arg17[%c0_110, %c0_111, %c0_112], %287 {strides = array<i32>} : memref<4x8x8xbf16, #tpu.memory_space<vmem>>, vector<4x8x8xbf16>,
      %c0_113 = arith.constant 0 : index
      %c0_114 = arith.constant 0 : index
      %289 = vector.load %arg6[%c0_113, %c0_114] : memref<32x32xbf16, #tpu.memory_space<vmem>>, vector<32x32xbf16>
      %cst_115 = arith.constant dense<0.000000e+00> : vector<8x32xf32>
      %290 = tpu.matmul %282, %289, %cst_115 {dimension_numbers = #tpu.dot_dimension_numbers<[1], [0], [0], [1], [0, 0, 1, 1], [], []>} : vector<8x32xbf16>, vector<32x32xbf16>, vector<8x32xf32> -> vector<8x32xf32>
      %291 = vector.shape_cast %290 : vector<8x32xf32> to vector<8x4x8xf32>
      %292 = tpu.transpose %291, [1, 0, 2] : vector<8x4x8xf32> -> vector<4x8x8xf32>
      %293 = arith.truncf %292 : vector<4x8x8xf32> to vector<4x8x8xbf16>
      %c0_116 = arith.constant 0 : index
      %c0_117 = arith.constant 0 : index
      %c0_118 = arith.constant 0 : index
      %294 = vector.load %arg18[%c0_116, %c0_117, %c0_118] : memref<4x8x8xbf16, #tpu.memory_space<vmem>>, vector<4x8x8xbf16>
      tpu.vector_store %arg18[%c0_116, %c0_117, %c0_118], %293 {strides = array<i32>} : memref<4x8x8xbf16, #tpu.memory_space<vmem>>, vector<4x8x8xbf16>,
    } else {
    }
    %c8_i32 = arith.constant 8 : i32
    %3 = arith.muli %arg1, %c8_i32 : i32
    %4 = tpu.assume_multiple %3, 8 : i32
    %c0 = arith.constant 0 : index
    %5 = arith.index_cast %4 : i32 to index
    %c0_1 = arith.constant 0 : index
    %6 = vector.load %arg2[%c0, %5, %c0_1] : memref<1x8x32xf32, #tpu.memory_space<vmem>>, vector<1x8x32xf32>
    %7 = vector.shape_cast %6 : vector<1x8x32xf32> to vector<8x32xf32>
    %cst = arith.constant dense<0.000000e+00> : vector<8xf32>
    %8 = vector.multi_reduction <add>, %7, %cst [1] : vector<8x32xf32> to vector<8xf32>
    %9 = vector.shape_cast %8 : vector<8xf32> to vector<8x1xf32>
    %cst_2 = arith.constant 3.200000e+01 : f32
    %10 = vector.broadcast %cst_2 : f32 to vector<8x1xf32>
    %11 = arith.divf %9, %10 : vector<8x1xf32>
    %12 = vector.broadcast %11 : vector<8x1xf32> to vector<8x32xf32>
    %13 = arith.subf %7, %12 : vector<8x32xf32>
    %14 = arith.mulf %13, %13 : vector<8x32xf32>
    %cst_3 = arith.constant dense<0.000000e+00> : vector<8xf32>
    %15 = vector.multi_reduction <add>, %14, %cst_3 [1] : vector<8x32xf32> to vector<8xf32>
    %16 = vector.shape_cast %15 : vector<8xf32> to vector<8x1xf32>
    %cst_4 = arith.constant 3.200000e+01 : f32
    %17 = vector.broadcast %cst_4 : f32 to vector<8x1xf32>
    %18 = arith.divf %16, %17 : vector<8x1xf32>
    %19 = vector.broadcast %11 : vector<8x1xf32> to vector<8x32xf32>
    %20 = arith.subf %7, %19 : vector<8x32xf32>
    %cst_5 = arith.constant 9.99999974E-6 : f32
    %21 = vector.broadcast %cst_5 : f32 to vector<8x1xf32>
    %22 = arith.addf %18, %21 : vector<8x1xf32>
    %23 = math.rsqrt %22 : vector<8x1xf32>
    %24 = vector.broadcast %23 : vector<8x1xf32> to vector<8x32xf32>
    %25 = arith.mulf %20, %24 : vector<8x32xf32>
    %cst_6 = arith.constant 1.000000e+00 : f32
    %26 = vector.broadcast %cst_6 : f32 to vector<8x32xf32>
    %27 = arith.mulf %25, %26 : vector<8x32xf32>
    %cst_7 = arith.constant 0.000000e+00 : f32
    %28 = vector.broadcast %cst_7 : f32 to vector<8x32xf32>
    %29 = arith.addf %27, %28 : vector<8x32xf32>
    %c0_8 = arith.constant 0 : index
    %c0_9 = arith.constant 0 : index
    %30 = vector.load %arg11[%c0_8, %c0_9] : memref<4x32xf32, #tpu.memory_space<vmem>>, vector<1x32xf32>
    %31 = vector.shape_cast %30 : vector<1x32xf32> to vector<32xf32>
    %c0_10 = arith.constant 0 : index
    %c0_11 = arith.constant 0 : index
    %32 = vector.load %arg12[%c0_10, %c0_11] : memref<4x32xf32, #tpu.memory_space<vmem>>, vector<1x32xf32>
    %33 = vector.shape_cast %32 : vector<1x32xf32> to vector<32xf32>
    %cst_12 = arith.constant dense<0.000000e+00> : vector<8xf32>
    %34 = vector.multi_reduction <add>, %29, %cst_12 [1] : vector<8x32xf32> to vector<8xf32>
    %35 = vector.shape_cast %34 : vector<8xf32> to vector<8x1xf32>
    %cst_13 = arith.constant 3.200000e+01 : f32
    %36 = vector.broadcast %cst_13 : f32 to vector<8x1xf32>
    %37 = arith.divf %35, %36 : vector<8x1xf32>
    %38 = vector.broadcast %37 : vector<8x1xf32> to vector<8x32xf32>
    %39 = arith.subf %29, %38 : vector<8x32xf32>
    %40 = arith.mulf %39, %39 : vector<8x32xf32>
    %cst_14 = arith.constant dense<0.000000e+00> : vector<8xf32>
    %41 = vector.multi_reduction <add>, %40, %cst_14 [1] : vector<8x32xf32> to vector<8xf32>
    %42 = vector.shape_cast %41 : vector<8xf32> to vector<8x1xf32>
    %cst_15 = arith.constant 3.200000e+01 : f32
    %43 = vector.broadcast %cst_15 : f32 to vector<8x1xf32>
    %44 = arith.divf %42, %43 : vector<8x1xf32>
    %45 = vector.broadcast %37 : vector<8x1xf32> to vector<8x32xf32>
    %46 = arith.subf %29, %45 : vector<8x32xf32>
    %cst_16 = arith.constant 9.99999974E-6 : f32
    %47 = vector.broadcast %cst_16 : f32 to vector<8x1xf32>
    %48 = arith.addf %44, %47 : vector<8x1xf32>
    %49 = math.rsqrt %48 : vector<8x1xf32>
    %50 = vector.broadcast %49 : vector<8x1xf32> to vector<8x32xf32>
    %51 = arith.mulf %46, %50 : vector<8x32xf32>
    %52 = vector.shape_cast %31 : vector<32xf32> to vector<1x32xf32>
    %53 = vector.broadcast %52 : vector<1x32xf32> to vector<8x32xf32>
    %54 = arith.mulf %51, %53 : vector<8x32xf32>
    %55 = vector.shape_cast %33 : vector<32xf32> to vector<1x32xf32>
    %56 = vector.broadcast %55 : vector<1x32xf32> to vector<8x32xf32>
    %57 = arith.addf %54, %56 : vector<8x32xf32>
    %58 = arith.truncf %57 : vector<8x32xf32> to vector<8x32xbf16>
    %c0_17 = arith.constant 0 : index
    %c0_18 = arith.constant 0 : index
    %59 = vector.load %arg4[%c0_17, %c0_18] : memref<32x32xbf16, #tpu.memory_space<vmem>>, vector<32x32xbf16>
    %cst_19 = arith.constant dense<0.000000e+00> : vector<8x32xf32>
    %60 = tpu.matmul %58, %59, %cst_19 {dimension_numbers = #tpu.dot_dimension_numbers<[1], [0], [0], [1], [0, 0, 1, 1], [], []>} : vector<8x32xbf16>, vector<32x32xbf16>, vector<8x32xf32> -> vector<8x32xf32>
    %61 = vector.shape_cast %60 : vector<8x32xf32> to vector<8x4x8xf32>
    %62 = tpu.transpose %61, [1, 0, 2] : vector<8x4x8xf32> -> vector<4x8x8xf32>
    %63 = arith.truncf %62 : vector<4x8x8xf32> to vector<4x8x8xbf16>
    %c0_20 = arith.constant 0 : index
    %c0_21 = arith.constant 0 : index
    %c0_22 = arith.constant 0 : index
    %64 = vector.load %arg3[%c0_20, %c0_21, %c0_22] : memref<4x1x1xf32, #tpu.memory_space<vmem>>, vector<4x1x1xf32>
    %65 = tpu.iota {dimensions = array<i32: 0>} : vector<8x8xi32>
    %66 = vector.broadcast %4 : i32 to vector<8x8xi32>
    %67 = arith.addi %66, %65 : vector<8x8xi32>
    %68 = tpu.iota {dimensions = array<i32: 1>} : vector<8x8xi32>
    %69 = arith.subi %68, %67 : vector<8x8xi32>
    %cst_23 = arith.constant -1.000000e+30 : f32
    %70 = vector.broadcast %cst_23 : f32 to vector<4x8x1xf32>
    %cst_24 = arith.constant 0.000000e+00 : f32
    %71 = vector.broadcast %cst_24 : f32 to vector<4x8x1xf32>
    %cst_25 = arith.constant 0.000000e+00 : f32
    %72 = vector.broadcast %cst_25 : f32 to vector<4x8x8xf32>
    %c0_i32_26 = arith.constant 0 : i32
    %c8_i32_27 = arith.constant 8 : i32
    %73 = arith.muli %c0_i32_26, %c8_i32_27 : i32
    %74 = tpu.assume_multiple %73, 8 : i32
    %c0_28 = arith.constant 0 : index
    %75 = arith.index_cast %74 : i32 to index
    %c0_29 = arith.constant 0 : index
    %76 = vector.load %arg17[%c0_28, %75, %c0_29] : memref<4x8x8xbf16, #tpu.memory_space<vmem>>, vector<4x8x8xbf16>
    %c0_30 = arith.constant 0 : index
    %77 = arith.index_cast %74 : i32 to index
    %c0_31 = arith.constant 0 : index
    %78 = vector.load %arg18[%c0_30, %77, %c0_31] : memref<4x8x8xbf16, #tpu.memory_space<vmem>>, vector<4x8x8xbf16>
    "tpu.trace_start"() <{level = 10 : i32, message = "hqd,hkd->hqk"}> : () -> ()
    %cst_32 = arith.constant dense<0.000000e+00> : vector<4x8x8xf32>
    %79 = tpu.matmul %63, %76, %cst_32 {dimension_numbers = #tpu.dot_dimension_numbers<[2], [2], [1], [1], [0, 0, 0, 1, 1, 1], [0], [0]>} : vector<4x8x8xbf16>, vector<4x8x8xbf16>, vector<4x8x8xf32> -> vector<4x8x8xf32>
    "tpu.trace_stop"() : () -> ()
    %cst_33 = arith.constant 0.353553385 : f32
    %80 = vector.broadcast %cst_33 : f32 to vector<4x8x8xf32>
    %81 = arith.mulf %79, %80 : vector<4x8x8xf32>
    %82 = vector.broadcast %74 : i32 to vector<8x8xi32>
    %83 = arith.addi %69, %82 : vector<8x8xi32>
    %c0_i32_34 = arith.constant 0 : i32
    %84 = vector.broadcast %c0_i32_34 : i32 to vector<8x8xi32>
    %85 = arith.cmpi sgt, %83, %84 : vector<8x8xi32>
    %cst_35 = arith.constant -1.000000e+09 : f32
    %cst_36 = arith.constant 0.000000e+00 : f32
    %86 = vector.broadcast %cst_35 : f32 to vector<8x8xf32>
    %87 = vector.broadcast %cst_36 : f32 to vector<8x8xf32>
    %88 = arith.select %85, %86, %87 : vector<8x8xi1>, vector<8x8xf32>
    %89 = arith.sitofp %83 : vector<8x8xi32> to vector<8x8xf32>
    %90 = vector.shape_cast %89 : vector<8x8xf32> to vector<1x8x8xf32>
    %91 = vector.broadcast %64 : vector<4x1x1xf32> to vector<4x8x8xf32>
    %92 = vector.broadcast %90 : vector<1x8x8xf32> to vector<4x8x8xf32>
    %93 = arith.mulf %91, %92 : vector<4x8x8xf32>
    %94 = vector.shape_cast %88 : vector<8x8xf32> to vector<1x8x8xf32>
    %95 = vector.broadcast %94 : vector<1x8x8xf32> to vector<4x8x8xf32>
    %96 = arith.addf %95, %93 : vector<4x8x8xf32>
    %97 = arith.addf %81, %96 : vector<4x8x8xf32>
    %cst_37 = arith.constant dense<0xFF800000> : vector<4x8xf32>
    %98 = vector.multi_reduction <maximumf>, %97, %cst_37 [2] : vector<4x8x8xf32> to vector<4x8xf32>
    %99 = vector.shape_cast %98 : vector<4x8xf32> to vector<4x8x1xf32>
    %100 = arith.maximumf %70, %99 : vector<4x8x1xf32>
    %101 = arith.subf %70, %100 : vector<4x8x1xf32>
    %102 = math.exp %101 : vector<4x8x1xf32>
    %103 = vector.broadcast %100 : vector<4x8x1xf32> to vector<4x8x8xf32>
    %104 = arith.subf %97, %103 : vector<4x8x8xf32>
    %105 = math.exp %104 : vector<4x8x8xf32>
    %106 = arith.mulf %102, %71 : vector<4x8x1xf32>
    %cst_38 = arith.constant dense<0.000000e+00> : vector<4x8xf32>
    %107 = vector.multi_reduction <add>, %105, %cst_38 [2] : vector<4x8x8xf32> to vector<4x8xf32>
    %108 = vector.shape_cast %107 : vector<4x8xf32> to vector<4x8x1xf32>
    %109 = arith.addf %106, %108 : vector<4x8x1xf32>
    %110 = arith.truncf %105 : vector<4x8x8xf32> to vector<4x8x8xbf16>
    "tpu.trace_start"() <{level = 10 : i32, message = "hqk,hkd->hqd"}> : () -> ()
    %cst_39 = arith.constant dense<0.000000e+00> : vector<4x8x8xf32>
    %111 = tpu.matmul %110, %78, %cst_39 {dimension_numbers = #tpu.dot_dimension_numbers<[2], [1], [1], [2], [0, 0, 0, 1, 1, 2], [0], [0]>} : vector<4x8x8xbf16>, vector<4x8x8xbf16>, vector<4x8x8xf32> -> vector<4x8x8xf32>
    "tpu.trace_stop"() : () -> ()
    %112 = vector.broadcast %102 : vector<4x8x1xf32> to vector<4x8x8xf32>
    %113 = arith.mulf %112, %72 : vector<4x8x8xf32>
    %114 = arith.addf %113, %111 : vector<4x8x8xf32>
    %c1_i32 = arith.constant 1 : i32
    %115 = tpu.reciprocal %109 {approx = true} : vector<4x8x1xf32> -> vector<4x8x1xf32>
    %116 = vector.broadcast %115 : vector<4x8x1xf32> to vector<4x8x8xf32>
    %117 = arith.mulf %114, %116 : vector<4x8x8xf32>
    %118 = tpu.transpose %117, [1, 0, 2] : vector<4x8x8xf32> -> vector<8x4x8xf32>
    %119 = vector.shape_cast %118 : vector<8x4x8xf32> to vector<8x32xf32>
    %120 = arith.truncf %119 : vector<8x32xf32> to vector<8x32xbf16>
    %c0_40 = arith.constant 0 : index
    %c0_41 = arith.constant 0 : index
    %121 = vector.load %arg7[%c0_40, %c0_41] : memref<32x32xbf16, #tpu.memory_space<vmem>>, vector<32x32xbf16>
    %cst_42 = arith.constant dense<0.000000e+00> : vector<8x32xf32>
    %122 = tpu.matmul %120, %121, %cst_42 {dimension_numbers = #tpu.dot_dimension_numbers<[1], [0], [0], [1], [0, 0, 1, 1], [], []>} : vector<8x32xbf16>, vector<32x32xbf16>, vector<8x32xf32> -> vector<8x32xf32>
    %c1 = arith.constant 1 : index
    %c0_43 = arith.constant 0 : index
    %123 = vector.load %arg11[%c1, %c0_43] : memref<4x32xf32, #tpu.memory_space<vmem>>, vector<1x32xf32>
    %124 = vector.shape_cast %123 : vector<1x32xf32> to vector<32xf32>
    %c1_44 = arith.constant 1 : index
    %c0_45 = arith.constant 0 : index
    %125 = vector.load %arg12[%c1_44, %c0_45] : memref<4x32xf32, #tpu.memory_space<vmem>>, vector<1x32xf32>
    %126 = vector.shape_cast %125 : vector<1x32xf32> to vector<32xf32>
    %cst_46 = arith.constant dense<0.000000e+00> : vector<8xf32>
    %127 = vector.multi_reduction <add>, %122, %cst_46 [1] : vector<8x32xf32> to vector<8xf32>
    %128 = vector.shape_cast %127 : vector<8xf32> to vector<8x1xf32>
    %cst_47 = arith.constant 3.200000e+01 : f32
    %129 = vector.broadcast %cst_47 : f32 to vector<8x1xf32>
    %130 = arith.divf %128, %129 : vector<8x1xf32>
    %131 = vector.broadcast %130 : vector<8x1xf32> to vector<8x32xf32>
    %132 = arith.subf %122, %131 : vector<8x32xf32>
    %133 = arith.mulf %132, %132 : vector<8x32xf32>
    %cst_48 = arith.constant dense<0.000000e+00> : vector<8xf32>
    %134 = vector.multi_reduction <add>, %133, %cst_48 [1] : vector<8x32xf32> to vector<8xf32>
    %135 = vector.shape_cast %134 : vector<8xf32> to vector<8x1xf32>
    %cst_49 = arith.constant 3.200000e+01 : f32
    %136 = vector.broadcast %cst_49 : f32 to vector<8x1xf32>
    %137 = arith.divf %135, %136 : vector<8x1xf32>
    %138 = vector.broadcast %130 : vector<8x1xf32> to vector<8x32xf32>
    %139 = arith.subf %122, %138 : vector<8x32xf32>
    %cst_50 = arith.constant 9.99999974E-6 : f32
    %140 = vector.broadcast %cst_50 : f32 to vector<8x1xf32>
    %141 = arith.addf %137, %140 : vector<8x1xf32>
    %142 = math.rsqrt %141 : vector<8x1xf32>
    %143 = vector.broadcast %142 : vector<8x1xf32> to vector<8x32xf32>
    %144 = arith.mulf %139, %143 : vector<8x32xf32>
    %145 = vector.shape_cast %124 : vector<32xf32> to vector<1x32xf32>
    %146 = vector.broadcast %145 : vector<1x32xf32> to vector<8x32xf32>
    %147 = arith.mulf %144, %146 : vector<8x32xf32>
    %148 = vector.shape_cast %126 : vector<32xf32> to vector<1x32xf32>
    %149 = vector.broadcast %148 : vector<1x32xf32> to vector<8x32xf32>
    %150 = arith.addf %147, %149 : vector<8x32xf32>
    %151 = arith.addf %29, %150 : vector<8x32xf32>
    %c2 = arith.constant 2 : index
    %c0_51 = arith.constant 0 : index
    %152 = vector.load %arg11[%c2, %c0_51] : memref<4x32xf32, #tpu.memory_space<vmem>>, vector<1x32xf32>
    %153 = vector.shape_cast %152 : vector<1x32xf32> to vector<32xf32>
    %c2_52 = arith.constant 2 : index
    %c0_53 = arith.constant 0 : index
    %154 = vector.load %arg12[%c2_52, %c0_53] : memref<4x32xf32, #tpu.memory_space<vmem>>, vector<1x32xf32>
    %155 = vector.shape_cast %154 : vector<1x32xf32> to vector<32xf32>
    %cst_54 = arith.constant dense<0.000000e+00> : vector<8xf32>
    %156 = vector.multi_reduction <add>, %151, %cst_54 [1] : vector<8x32xf32> to vector<8xf32>
    %157 = vector.shape_cast %156 : vector<8xf32> to vector<8x1xf32>
    %cst_55 = arith.constant 3.200000e+01 : f32
    %158 = vector.broadcast %cst_55 : f32 to vector<8x1xf32>
    %159 = arith.divf %157, %158 : vector<8x1xf32>
    %160 = vector.broadcast %159 : vector<8x1xf32> to vector<8x32xf32>
    %161 = arith.subf %151, %160 : vector<8x32xf32>
    %162 = arith.mulf %161, %161 : vector<8x32xf32>
    %cst_56 = arith.constant dense<0.000000e+00> : vector<8xf32>
    %163 = vector.multi_reduction <add>, %162, %cst_56 [1] : vector<8x32xf32> to vector<8xf32>
    %164 = vector.shape_cast %163 : vector<8xf32> to vector<8x1xf32>
    %cst_57 = arith.constant 3.200000e+01 : f32
    %165 = vector.broadcast %cst_57 : f32 to vector<8x1xf32>
    %166 = arith.divf %164, %165 : vector<8x1xf32>
    %167 = vector.broadcast %159 : vector<8x1xf32> to vector<8x32xf32>
    %168 = arith.subf %151, %167 : vector<8x32xf32>
    %cst_58 = arith.constant 9.99999974E-6 : f32
    %169 = vector.broadcast %cst_58 : f32 to vector<8x1xf32>
    %170 = arith.addf %166, %169 : vector<8x1xf32>
    %171 = math.rsqrt %170 : vector<8x1xf32>
    %172 = vector.broadcast %171 : vector<8x1xf32> to vector<8x32xf32>
    %173 = arith.mulf %168, %172 : vector<8x32xf32>
    %174 = vector.shape_cast %153 : vector<32xf32> to vector<1x32xf32>
    %175 = vector.broadcast %174 : vector<1x32xf32> to vector<8x32xf32>
    %176 = arith.mulf %173, %175 : vector<8x32xf32>
    %177 = vector.shape_cast %155 : vector<32xf32> to vector<1x32xf32>
    %178 = vector.broadcast %177 : vector<1x32xf32> to vector<8x32xf32>
    %179 = arith.addf %176, %178 : vector<8x32xf32>
    %180 = arith.truncf %179 : vector<8x32xf32> to vector<8x32xbf16>
    %c0_59 = arith.constant 0 : index
    %c0_60 = arith.constant 0 : index
    %181 = vector.load %arg8[%c0_59, %c0_60] : memref<32x128xbf16, #tpu.memory_space<vmem>>, vector<32x128xbf16>
    %cst_61 = arith.constant dense<0.000000e+00> : vector<8x128xf32>
    %182 = tpu.matmul %180, %181, %cst_61 {dimension_numbers = #tpu.dot_dimension_numbers<[1], [0], [0], [1], [0, 0, 1, 1], [], []>} : vector<8x32xbf16>, vector<32x128xbf16>, vector<8x128xf32> -> vector<8x128xf32>
    %c0_62 = arith.constant 0 : index
    %c0_63 = arith.constant 0 : index
    %183 = vector.load %arg9[%c0_62, %c0_63] : memref<32x128xbf16, #tpu.memory_space<vmem>>, vector<32x128xbf16>
    %cst_64 = arith.constant dense<0.000000e+00> : vector<8x128xf32>
    %184 = tpu.matmul %180, %183, %cst_64 {dimension_numbers = #tpu.dot_dimension_numbers<[1], [0], [0], [1], [0, 0, 1, 1], [], []>} : vector<8x32xbf16>, vector<32x128xbf16>, vector<8x128xf32> -> vector<8x128xf32>
    %185 = arith.mulf %182, %184 : vector<8x128xf32>
    %186 = arith.truncf %185 : vector<8x128xf32> to vector<8x128xbf16>
    %c0_65 = arith.constant 0 : index
    %c0_66 = arith.constant 0 : index
    %187 = vector.load %arg10[%c0_65, %c0_66] : memref<128x32xbf16, #tpu.memory_space<vmem>>, vector<128x32xbf16>
    %cst_67 = arith.constant dense<0.000000e+00> : vector<8x32xf32>
    %188 = tpu.matmul %186, %187, %cst_67 {dimension_numbers = #tpu.dot_dimension_numbers<[1], [0], [0], [1], [0, 0, 1, 1], [], []>} : vector<8x128xbf16>, vector<128x32xbf16>, vector<8x32xf32> -> vector<8x32xf32>
    %c3 = arith.constant 3 : index
    %c0_68 = arith.constant 0 : index
    %189 = vector.load %arg11[%c3, %c0_68] : memref<4x32xf32, #tpu.memory_space<vmem>>, vector<1x32xf32>
    %190 = vector.shape_cast %189 : vector<1x32xf32> to vector<32xf32>
    %c3_69 = arith.constant 3 : index
    %c0_70 = arith.constant 0 : index
    %191 = vector.load %arg12[%c3_69, %c0_70] : memref<4x32xf32, #tpu.memory_space<vmem>>, vector<1x32xf32>
    %192 = vector.shape_cast %191 : vector<1x32xf32> to vector<32xf32>
    %cst_71 = arith.constant dense<0.000000e+00> : vector<8xf32>
    %193 = vector.multi_reduction <add>, %188, %cst_71 [1] : vector<8x32xf32> to vector<8xf32>
    %194 = vector.shape_cast %193 : vector<8xf32> to vector<8x1xf32>
    %cst_72 = arith.constant 3.200000e+01 : f32
    %195 = vector.broadcast %cst_72 : f32 to vector<8x1xf32>
    %196 = arith.divf %194, %195 : vector<8x1xf32>
    %197 = vector.broadcast %196 : vector<8x1xf32> to vector<8x32xf32>
    %198 = arith.subf %188, %197 : vector<8x32xf32>
    %199 = arith.mulf %198, %198 : vector<8x32xf32>
    %cst_73 = arith.constant dense<0.000000e+00> : vector<8xf32>
    %200 = vector.multi_reduction <add>, %199, %cst_73 [1] : vector<8x32xf32> to vector<8xf32>
    %201 = vector.shape_cast %200 : vector<8xf32> to vector<8x1xf32>
    %cst_74 = arith.constant 3.200000e+01 : f32
    %202 = vector.broadcast %cst_74 : f32 to vector<8x1xf32>
    %203 = arith.divf %201, %202 : vector<8x1xf32>
    %204 = vector.broadcast %196 : vector<8x1xf32> to vector<8x32xf32>
    %205 = arith.subf %188, %204 : vector<8x32xf32>
    %cst_75 = arith.constant 9.99999974E-6 : f32
    %206 = vector.broadcast %cst_75 : f32 to vector<8x1xf32>
    %207 = arith.addf %203, %206 : vector<8x1xf32>
    %208 = math.rsqrt %207 : vector<8x1xf32>
    %209 = vector.broadcast %208 : vector<8x1xf32> to vector<8x32xf32>
    %210 = arith.mulf %205, %209 : vector<8x32xf32>
    %211 = vector.shape_cast %190 : vector<32xf32> to vector<1x32xf32>
    %212 = vector.broadcast %211 : vector<1x32xf32> to vector<8x32xf32>
    %213 = arith.mulf %210, %212 : vector<8x32xf32>
    %214 = vector.shape_cast %192 : vector<32xf32> to vector<1x32xf32>
    %215 = vector.broadcast %214 : vector<1x32xf32> to vector<8x32xf32>
    %216 = arith.addf %213, %215 : vector<8x32xf32>
    %217 = arith.addf %151, %216 : vector<8x32xf32>
    %c0_76 = arith.constant 0 : index
    %c0_77 = arith.constant 0 : index
    %c0_78 = arith.constant 0 : index
    %218 = vector.load %arg13[%c0_76, %c0_77, %c0_78] : memref<1x8x32xf32, #tpu.memory_space<vmem>>, vector<1x8x32xf32>
    %219 = vector.shape_cast %218 : vector<1x8x32xf32> to vector<8x32xf32>
    %220 = vector.shape_cast %151 : vector<8x32xf32> to vector<1x8x32xf32>
    tpu.vector_store %arg13[%c0_76, %c0_77, %c0_78], %220 {strides = array<i32>} : memref<1x8x32xf32, #tpu.memory_space<vmem>>, vector<1x8x32xf32>,
    %c0_79 = arith.constant 0 : index
    %c0_80 = arith.constant 0 : index
    %c0_81 = arith.constant 0 : index
    %221 = vector.load %arg14[%c0_79, %c0_80, %c0_81] : memref<1x8x32xf32, #tpu.memory_space<vmem>>, vector<1x8x32xf32>
    %222 = vector.shape_cast %221 : vector<1x8x32xf32> to vector<8x32xf32>
    %223 = vector.shape_cast %217 : vector<8x32xf32> to vector<1x8x32xf32>
    tpu.vector_store %arg14[%c0_79, %c0_80, %c0_81], %223 {strides = array<i32>} : memref<1x8x32xf32, #tpu.memory_space<vmem>>, vector<1x8x32xf32>,
    %c0_82 = arith.constant 0 : index
    %c0_83 = arith.constant 0 : index
    %c0_84 = arith.constant 0 : index
    %224 = vector.load %arg15[%c0_82, %c0_83, %c0_84] : memref<1x8x32xf32, #tpu.memory_space<vmem>>, vector<1x8x32xf32>
    %225 = vector.shape_cast %224 : vector<1x8x32xf32> to vector<8x32xf32>
    %226 = vector.shape_cast %119 : vector<8x32xf32> to vector<1x8x32xf32>
    tpu.vector_store %arg15[%c0_82, %c0_83, %c0_84], %226 {strides = array<i32>} : memref<1x8x32xf32, #tpu.memory_space<vmem>>, vector<1x8x32xf32>,
    %c0_85 = arith.constant 0 : index
    %c0_86 = arith.constant 0 : index
    %c0_87 = arith.constant 0 : index
    %227 = vector.load %arg16[%c0_85, %c0_86, %c0_87] : memref<1x8x32xf32, #tpu.memory_space<vmem>>, vector<1x8x32xf32>
    %228 = vector.shape_cast %227 : vector<1x8x32xf32> to vector<8x32xf32>
    %229 = vector.shape_cast %188 : vector<8x32xf32> to vector<1x8x32xf32>
    tpu.vector_store %arg16[%c0_85, %c0_86, %c0_87], %229 {strides = array<i32>} : memref<1x8x32xf32, #tpu.memory_space<vmem>>, vector<1x8x32xf32>,
    return
  }
  func.func @transform_0(%arg0: i32, %arg1: i32) -> (i32, i32, i32) {
    %c0_i32 = arith.constant 0 : i32
    %c0_i32_0 = arith.constant 0 : i32
    %c0_i32_1 = arith.constant 0 : i32
    return %arg0, %c0_i32, %c0_i32_0 : i32, i32, i32
  }
  func.func @transform_1(%arg0: i32, %arg1: i32) -> (i32, i32, i32) {
    %c0_i32 = arith.constant 0 : i32
    %c0_i32_0 = arith.constant 0 : i32
    %c0_i32_1 = arith.constant 0 : i32
    %c0_i32_2 = arith.constant 0 : i32
    return %c0_i32, %c0_i32_0, %c0_i32_1 : i32, i32, i32
  }
  func.func @transform_2(%arg0: i32, %arg1: i32) -> (i32, i32) {
    %c0_i32 = arith.constant 0 : i32
    %c0_i32_0 = arith.constant 0 : i32
    %c0_i32_1 = arith.constant 0 : i32
    return %c0_i32, %c0_i32_0 : i32, i32
  }
  func.func @transform_3(%arg0: i32, %arg1: i32) -> (i32, i32) {
    %c0_i32 = arith.constant 0 : i32
    %c0_i32_0 = arith.constant 0 : i32
    %c0_i32_1 = arith.constant 0 : i32
    return %c0_i32, %c0_i32_0 : i32, i32
  }
  func.func @transform_4(%arg0: i32, %arg1: i32) -> (i32, i32) {
    %c0_i32 = arith.constant 0 : i32
    %c0_i32_0 = arith.constant 0 : i32
    %c0_i32_1 = arith.constant 0 : i32
    return %c0_i32, %c0_i32_0 : i32, i32
  }
  func.func @transform_5(%arg0: i32, %arg1: i32) -> (i32, i32) {
    %c0_i32 = arith.constant 0 : i32
    %c0_i32_0 = arith.constant 0 : i32
    %c0_i32_1 = arith.constant 0 : i32
    return %c0_i32, %c0_i32_0 : i32, i32
  }
  func.func @transform_6(%arg0: i32, %arg1: i32) -> (i32, i32) {
    %c0_i32 = arith.constant 0 : i32
    %c0_i32_0 = arith.constant 0 : i32
    %c0_i32_1 = arith.constant 0 : i32
    return %c0_i32, %c0_i32_0 : i32, i32
  }
  func.func @transform_7(%arg0: i32, %arg1: i32) -> (i32, i32) {
    %c0_i32 = arith.constant 0 : i32
    %c0_i32_0 = arith.constant 0 : i32
    %c0_i32_1 = arith.constant 0 : i32
    return %c0_i32, %c0_i32_0 : i32, i32
  }
  func.func @transform_8(%arg0: i32, %arg1: i32) -> (i32, i32) {
    %c0_i32 = arith.constant 0 : i32
    %c0_i32_0 = arith.constant 0 : i32
    %c0_i32_1 = arith.constant 0 : i32
    return %c0_i32, %c0_i32_0 : i32, i32
  }
  func.func @transform_9(%arg0: i32, %arg1: i32) -> (i32, i32) {
    %c0_i32 = arith.constant 0 : i32
    %c0_i32_0 = arith.constant 0 : i32
    %c0_i32_1 = arith.constant 0 : i32
    return %c0_i32, %c0_i32_0 : i32, i32
  }
  func.func @transform_10(%arg0: i32, %arg1: i32) -> (i32, i32) {
    %c0_i32 = arith.constant 0 : i32
    %c0_i32_0 = arith.constant 0 : i32
    %c0_i32_1 = arith.constant 0 : i32
    return %c0_i32, %c0_i32_0 : i32, i32
  }
  func.func @transform_11(%arg0: i32, %arg1: i32) -> (i32, i32, i32) {
    %c0_i32 = arith.constant 0 : i32
    %c0_i32_0 = arith.constant 0 : i32
    return %arg0, %arg1, %c0_i32 : i32, i32, i32
  }
  func.func @transform_12(%arg0: i32, %arg1: i32) -> (i32, i32, i32) {
    %c0_i32 = arith.constant 0 : i32
    %c0_i32_0 = arith.constant 0 : i32
    return %arg0, %arg1, %c0_i32 : i32, i32, i32
  }
  func.func @transform_13(%arg0: i32, %arg1: i32) -> (i32, i32, i32) {
    %c0_i32 = arith.constant 0 : i32
    %c0_i32_0 = arith.constant 0 : i32
    return %arg0, %arg1, %c0_i32 : i32, i32, i32
  }
  func.func @transform_14(%arg0: i32, %arg1: i32) -> (i32, i32, i32) {
    %c0_i32 = arith.constant 0 : i32
    %c0_i32_0 = arith.constant 0 : i32
    return %arg0, %arg1, %c0_i32 : i32, i32, i32
  }
}

</mosaic_0001>

<llo_original>
// kernel: tpu_custom_call.1
$region0: #{tpu_custom_call.1}
  #allocation0 [shape = 'u32[]', space=smem, size = 0x4, offset = 0x4, fixed_abs, tag = 'smem constant byte address 0x4 - core index']
  #allocation1 [shape = 'u32[72,128]{1,0:T(1,128)}', space=vmem, size = 0x9000, scoped, tag = 'internal scratch']
  #allocation2 [shape = 'bf16[4,8,8]{2,1,0:T(8,128)(2,1)}', space=vmem, size = 0x2000, scoped, tag = 'scratch operand']
  #allocation3 [shape = 'bf16[4,8,8]{2,1,0:T(8,128)(2,1)}', space=vmem, size = 0x2000, scoped, tag = 'scratch operand']
  %s0 = inlined_call_operand.vmem [shape: f32[2,8,32], index: 0, kind: input, shape index: {}]
  %s1 = inlined_call_operand.vmem [shape: f32[4,1,1], index: 1, kind: input, shape index: {}]
  %s2 = inlined_call_operand.vmem [shape: bf16[32,32], index: 2, kind: input, shape index: {}]
  %s3 = inlined_call_operand.vmem [shape: bf16[32,32], index: 3, kind: input, shape index: {}]
  %s4 = inlined_call_operand.vmem [shape: bf16[32,32], index: 4, kind: input, shape index: {}]
  %s5 = inlined_call_operand.vmem [shape: bf16[32,32], index: 5, kind: input, shape index: {}]
  %s6 = inlined_call_operand.hbm [shape: bf16[32,128], index: 6, kind: input, shape index: {}]
  %s7 = inlined_call_operand.hbm [shape: bf16[32,128], index: 7, kind: input, shape index: {}]
  %s8 = inlined_call_operand.vmem [shape: bf16[128,32], index: 8, kind: input, shape index: {}]
  %s9 = inlined_call_operand.vmem [shape: f32[4,32], index: 9, kind: input, shape index: {}]
  %s10 = inlined_call_operand.vmem [shape: f32[4,32], index: 10, kind: input, shape index: {}]
  %s11 = inlined_call_operand.hbm [shape: f32[2,8,32], index: 11, kind: output, shape index: {0}]
  %s12 = inlined_call_operand.hbm [shape: f32[2,8,32], index: 12, kind: output, shape index: {1}]
  %s13 = inlined_call_operand.hbm [shape: f32[2,8,32], index: 13, kind: output, shape index: {2}]
  %s14 = inlined_call_operand.hbm [shape: f32[2,8,32], index: 14, kind: output, shape index: {3}]
  %15 = xla_tuple %s11, %s12, %s13, %s14
  %s16 = sld [smem:[#allocation0]]
  $region113: #{tpu_custom_call.1} parent=0
    _
  %s18 = ssub.s32 1, %s16
  %s19 = scalar_select 0, %s18, %s16
  $region1: #{tpu_custom_call.1} parent=0
    #allocation4 [shape = 'u8[8192]{0}', space=vmem, size = 0x2000, scoped, tag = 'input window, operand 6, single buffered']
    #allocation5 [shape = 's32[2]{0}', space=sflag, size = 0x8, scoped, tag = 'scoped memory for tpu_custom_call.1']
    #allocation6 [shape = 's32[2]{0}', space=sflag, size = 0x8, scoped, tag = 'scoped memory for tpu_custom_call.1']
    #allocation7 [shape = 'u8[8192]{0}', space=vmem, size = 0x2000, scoped, tag = 'input window, operand 7, single buffered']
    #allocation8 [shape = 's32[1]{0}', space=sflag, size = 0x4, scoped, tag = 'scoped memory for tpu_custom_call.1']
    #allocation9 [shape = 'u8[8192]{0}', space=vmem, size = 0x2000, scoped, tag = 'output window, operand 0']
    #allocation10 [shape = 'u8[8192]{0}', space=vmem, size = 0x2000, scoped, tag = 'output window, operand 1']
    #allocation11 [shape = 's32[2]{0}', space=sflag, size = 0x8, scoped, tag = 'scoped memory for tpu_custom_call.1']
    #allocation12 [shape = 'u8[8192]{0}', space=vmem, size = 0x2000, scoped, tag = 'output window, operand 2']
    #allocation13 [shape = 'u8[8192]{0}', space=vmem, size = 0x2000, scoped, tag = 'output window, operand 3']
    #allocation14 [shape = 's32[2]{0}', space=sflag, size = 0x8, scoped, tag = 'scoped memory for tpu_custom_call.1']
    %20 = vsyncpa [#allocation5], 0
    %21 = vsyncpa [#allocation8], 0
    %22 = vsyncpa [#allocation6], 0
    %s23 = scalar_lea.sflag [#allocation6], 1
    %24 = vsyncpa %s23, 0
    %25 = vsyncpa [#allocation11], 0
    %s26 = scalar_lea.sflag [#allocation11], 1
    %27 = vsyncpa %s26, 0
    %28 = vsyncpa [#allocation14], 0
    %s29 = scalar_lea.sflag [#allocation14], 1
    %30 = vsyncpa %s29, 0
    loop: start=0, step=1, limit=4
    $region2: #{tpu_custom_call.1} parent=1 // loop_pre_header
      _
    $region3: #{tpu_custom_call.1} parent=1 // loop_header
      %s32 = sphi 0, %s36
      %p33 = scmp.ge.s32.totalorder %s32, 4
      %s39 = sphi 0, %s51
      %s40 = sphi 0, %s47
      %s41 = sphi 0, %s39
      %s42 = sphi 0, %s40
      %s43 = sphi 0, %s41
      %s44 = sphi 0, %s42
      %s54 = sphi 0, %s56
      %s57 = sphi 0, %s54
      %s58 = sphi 0, %s57
      %s74 = sphi 0, %s58
      %s78 = sphi 0, %s78
      %s80 = sphi 0, %s78
      %s81 = sphi 0, %s80
      %s95 = sphi 0, %s81
      %s99 = sphi 0, %s99
      %s101 = sphi 0, %s99
      %s102 = sphi 0, %s101
      %s116 = sphi 0, %s102
      %s120 = sphi 0, %s120
      %s122 = sphi 0, %s120
      %s123 = sphi 0, %s122
      %s137 = sphi 0, %s123
      %s141 = sphi 0, %s141
      %s143 = sphi 0, %s141
      %s144 = sphi 0, %s143
      %s158 = sphi 0, %s144
      %s162 = sphi 0, %s162
      %s164 = sphi 0, %s162
      %s165 = sphi 0, %s164
      %s179 = sphi 0, %s165
      %s183 = sphi 0, %s183
      %s185 = sphi 0, %s183
      %s186 = sphi 0, %s185
      %s200 = sphi 0, %s186
      %s204 = sphi 0, %s204
      %s206 = sphi 0, %s204
      %s207 = sphi 0, %s206
      %s221 = sphi 0, %s207
      %s225 = sphi 0, %s225
      %s227 = sphi 0, %s225
      %s228 = sphi 0, %s227
      %s242 = sphi 0, %s228
      %s246 = sphi 0, %s246
      %s248 = sphi 0, %s246
      %s249 = sphi 0, %s248
      %s263 = sphi 0, %s249
      %s267 = sphi 0, %s267
      %s269 = sphi 0, %s267
      %s270 = sphi 0, %s269
      %s284 = sphi 0, %s270
      %s292 = sphi 0, %s294
      %s295 = sphi 0, %s292
      %s296 = sphi 0, %s295
      %s312 = sphi 0, %s296
      %s320 = sphi 0, %s322
      %s323 = sphi 0, %s320
      %s324 = sphi 0, %s323
      %s340 = sphi 0, %s324
      %s348 = sphi 0, %s350
      %s351 = sphi 0, %s348
      %s352 = sphi 0, %s351
      %s368 = sphi 0, %s352
      %s376 = sphi 0, %s378
      %s379 = sphi 0, %s376
      %s380 = sphi 0, %s379
      %s396 = sphi 0, %s380
    $region4: #{tpu_custom_call.1} parent=1 // loop_header_branch
      %35 = sbr.rel (%p33) target = $region8
    $region5: #{tpu_custom_call.1} parent=1 // loop_body
      %s37 = ssub.s32 %s32, 1
      %s38 = ssub.s32 %s32, 2
      %s45 = sadd.s32 1, %s40
      %p46 = scmp.ge.s32.totalorder %s45, 1
      %s47 = scalar_select %p46, 0, %s45
      %s48 = sadd.s32 1, %s39
      %s49 = scalar_select %p46, %s48, %s39
      %p50 = scmp.ge.s32.totalorder %s49, 2
      %s51 = scalar_select %p50, 0, %s49
      %s52 = ssub.s32 %s39, %s51
      %p53 = scmp.eq.s32.totalorder %s52, 0
      %s55 = sadd.s32 %s54, 1
      %s56 = scalar_select %p53, %s54, %s55
      %p59 = pneg %p53
      %p60 = scmp.eq.s32.totalorder %s32, 1
      %p61 = por %p59, %p60
      %p62 = scmp.ne.s32.totalorder %s54, %s57
      %p63 = scmp.eq.s32.totalorder %s32, 0
      %p64 = por %p62, %p63
      %p65 = scmp.ne.s32.totalorder %s54, %s57
      %p66 = scmp.eq.s32.totalorder %s37, 1
      %p67 = por %p65, %p66
      %p68 = scmp.ne.s32.totalorder %s57, %s58
      %p69 = scmp.eq.s32.totalorder %s37, 0
      %p70 = por %p68, %p69
      %p71 = scmp.ne.s32.totalorder %s57, %s58
      %p72 = scmp.eq.s32.totalorder %s38, 1
      %p73 = por %p71, %p72
      %p75 = scmp.ne.s32.totalorder %s58, %s74
      %p76 = scmp.eq.s32.totalorder %s38, 0
      %p77 = por %p75, %p76
      %s79 = sadd.s32 %s78, 1
      %p82 = scmp.eq.s32.totalorder %s32, 1
      %p83 = scmp.ne.s32.totalorder %s78, %s80
      %p84 = scmp.eq.s32.totalorder %s32, 0
      %p85 = por %p83, %p84
      %p86 = scmp.ne.s32.totalorder %s78, %s80
      %p87 = scmp.eq.s32.totalorder %s37, 1
      %p88 = por %p86, %p87
      %p89 = scmp.ne.s32.totalorder %s80, %s81
      %p90 = scmp.eq.s32.totalorder %s37, 0
      %p91 = por %p89, %p90
      %p92 = scmp.ne.s32.totalorder %s80, %s81
      %p93 = scmp.eq.s32.totalorder %s38, 1
      %p94 = por %p92, %p93
      %p96 = scmp.ne.s32.totalorder %s81, %s95
      %p97 = scmp.eq.s32.totalorder %s38, 0
      %p98 = por %p96, %p97
      %s100 = sadd.s32 %s99, 1
      %p103 = scmp.eq.s32.totalorder %s32, 1
      %p104 = scmp.ne.s32.totalorder %s99, %s101
      %p105 = scmp.eq.s32.totalorder %s32, 0
      %p106 = por %p104, %p105
      %p107 = scmp.ne.s32.totalorder %s99, %s101
      %p108 = scmp.eq.s32.totalorder %s37, 1
      %p109 = por %p107, %p108
      %p110 = scmp.ne.s32.totalorder %s101, %s102
      %p111 = scmp.eq.s32.totalorder %s37, 0
      %p112 = por %p110, %p111
      %p113 = scmp.ne.s32.totalorder %s101, %s102
      %p114 = scmp.eq.s32.totalorder %s38, 1
      %p115 = por %p113, %p114
      %p117 = scmp.ne.s32.totalorder %s102, %s116
      %p118 = scmp.eq.s32.totalorder %s38, 0
      %p119 = por %p117, %p118
      %s121 = sadd.s32 %s120, 1
      %p124 = scmp.eq.s32.totalorder %s32, 1
      %p125 = scmp.ne.s32.totalorder %s120, %s122
      %p126 = scmp.eq.s32.totalorder %s32, 0
      %p127 = por %p125, %p126
      %p128 = scmp.ne.s32.totalorder %s120, %s122
      %p129 = scmp.eq.s32.totalorder %s37, 1
      %p130 = por %p128, %p129
      %p131 = scmp.ne.s32.totalorder %s122, %s123
      %p132 = scmp.eq.s32.totalorder %s37, 0
      %p133 = por %p131, %p132
      %p134 = scmp.ne.s32.totalorder %s122, %s123
      %p135 = scmp.eq.s32.totalorder %s38, 1
      %p136 = por %p134, %p135
      %p138 = scmp.ne.s32.totalorder %s123, %s137
      %p139 = scmp.eq.s32.totalorder %s38, 0
      %p140 = por %p138, %p139
      %s142 = sadd.s32 %s141, 1
      %p145 = scmp.eq.s32.totalorder %s32, 1
      %p146 = scmp.ne.s32.totalorder %s141, %s143
      %p147 = scmp.eq.s32.totalorder %s32, 0
      %p148 = por %p146, %p147
      %p149 = scmp.ne.s32.totalorder %s141, %s143
      %p150 = scmp.eq.s32.totalorder %s37, 1
      %p151 = por %p149, %p150
      %p152 = scmp.ne.s32.totalorder %s143, %s144
      %p153 = scmp.eq.s32.totalorder %s37, 0
      %p154 = por %p152, %p153
      %p155 = scmp.ne.s32.totalorder %s143, %s144
      %p156 = scmp.eq.s32.totalorder %s38, 1
      %p157 = por %p155, %p156
      %p159 = scmp.ne.s32.totalorder %s144, %s158
      %p160 = scmp.eq.s32.totalorder %s38, 0
      %p161 = por %p159, %p160
      %s163 = sadd.s32 %s162, 1
      %p166 = scmp.eq.s32.totalorder %s32, 1
      %p167 = scmp.ne.s32.totalorder %s162, %s164
      %p168 = scmp.eq.s32.totalorder %s32, 0
      %p169 = por %p167, %p168
      %p170 = scmp.ne.s32.totalorder %s162, %s164
      %p171 = scmp.eq.s32.totalorder %s37, 1
      %p172 = por %p170, %p171
      %p173 = scmp.ne.s32.totalorder %s164, %s165
      %p174 = scmp.eq.s32.totalorder %s37, 0
      %p175 = por %p173, %p174
      %p176 = scmp.ne.s32.totalorder %s164, %s165
      %p177 = scmp.eq.s32.totalorder %s38, 1
      %p178 = por %p176, %p177
      %p180 = scmp.ne.s32.totalorder %s165, %s179
      %p181 = scmp.eq.s32.totalorder %s38, 0
      %p182 = por %p180, %p181
      %s184 = sadd.s32 %s183, 1
      %p187 = scmp.eq.s32.totalorder %s32, 1
      %p188 = scmp.ne.s32.totalorder %s183, %s185
      %p189 = scmp.eq.s32.totalorder %s32, 0
      %p190 = por %p188, %p189
      %p191 = scmp.ne.s32.totalorder %s183, %s185
      %p192 = scmp.eq.s32.totalorder %s37, 1
      %p193 = por %p191, %p192
      %p194 = scmp.ne.s32.totalorder %s185, %s186
      %p195 = scmp.eq.s32.totalorder %s37, 0
      %p196 = por %p194, %p195
      %p197 = scmp.ne.s32.totalorder %s185, %s186
      %p198 = scmp.eq.s32.totalorder %s38, 1
      %p199 = por %p197, %p198
      %p201 = scmp.ne.s32.totalorder %s186, %s200
      %p202 = scmp.eq.s32.totalorder %s38, 0
      %p203 = por %p201, %p202
      %s205 = sadd.s32 %s204, 1
      %p208 = scmp.eq.s32.totalorder %s32, 1
      %p209 = scmp.ne.s32.totalorder %s204, %s206
      %p210 = scmp.eq.s32.totalorder %s32, 0
      %p211 = por %p209, %p210
      %p212 = scmp.ne.s32.totalorder %s204, %s206
      %p213 = scmp.eq.s32.totalorder %s37, 1
      %p214 = por %p212, %p213
      %p215 = scmp.ne.s32.totalorder %s206, %s207
      %p216 = scmp.eq.s32.totalorder %s37, 0
      %p217 = por %p215, %p216
      %p218 = scmp.ne.s32.totalorder %s206, %s207
      %p219 = scmp.eq.s32.totalorder %s38, 1
      %p220 = por %p218, %p219
      %p222 = scmp.ne.s32.totalorder %s207, %s221
      %p223 = scmp.eq.s32.totalorder %s38, 0
      %p224 = por %p222, %p223
      %s226 = sadd.s32 %s225, 1
      %p229 = scmp.eq.s32.totalorder %s32, 1
      %p230 = scmp.ne.s32.totalorder %s225, %s227
      %p231 = scmp.eq.s32.totalorder %s32, 0
      %p232 = por %p230, %p231
      %p233 = scmp.ne.s32.totalorder %s225, %s227
      %p234 = scmp.eq.s32.totalorder %s37, 1
      %p235 = por %p233, %p234
      %p236 = scmp.ne.s32.totalorder %s227, %s228
      %p237 = scmp.eq.s32.totalorder %s37, 0
      %p238 = por %p236, %p237
      %p239 = scmp.ne.s32.totalorder %s227, %s228
      %p240 = scmp.eq.s32.totalorder %s38, 1
      %p241 = por %p239, %p240
      %p243 = scmp.ne.s32.totalorder %s228, %s242
      %p244 = scmp.eq.s32.totalorder %s38, 0
      %p245 = por %p243, %p244
      %s247 = sadd.s32 %s246, 1
      %p250 = scmp.eq.s32.totalorder %s32, 1
      %p251 = scmp.ne.s32.totalorder %s246, %s248
      %p252 = scmp.eq.s32.totalorder %s32, 0
      %p253 = por %p251, %p252
      %p254 = scmp.ne.s32.totalorder %s246, %s248
      %p255 = scmp.eq.s32.totalorder %s37, 1
      %p256 = por %p254, %p255
      %p257 = scmp.ne.s32.totalorder %s248, %s249
      %p258 = scmp.eq.s32.totalorder %s37, 0
      %p259 = por %p257, %p258
      %p260 = scmp.ne.s32.totalorder %s248, %s249
      %p261 = scmp.eq.s32.totalorder %s38, 1
      %p262 = por %p260, %p261
      %p264 = scmp.ne.s32.totalorder %s249, %s263
      %p265 = scmp.eq.s32.totalorder %s38, 0
      %p266 = por %p264, %p265
      %s268 = sadd.s32 %s267, 1
      %p271 = scmp.eq.s32.totalorder %s32, 1
      %p272 = scmp.ne.s32.totalorder %s267, %s269
      %p273 = scmp.eq.s32.totalorder %s32, 0
      %p274 = por %p272, %p273
      %p275 = scmp.ne.s32.totalorder %s267, %s269
      %p276 = scmp.eq.s32.totalorder %s37, 1
      %p277 = por %p275, %p276
      %p278 = scmp.ne.s32.totalorder %s269, %s270
      %p279 = scmp.eq.s32.totalorder %s37, 0
      %p280 = por %p278, %p279
      %p281 = scmp.ne.s32.totalorder %s269, %s270
      %p282 = scmp.eq.s32.totalorder %s38, 1
      %p283 = por %p281, %p282
      %p285 = scmp.ne.s32.totalorder %s270, %s284
      %p286 = scmp.eq.s32.totalorder %s38, 0
      %p287 = por %p285, %p286
      %s288 = ssub.s32 %s39, %s51
      %s289 = ssub.s32 %s40, %s47
      %s290 = sor.u32 %s288, %s289
      %p291 = scmp.eq.s32.totalorder %s290, 0
      %s293 = sadd.s32 %s292, 1
      %s294 = scalar_select %p291, %s292, %s293
      %p297 = pneg %p291
      %p298 = scmp.eq.s32.totalorder %s32, 1
      %p299 = por %p297, %p298
      %p300 = scmp.ne.s32.totalorder %s292, %s295
      %p301 = scmp.eq.s32.totalorder %s32, 0
      %p302 = por %p300, %p301
      %p303 = scmp.ne.s32.totalorder %s292, %s295
      %p304 = scmp.eq.s32.totalorder %s37, 1
      %p305 = por %p303, %p304
      %p306 = scmp.ne.s32.totalorder %s295, %s296
      %p307 = scmp.eq.s32.totalorder %s37, 0
      %p308 = por %p306, %p307
      %p309 = scmp.ne.s32.totalorder %s295, %s296
      %p310 = scmp.eq.s32.totalorder %s38, 1
      %p311 = por %p309, %p310
      %p313 = scmp.ne.s32.totalorder %s296, %s312
      %p314 = scmp.eq.s32.totalorder %s38, 0
      %p315 = por %p313, %p314
      %s316 = ssub.s32 %s39, %s51
      %s317 = ssub.s32 %s40, %s47
      %s318 = sor.u32 %s316, %s317
      %p319 = scmp.eq.s32.totalorder %s318, 0
      %s321 = sadd.s32 %s320, 1
      %s322 = scalar_select %p319, %s320, %s321
      %p325 = pneg %p319
      %p326 = scmp.eq.s32.totalorder %s32, 1
      %p327 = por %p325, %p326
      %p328 = scmp.ne.s32.totalorder %s320, %s323
      %p329 = scmp.eq.s32.totalorder %s32, 0
      %p330 = por %p328, %p329
      %p331 = scmp.ne.s32.totalorder %s320, %s323
      %p332 = scmp.eq.s32.totalorder %s37, 1
      %p333 = por %p331, %p332
      %p334 = scmp.ne.s32.totalorder %s323, %s324
      %p335 = scmp.eq.s32.totalorder %s37, 0
      %p336 = por %p334, %p335
      %p337 = scmp.ne.s32.totalorder %s323, %s324
      %p338 = scmp.eq.s32.totalorder %s38, 1
      %p339 = por %p337, %p338
      %p341 = scmp.ne.s32.totalorder %s324, %s340
      %p342 = scmp.eq.s32.totalorder %s38, 0
      %p343 = por %p341, %p342
      %s344 = ssub.s32 %s39, %s51
      %s345 = ssub.s32 %s40, %s47
      %s346 = sor.u32 %s344, %s345
      %p347 = scmp.eq.s32.totalorder %s346, 0
      %s349 = sadd.s32 %s348, 1
      %s350 = scalar_select %p347, %s348, %s349
      %p353 = pneg %p347
      %p354 = scmp.eq.s32.totalorder %s32, 1
      %p355 = por %p353, %p354
      %p356 = scmp.ne.s32.totalorder %s348, %s351
      %p357 = scmp.eq.s32.totalorder %s32, 0
      %p358 = por %p356, %p357
      %p359 = scmp.ne.s32.totalorder %s348, %s351
      %p360 = scmp.eq.s32.totalorder %s37, 1
      %p361 = por %p359, %p360
      %p362 = scmp.ne.s32.totalorder %s351, %s352
      %p363 = scmp.eq.s32.totalorder %s37, 0
      %p364 = por %p362, %p363
      %p365 = scmp.ne.s32.totalorder %s351, %s352
      %p366 = scmp.eq.s32.totalorder %s38, 1
      %p367 = por %p365, %p366
      %p369 = scmp.ne.s32.totalorder %s352, %s368
      %p370 = scmp.eq.s32.totalorder %s38, 0
      %p371 = por %p369, %p370
      %s372 = ssub.s32 %s39, %s51
      %s373 = ssub.s32 %s40, %s47
      %s374 = sor.u32 %s372, %s373
      %p375 = scmp.eq.s32.totalorder %s374, 0
      %s377 = sadd.s32 %s376, 1
      %s378 = scalar_select %p375, %s376, %s377
      %p381 = pneg %p375
      %p382 = scmp.eq.s32.totalorder %s32, 1
      %p383 = por %p381, %p382
      %p384 = scmp.ne.s32.totalorder %s376, %s379
      %p385 = scmp.eq.s32.totalorder %s32, 0
      %p386 = por %p384, %p385
      %p387 = scmp.ne.s32.totalorder %s376, %s379
      %p388 = scmp.eq.s32.totalorder %s37, 1
      %p389 = por %p387, %p388
      %p390 = scmp.ne.s32.totalorder %s379, %s380
      %p391 = scmp.eq.s32.totalorder %s37, 0
      %p392 = por %p390, %p391
      %p393 = scmp.ne.s32.totalorder %s379, %s380
      %p394 = scmp.eq.s32.totalorder %s38, 1
      %p395 = por %p393, %p394
      %p397 = scmp.ne.s32.totalorder %s380, %s396
      %p398 = scmp.eq.s32.totalorder %s38, 0
      %p399 = por %p397, %p398
      %p400 = scmp.le.s32.totalorder 1, %s32
      %p401 = scmp.lt.s32.totalorder %s32, 3
      %p402 = pnand %p400, %p401
      %p403 = pneg %p402
      // Predicated region
      $region9: #{tpu_custom_call.1} parent=5 // pred_check
        _
      $region10: #{tpu_custom_call.1} parent=5 // pred_check_branch
        %405 = sbr.rel (%p402) target = $region12
      $region11: #{tpu_custom_call.1} parent=5 // pred_region
        %s406 = ssub.s32 %s32, 1
        // Predicated region
        $region13: #{tpu_custom_call.1} parent=11 // pred_check
          %p407 = pneg %p91
        $region14: #{tpu_custom_call.1} parent=11 // pred_check_branch
          %409 = sbr.rel (%p407) target = $region16
        $region15: #{tpu_custom_call.1} parent=11 // pred_region
          _
        $region16: #{tpu_custom_call.1} parent=11 // pred_fallthru
          _
        // Predicated region
        $region17: #{tpu_custom_call.1} parent=11 // pred_check
          %p410 = pneg %p112
        $region18: #{tpu_custom_call.1} parent=11 // pred_check_branch
          %412 = sbr.rel (%p410) target = $region20
        $region19: #{tpu_custom_call.1} parent=11 // pred_region
          _
        $region20: #{tpu_custom_call.1} parent=11 // pred_fallthru
          _
        // Predicated region
        $region21: #{tpu_custom_call.1} parent=11 // pred_check
          %p413 = pneg %p133
        $region22: #{tpu_custom_call.1} parent=11 // pred_check_branch
          %415 = sbr.rel (%p413) target = $region24
        $region23: #{tpu_custom_call.1} parent=11 // pred_region
          _
        $region24: #{tpu_custom_call.1} parent=11 // pred_fallthru
          _
        // Predicated region
        $region25: #{tpu_custom_call.1} parent=11 // pred_check
          %p416 = pneg %p154
        $region26: #{tpu_custom_call.1} parent=11 // pred_check_branch
          %418 = sbr.rel (%p416) target = $region28
        $region27: #{tpu_custom_call.1} parent=11 // pred_region
          _
        $region28: #{tpu_custom_call.1} parent=11 // pred_fallthru
          _
        // Predicated region
        $region29: #{tpu_custom_call.1} parent=11 // pred_check
          %p419 = pneg %p175
        $region30: #{tpu_custom_call.1} parent=11 // pred_check_branch
          %421 = sbr.rel (%p419) target = $region32
        $region31: #{tpu_custom_call.1} parent=11 // pred_region
          _
        $region32: #{tpu_custom_call.1} parent=11 // pred_fallthru
          _
        // Predicated region
        $region33: #{tpu_custom_call.1} parent=11 // pred_check
          %p422 = pneg %p196
        $region34: #{tpu_custom_call.1} parent=11 // pred_check_branch
          %424 = sbr.rel (%p422) target = $region36
        $region35: #{tpu_custom_call.1} parent=11 // pred_region
          %426 = vsyncadd [#allocation5], 0
          %s427 = sshll.u32 %s6, 4
          %s428 = int_to_ptr.hbm [resolvable:$true] %s427
          %s429 = sshll.u32 [#allocation4], 4
          %s430 = int_to_ptr.vmem [resolvable:$true] %s429
          %435 = dma.hbm_to_vmem [thread:$0]  %s428, 256, %s430, [#allocation5], 64, 64, 4
        $region36: #{tpu_custom_call.1} parent=11 // pred_fallthru
          _
        // Predicated region
        $region37: #{tpu_custom_call.1} parent=11 // pred_check
          %p436 = pneg %p217
        $region38: #{tpu_custom_call.1} parent=11 // pred_check_branch
          %438 = sbr.rel (%p436) target = $region40
        $region39: #{tpu_custom_call.1} parent=11 // pred_region
          %440 = vsyncadd [#allocation8], 0
          %s441 = sshll.u32 %s7, 4
          %s442 = int_to_ptr.hbm [resolvable:$true] %s441
          %s443 = sshll.u32 [#allocation7], 4
          %s444 = int_to_ptr.vmem [resolvable:$true] %s443
          %449 = dma.hbm_to_vmem [thread:$0]  %s442, 256, %s444, [#allocation8], 64, 64, 4
        $region40: #{tpu_custom_call.1} parent=11 // pred_fallthru
          _
        // Predicated region
        $region41: #{tpu_custom_call.1} parent=11 // pred_check
          %p450 = pneg %p238
        $region42: #{tpu_custom_call.1} parent=11 // pred_check_branch
          %452 = sbr.rel (%p450) target = $region44
        $region43: #{tpu_custom_call.1} parent=11 // pred_region
          _
        $region44: #{tpu_custom_call.1} parent=11 // pred_fallthru
          _
        // Predicated region
        $region45: #{tpu_custom_call.1} parent=11 // pred_check
          %p453 = pneg %p259
        $region46: #{tpu_custom_call.1} parent=11 // pred_check_branch
          %455 = sbr.rel (%p453) target = $region48
        $region47: #{tpu_custom_call.1} parent=11 // pred_region
          _
        $region48: #{tpu_custom_call.1} parent=11 // pred_fallthru
          _
        // Predicated region
        $region49: #{tpu_custom_call.1} parent=11 // pred_check
          %p456 = pneg %p280
        $region50: #{tpu_custom_call.1} parent=11 // pred_check_branch
          %458 = sbr.rel (%p456) target = $region52
        $region51: #{tpu_custom_call.1} parent=11 // pred_region
          _
        $region52: #{tpu_custom_call.1} parent=11 // pred_fallthru
          _
      $region12: #{tpu_custom_call.1} parent=5 // pred_fallthru
        _
      %p459 = scmp.lt.s32.totalorder %s32, 2
      // Predicated region
      $region53: #{tpu_custom_call.1} parent=5 // pred_check
        %p460 = pneg %p459
      $region54: #{tpu_custom_call.1} parent=5 // pred_check_branch
        %462 = sbr.rel (%p460) target = $region56
      $region55: #{tpu_custom_call.1} parent=5 // pred_region
        // Predicated region
        $region57: #{tpu_custom_call.1} parent=55 // pred_check
          %p463 = pneg %p64
        $region58: #{tpu_custom_call.1} parent=55 // pred_check_branch
          %465 = sbr.rel (%p463) target = $region60
        $region59: #{tpu_custom_call.1} parent=55 // pred_region
          %p466 = scmp.lt.s32.totalorder %s39, 1
          %s467 = scalar_select %p466, %s39, 1
          %s468 = smul.addr %s467, 8
          %s469 = scalar_lea.vmem %s0, %s468
        $region60: #{tpu_custom_call.1} parent=55 // pred_fallthru
          _
      $region56: #{tpu_custom_call.1} parent=5 // pred_fallthru
        _
      %p470 = scmp.le.s32.totalorder 1, %s32
      %p471 = scmp.lt.s32.totalorder %s32, 3
      %p472 = pnand %p470, %p471
      %p473 = pneg %p472
      // Predicated region
      $region61: #{tpu_custom_call.1} parent=5 // pred_check
        _
      $region62: #{tpu_custom_call.1} parent=5 // pred_check_branch
        %475 = sbr.rel (%p472) target = $region64
      $region63: #{tpu_custom_call.1} parent=5 // pred_region
        %s476 = ssub.s32 %s32, 1
        // Predicated region
        $region65: #{tpu_custom_call.1} parent=63 // pred_check
          %p477 = pneg %p196
        $region66: #{tpu_custom_call.1} parent=63 // pred_check_branch
          %479 = sbr.rel (%p477) target = $region68
        $region67: #{tpu_custom_call.1} parent=63 // pred_region
          %481 = dma.done [#allocation5], 256
        $region68: #{tpu_custom_call.1} parent=63 // pred_fallthru
          _
        // Predicated region
        $region69: #{tpu_custom_call.1} parent=63 // pred_check
          %p482 = pneg %p217
        $region70: #{tpu_custom_call.1} parent=63 // pred_check_branch
          %484 = sbr.rel (%p482) target = $region72
        $region71: #{tpu_custom_call.1} parent=63 // pred_region
          %486 = dma.done [#allocation8], 256
        $region72: #{tpu_custom_call.1} parent=63 // pred_fallthru
          _
        %p487 = scmp.lt.s32.totalorder %s41, 1
        %s488 = scalar_select %p487, %s41, 1
        %s489 = smul.addr %s488, 8
        %s490 = scalar_lea.vmem %s0, %s489
        %p491 = pneg %p70
        %p492 = pneg %p67
        %p493 = pneg %p91
        %p494 = pneg %p88
        %p495 = pneg %p112
        %p496 = pneg %p109
        %p497 = pneg %p133
        %p498 = pneg %p130
        %p499 = pneg %p154
        %p500 = pneg %p151
        %p501 = pneg %p175
        %p502 = pneg %p172
        %p503 = pneg %p196
        %p504 = pneg %p193
        %p505 = pneg %p217
        %p506 = pneg %p214
        %p507 = pneg %p238
        %p508 = pneg %p235
        %p509 = pneg %p259
        %p510 = pneg %p256
        %p511 = pneg %p280
        %p512 = pneg %p277
        %p513 = pneg %p308
        %p514 = pneg %p305
        %s515 = sand.u32 %s295, 1
        %s516 = scalar_lea.sflag [#allocation6], %s515
        %s517 = sand.u32 %s295, 1
        %s518 = smul.addr %s517, 8
        %s519 = scalar_lea.vmem [#allocation9], %s518
        %p520 = pneg %p336
        %p521 = pneg %p333
        %s522 = sand.u32 %s37, 1
        %s523 = scalar_lea.sflag [#allocation11], %s522
        %s524 = sand.u32 %s323, 1
        %s525 = smul.addr %s524, 8
        %s526 = scalar_lea.vmem [#allocation10], %s525
        %p527 = pneg %p364
        %p528 = pneg %p361
        %s529 = sand.u32 %s37, 1
        %s530 = scalar_lea.sflag [#allocation11], %s529
        %s531 = sand.u32 %s351, 1
        %s532 = smul.addr %s531, 8
        %s533 = scalar_lea.vmem [#allocation12], %s532
        %p534 = pneg %p392
        %p535 = pneg %p389
        %s536 = sand.u32 %s379, 1
        %s537 = scalar_lea.sflag [#allocation14], %s536
        %s538 = sand.u32 %s379, 1
        %s539 = smul.addr %s538, 8
        %s540 = scalar_lea.vmem [#allocation13], %s539
        %p541 = scmp.lt.s32.totalorder %s41, 1
        %s542 = scalar_select %p541, %s41, 1
        %s543 = smul.addr %s542, 8
        %s544 = scalar_lea.vmem %s0, %s543
        %p546 = scmp.eq.s32.totalorder %s42, 0
        // Predicated region
        $region73: #{tpu_custom_call.1} parent=63 // pred_check
          %p547 = pneg %p546
        $region74: #{tpu_custom_call.1} parent=63 // pred_check_branch
          %549 = sbr.rel (%p547) target = $region76
        $region75: #{tpu_custom_call.1} parent=63 // pred_region
          %v550 = vld [vmem:[%s544] sm:$0xff]
          %vm551 = vcmask 261120
          %v552 = vsel %vm551, %v550, 0.0
          %553 = vadd.xlane.f32.xlu0 %v552
          %v554 = vpop.xlane.xlu0 %553
          %v555 = vrcp.pop 32.0
          %v556 = vmul.f32 32.0, %v555
          %v557 = vsub.f32 1.0, %v556
          %v558 = vmul.f32 %v555, %v557
          %v559 = vadd.f32 %v555, %v558
          %vm560 = vweird.f32 %v555
          %v561 = vsel %vm560, %v555, %v559
          %v562 = vmul.f32 %v554, %v561
          %v563 = vsub.f32 %v550, %v562
          %v564 = vmul.f32 %v563, %v563
          %v565 = vsel %vm551, %v564, 0.0
          %566 = vadd.xlane.f32.xlu0 %v565
          %v567 = vpop.xlane.xlu0 %566
          %v568 = vmul.f32 %v567, %v561
          %v569 = vadd.f32 %v568, 1e-05
          %v570 = vrsqrt.pop %v569
          %v571 = vmul.f32 %v570, %v569
          %v572 = vmul.f32 %v571, %v570
          %v573 = vmul.f32 0.5, %v572
          %v574 = vsub.f32 1.5, %v573
          %v575 = vmul.f32 %v570, %v574
          %vm576 = vweird.f32 %v569
          %vm577 = vweird.f32 %v570
          %vm578 = vmor %vm576, %vm577
          %v579 = vsel %vm578, %v570, %v575
          %v580 = vmul.f32 %v563, %v579
          %v581 = vadd.f32 %v580, 0.0
          %v582 = vld [vmem:[%s9] sm:$0x1]
          %v583 = vld [vmem:[%s10] sm:$0x1]
          %v584 = vsel %vm551, %v581, 0.0
          %585 = vadd.xlane.f32.xlu0 %v584
          %v586 = vpop.xlane.xlu0 %585
          %v587 = vmul.f32 %v586, %v561
          %v588 = vsub.f32 %v581, %v587
          %v589 = vmul.f32 %v588, %v588
          %v590 = vsel %vm551, %v589, 0.0
          %591 = vadd.xlane.f32.xlu0 %v590
          %v592 = vpop.xlane.xlu0 %591
          %v593 = vmul.f32 %v592, %v561
          %v594 = vadd.f32 %v593, 1e-05
          %v595 = vrsqrt.pop %v594
          %v596 = vmul.f32 %v595, %v594
          %v597 = vmul.f32 %v596, %v595
          %v598 = vmul.f32 0.5, %v597
          %v599 = vsub.f32 1.5, %v598
          %v600 = vmul.f32 %v595, %v599
          %vm601 = vweird.f32 %v594
          %vm602 = vweird.f32 %v595
          %vm603 = vmor %vm601, %vm602
          %v604 = vsel %vm603, %v595, %v600
          %v605 = vmul.f32 %v588, %v604
          %v606 = vperm.slane %v582, 0
          %v607 = vmul.f32 %v605, %v606
          %v608 = vperm.slane %v583, 0
          %v609 = vadd.f32 %v607, %v608
          %v610 = vpack.c.bf16 %v609, %v609
          %v611 = vld [vmem:[%s3] sm:$0xf]
          %v612 = vld [vmem:[%s3 + $0x4] sm:$0xf]
          %v613 = vld [vmem:[%s3 + $0x8] sm:$0xf]
          %v614 = vld [vmem:[%s3 + $0xc] sm:$0xf]
          %v619 = vunpack.c.l.b16 %v611
          %v620 = vunpack.c.l.b16 %v612
          %v621 = vunpack.c.l.b16 %v613
          %v622 = vunpack.c.l.b16 %v614
          %v623 = vpack.c.b16 %v620, %v619
          %v624 = vpack.c.b16 %v622, %v621
          %v628 = vsel %vm551, %v610, 0
          %630 = vmatpush.bf16.msra.mxu0 0
          %631 = vmatpush.bf16.msra.mxu0 0
          %632 = vmatpush.bf16.msra.mxu0 0
          %633 = vmatpush.bf16.msra.mxu0 0
          %634 = vmatpush.bf16.msra.mxu0 0
          %635 = vmatpush.bf16.msra.mxu0 0
          %636 = vmatpush.bf16.msra.mxu0 %v624
          %637 = vmatpush.bf16.msra.mxu0 %v623
          %638 = vmatmul.bf16.gmra.mxu0 %v628
          %v639 = vpop.f32.mrf.mxu0
          %v640 = vadd.f32 0.0, %v639
          %v641 = vpop.f32.mrf.mxu0
          %642 = vdwg.mxu0
          %644 = vrot.lane.b32.xlu0 %v640, 120
          %v645 = vpop.permute.xlu0 %644
          %647 = vrot.lane.b32.xlu0 %v640, 112
          %v648 = vpop.permute.xlu0 %647
          %650 = vrot.lane.b32.xlu0 %v640, 104
          %v651 = vpop.permute.xlu0 %650
          %v653 = vrot.slane %v648, 4
          %vm654 = vcmask 1047556
          %v655 = vsel %vm654, %v653, %v640
          %v656 = vrot.slane %v640, 4
          %v657 = vsel %vm654, %v648, %v656
          %v659 = vunpack.c.l.s4 1983009808
          %v660 = vunpack.c.0.s8 %v659
          %v661 = vperm.slane %v655, %v660
          %v663 = vunpack.c.l.s4 1983009808
          %v664 = vunpack.c.0.s8 %v663
          %v665 = vperm.slane %v657, %v664
          %v666 = vrot.slane %v651, 4
          %v667 = vsel %vm654, %v666, %v645
          %v668 = vrot.slane %v645, 4
          %v669 = vsel %vm654, %v651, %v668
          %v671 = vunpack.c.l.s4 1983009808
          %v672 = vunpack.c.0.s8 %v671
          %v673 = vperm.slane %v667, %v672
          %v675 = vunpack.c.l.s4 1983009808
          %v676 = vunpack.c.0.s8 %v675
          %v677 = vperm.slane %v669, %v676
          %v678 = vrot.slane %v673, 4
          %v679 = vsel %vm654, %v678, %v661
          %v680 = vrot.slane %v661, 4
          %v681 = vsel %vm654, %v673, %v680
          %v683 = vunpack.c.l.s4 1934713408
          %v684 = vunpack.c.0.s8 %v683
          %v685 = vperm.slane %v679, %v684
          %v687 = vunpack.c.l.s4 1934713408
          %v688 = vunpack.c.0.s8 %v687
          %v689 = vperm.slane %v681, %v688
          %v690 = vrot.slane %v677, 4
          %v691 = vsel %vm654, %v690, %v665
          %v692 = vrot.slane %v665, 4
          %v693 = vsel %vm654, %v677, %v692
          %v695 = vunpack.c.l.s4 1934713408
          %v696 = vunpack.c.0.s8 %v695
          %v697 = vperm.slane %v691, %v696
          %v699 = vunpack.c.l.s4 1934713408
          %v700 = vunpack.c.0.s8 %v699
          %v701 = vperm.slane %v693, %v700
          %v702 = vrot.slane %v685, 4
          %v703 = vsel %vm654, 0.0, %v702
          %v704 = vrot.slane %v689, 4
          %v705 = vsel %vm654, 0.0, %v704
          %v706 = vrot.slane %v697, 4
          %v707 = vsel %vm654, 0.0, %v706
          %v708 = vrot.slane %v701, 4
          %v709 = vsel %vm654, 0.0, %v708
          %v710 = vsel %vm654, %v704, %v685
          %v712 = vunpack.c.l.s4 1983009808
          %v713 = vunpack.c.0.s8 %v712
          %v714 = vperm.slane %v710, %v713
          %v715 = vrot.slane %v705, 4
          %v716 = vsel %vm654, %v715, %v703
          %v718 = vunpack.c.l.s4 1983009808
          %v719 = vunpack.c.0.s8 %v718
          %v720 = vperm.slane %v716, %v719
          %v721 = vsel %vm654, %v708, %v697
          %v723 = vunpack.c.l.s4 1983009808
          %v724 = vunpack.c.0.s8 %v723
          %v725 = vperm.slane %v721, %v724
          %v726 = vrot.slane %v709, 4
          %v727 = vsel %vm654, %v726, %v707
          %v729 = vunpack.c.l.s4 1983009808
          %v730 = vunpack.c.0.s8 %v729
          %v731 = vperm.slane %v727, %v730
          %v732 = vrot.slane %v720, 4
          %v733 = vsel %vm654, %v732, %v714
          %v734 = vrot.slane %v714, 4
          %v735 = vsel %vm654, %v720, %v734
          %v737 = vunpack.c.l.s4 1934713408
          %v738 = vunpack.c.0.s8 %v737
          %v739 = vperm.slane %v733, %v738
          %v741 = vunpack.c.l.s4 1934713408
          %v742 = vunpack.c.0.s8 %v741
          %v743 = vperm.slane %v735, %v742
          %v744 = vrot.slane %v731, 4
          %v745 = vsel %vm654, %v744, %v725
          %v746 = vrot.slane %v725, 4
          %v747 = vsel %vm654, %v731, %v746
          %v749 = vunpack.c.l.s4 1934713408
          %v750 = vunpack.c.0.s8 %v749
          %v751 = vperm.slane %v745, %v750
          %v753 = vunpack.c.l.s4 1934713408
          %v754 = vunpack.c.0.s8 %v753
          %v755 = vperm.slane %v747, %v754
          %v756 = vrot.slane %v751, 4
          %v757 = vsel %vm654, %v756, %v739
          %v758 = vrot.slane %v739, 4
          %v759 = vsel %vm654, %v751, %v758
          %v760 = vrot.slane %v755, 4
          %v761 = vsel %vm654, %v760, %v743
          %v762 = vrot.slane %v743, 4
          %v763 = vsel %vm654, %v755, %v762
          %v764 = vpack.c.bf16 %v757, %v757
          %v765 = vpack.c.bf16 %v759, %v759
          %v766 = vpack.c.bf16 %v761, %v761
          %v767 = vpack.c.bf16 %v763, %v763
          %vm768 = vcmask 60416
          %769 = vst.msk [vmem:[#allocation2] sm:$0xf] %vm768, %v764
          %770 = vst.msk [vmem:[#allocation2 + $0x4] sm:$0xf] %vm768, %v765
          %771 = vst.msk [vmem:[#allocation2 + $0x8] sm:$0xf] %vm768, %v766
          %772 = vst.msk [vmem:[#allocation2 + $0xc] sm:$0xf] %vm768, %v767
          %v773 = vld [vmem:[%s4] sm:$0xf]
          %v774 = vld [vmem:[%s4 + $0x4] sm:$0xf]
          %v775 = vld [vmem:[%s4 + $0x8] sm:$0xf]
          %v776 = vld [vmem:[%s4 + $0xc] sm:$0xf]
          %v781 = vunpack.c.l.b16 %v773
          %v782 = vunpack.c.l.b16 %v774
          %v783 = vunpack.c.l.b16 %v775
          %v784 = vunpack.c.l.b16 %v776
          %v785 = vpack.c.b16 %v782, %v781
          %v786 = vpack.c.b16 %v784, %v783
          %789 = vmatpush.bf16.msra.mxu0 0
          %790 = vmatpush.bf16.msra.mxu0 0
          %791 = vmatpush.bf16.msra.mxu0 0
          %792 = vmatpush.bf16.msra.mxu0 0
          %793 = vmatpush.bf16.msra.mxu0 0
          %794 = vmatpush.bf16.msra.mxu0 0
          %795 = vmatpush.bf16.msra.mxu0 %v786
          %796 = vmatpush.bf16.msra.mxu0 %v785
          %797 = vmatmul.bf16.gmra.mxu0 %v628
          %v798 = vpop.f32.mrf.mxu0
          %v799 = vadd.f32 0.0, %v798
          %v800 = vpop.f32.mrf.mxu0
          %801 = vdwg.mxu0
          %803 = vrot.lane.b32.xlu0 %v799, 120
          %v804 = vpop.permute.xlu0 %803
          %806 = vrot.lane.b32.xlu0 %v799, 112
          %v807 = vpop.permute.xlu0 %806
          %809 = vrot.lane.b32.xlu0 %v799, 104
          %v810 = vpop.permute.xlu0 %809
          %v812 = vrot.slane %v807, 4
          %v813 = vsel %vm654, %v812, %v799
          %v814 = vrot.slane %v799, 4
          %v815 = vsel %vm654, %v807, %v814
          %v817 = vunpack.c.l.s4 1983009808
          %v818 = vunpack.c.0.s8 %v817
          %v819 = vperm.slane %v813, %v818
          %v821 = vunpack.c.l.s4 1983009808
          %v822 = vunpack.c.0.s8 %v821
          %v823 = vperm.slane %v815, %v822
          %v824 = vrot.slane %v810, 4
          %v825 = vsel %vm654, %v824, %v804
          %v826 = vrot.slane %v804, 4
          %v827 = vsel %vm654, %v810, %v826
          %v829 = vunpack.c.l.s4 1983009808
          %v830 = vunpack.c.0.s8 %v829
          %v831 = vperm.slane %v825, %v830
          %v833 = vunpack.c.l.s4 1983009808
          %v834 = vunpack.c.0.s8 %v833
          %v835 = vperm.slane %v827, %v834
          %v836 = vrot.slane %v831, 4
          %v837 = vsel %vm654, %v836, %v819
          %v838 = vrot.slane %v819, 4
          %v839 = vsel %vm654, %v831, %v838
          %v841 = vunpack.c.l.s4 1934713408
          %v842 = vunpack.c.0.s8 %v841
          %v843 = vperm.slane %v837, %v842
          %v845 = vunpack.c.l.s4 1934713408
          %v846 = vunpack.c.0.s8 %v845
          %v847 = vperm.slane %v839, %v846
          %v848 = vrot.slane %v835, 4
          %v849 = vsel %vm654, %v848, %v823
          %v850 = vrot.slane %v823, 4
          %v851 = vsel %vm654, %v835, %v850
          %v853 = vunpack.c.l.s4 1934713408
          %v854 = vunpack.c.0.s8 %v853
          %v855 = vperm.slane %v849, %v854
          %v857 = vunpack.c.l.s4 1934713408
          %v858 = vunpack.c.0.s8 %v857
          %v859 = vperm.slane %v851, %v858
          %v860 = vrot.slane %v843, 4
          %v861 = vsel %vm654, 0.0, %v860
          %v862 = vrot.slane %v847, 4
          %v863 = vsel %vm654, 0.0, %v862
          %v864 = vrot.slane %v855, 4
          %v865 = vsel %vm654, 0.0, %v864
          %v866 = vrot.slane %v859, 4
          %v867 = vsel %vm654, 0.0, %v866
          %v868 = vsel %vm654, %v862, %v843
          %v870 = vunpack.c.l.s4 1983009808
          %v871 = vunpack.c.0.s8 %v870
          %v872 = vperm.slane %v868, %v871
          %v873 = vrot.slane %v863, 4
          %v874 = vsel %vm654, %v873, %v861
          %v876 = vunpack.c.l.s4 1983009808
          %v877 = vunpack.c.0.s8 %v876
          %v878 = vperm.slane %v874, %v877
          %v879 = vsel %vm654, %v866, %v855
          %v881 = vunpack.c.l.s4 1983009808
          %v882 = vunpack.c.0.s8 %v881
          %v883 = vperm.slane %v879, %v882
          %v884 = vrot.slane %v867, 4
          %v885 = vsel %vm654, %v884, %v865
          %v887 = vunpack.c.l.s4 1983009808
          %v888 = vunpack.c.0.s8 %v887
          %v889 = vperm.slane %v885, %v888
          %v890 = vrot.slane %v878, 4
          %v891 = vsel %vm654, %v890, %v872
          %v892 = vrot.slane %v872, 4
          %v893 = vsel %vm654, %v878, %v892
          %v895 = vunpack.c.l.s4 1934713408
          %v896 = vunpack.c.0.s8 %v895
          %v897 = vperm.slane %v891, %v896
          %v899 = vunpack.c.l.s4 1934713408
          %v900 = vunpack.c.0.s8 %v899
          %v901 = vperm.slane %v893, %v900
          %v902 = vrot.slane %v889, 4
          %v903 = vsel %vm654, %v902, %v883
          %v904 = vrot.slane %v883, 4
          %v905 = vsel %vm654, %v889, %v904
          %v907 = vunpack.c.l.s4 1934713408
          %v908 = vunpack.c.0.s8 %v907
          %v909 = vperm.slane %v903, %v908
          %v911 = vunpack.c.l.s4 1934713408
          %v912 = vunpack.c.0.s8 %v911
          %v913 = vperm.slane %v905, %v912
          %v914 = vrot.slane %v909, 4
          %v915 = vsel %vm654, %v914, %v897
          %v916 = vrot.slane %v897, 4
          %v917 = vsel %vm654, %v909, %v916
          %v918 = vrot.slane %v913, 4
          %v919 = vsel %vm654, %v918, %v901
          %v920 = vrot.slane %v901, 4
          %v921 = vsel %vm654, %v913, %v920
          %v922 = vpack.c.bf16 %v915, %v915
          %v923 = vpack.c.bf16 %v917, %v917
          %v924 = vpack.c.bf16 %v919, %v919
          %v925 = vpack.c.bf16 %v921, %v921
          %926 = vst.msk [vmem:[#allocation3] sm:$0xf] %vm768, %v922
          %927 = vst.msk [vmem:[#allocation3 + $0x4] sm:$0xf] %vm768, %v923
          %928 = vst.msk [vmem:[#allocation3 + $0x8] sm:$0xf] %vm768, %v924
          %929 = vst.msk [vmem:[#allocation3 + $0xc] sm:$0xf] %vm768, %v925
        $region76: #{tpu_custom_call.1} parent=63 // pred_fallthru
          _
        %s930 = smul.u32 %s42, 8
        %s931 = scalar_lea.vmem %s544, %s930
        %v932 = vld [vmem:[%s931] sm:$0xff]
        %vm933 = vcmask 261120
        %v934 = vsel %vm933, %v932, 0.0
        %935 = vadd.xlane.f32.xlu0 %v934
        %v936 = vpop.xlane.xlu0 %935
        %v937 = vrcp.pop 32.0
        %v938 = vmul.f32 32.0, %v937
        %v939 = vsub.f32 1.0, %v938
        %v940 = vmul.f32 %v937, %v939
        %v941 = vadd.f32 %v937, %v940
        %vm942 = vweird.f32 %v937
        %v943 = vsel %vm942, %v937, %v941
        %v944 = vmul.f32 %v936, %v943
        %v945 = vsub.f32 %v932, %v944
        %v946 = vmul.f32 %v945, %v945
        %v947 = vsel %vm933, %v946, 0.0
        %948 = vadd.xlane.f32.xlu0 %v947
        %v949 = vpop.xlane.xlu0 %948
        %v950 = vmul.f32 %v949, %v943
        %v951 = vadd.f32 %v950, 1e-05
        %v952 = vrsqrt.pop %v951
        %v953 = vmul.f32 %v952, %v951
        %v954 = vmul.f32 %v953, %v952
        %v955 = vmul.f32 0.5, %v954
        %v956 = vsub.f32 1.5, %v955
        %v957 = vmul.f32 %v952, %v956
        %vm958 = vweird.f32 %v951
        %vm959 = vweird.f32 %v952
        %vm960 = vmor %vm958, %vm959
        %v961 = vsel %vm960, %v952, %v957
        %v962 = vmul.f32 %v945, %v961
        %v963 = vadd.f32 %v962, 0.0
        %v964 = vld [vmem:[%s9] sm:$0x1]
        %v965 = vld [vmem:[%s10] sm:$0x1]
        %v966 = vsel %vm933, %v963, 0.0
        %967 = vadd.xlane.f32.xlu0 %v966
        %v968 = vpop.xlane.xlu0 %967
        %v969 = vmul.f32 %v968, %v943
        %v970 = vsub.f32 %v963, %v969
        %v971 = vmul.f32 %v970, %v970
        %v972 = vsel %vm933, %v971, 0.0
        %973 = vadd.xlane.f32.xlu0 %v972
        %v974 = vpop.xlane.xlu0 %973
        %v975 = vmul.f32 %v974, %v943
        %v976 = vadd.f32 %v975, 1e-05
        %v977 = vrsqrt.pop %v976
        %v978 = vmul.f32 %v977, %v976
        %v979 = vmul.f32 %v978, %v977
        %v980 = vmul.f32 0.5, %v979
        %v981 = vsub.f32 1.5, %v980
        %v982 = vmul.f32 %v977, %v981
        %vm983 = vweird.f32 %v976
        %vm984 = vweird.f32 %v977
        %vm985 = vmor %vm983, %vm984
        %v986 = vsel %vm985, %v977, %v982
        %v987 = vmul.f32 %v970, %v986
        %v988 = vperm.slane %v964, 0
        %v989 = vmul.f32 %v987, %v988
        %v990 = vperm.slane %v965, 0
        %v991 = vadd.f32 %v989, %v990
        %v992 = vpack.c.bf16 %v991, %v991
        %v993 = vld [vmem:[%s2] sm:$0xf]
        %v994 = vld [vmem:[%s2 + $0x4] sm:$0xf]
        %v995 = vld [vmem:[%s2 + $0x8] sm:$0xf]
        %v996 = vld [vmem:[%s2 + $0xc] sm:$0xf]
        %v1001 = vunpack.c.l.b16 %v993
        %v1002 = vunpack.c.l.b16 %v994
        %v1003 = vunpack.c.l.b16 %v995
        %v1004 = vunpack.c.l.b16 %v996
        %v1005 = vpack.c.b16 %v1002, %v1001
        %v1006 = vpack.c.b16 %v1004, %v1003
        %v1010 = vsel %vm933, %v992, 0
        %1012 = vmatpush.bf16.msra.mxu0 0
        %1013 = vmatpush.bf16.msra.mxu0 0
        %1014 = vmatpush.bf16.msra.mxu0 0
        %1015 = vmatpush.bf16.msra.mxu0 0
        %1016 = vmatpush.bf16.msra.mxu0 0
        %1017 = vmatpush.bf16.msra.mxu0 0
        %1018 = vmatpush.bf16.msra.mxu0 %v1006
        %1019 = vmatpush.bf16.msra.mxu0 %v1005
        %1020 = vmatmul.bf16.gmra.mxu0 %v1010
        %v1021 = vpop.f32.mrf.mxu0
        %v1022 = vadd.f32 0.0, %v1021
        %v1023 = vpop.f32.mrf.mxu0
        %1024 = vdwg.mxu0
        %1026 = vrot.lane.b32.xlu0 %v1022, 120
        %v1027 = vpop.permute.xlu0 %1026
        %1029 = vrot.lane.b32.xlu0 %v1022, 112
        %v1030 = vpop.permute.xlu0 %1029
        %1032 = vrot.lane.b32.xlu0 %v1022, 104
        %v1033 = vpop.permute.xlu0 %1032
        %v1035 = vrot.slane %v1030, 4
        %vm1036 = vcmask 1047556
        %v1037 = vsel %vm1036, %v1035, %v1022
        %v1038 = vrot.slane %v1022, 4
        %v1039 = vsel %vm1036, %v1030, %v1038
        %v1041 = vunpack.c.l.s4 1983009808
        %v1042 = vunpack.c.0.s8 %v1041
        %v1043 = vperm.slane %v1037, %v1042
        %v1045 = vunpack.c.l.s4 1983009808
        %v1046 = vunpack.c.0.s8 %v1045
        %v1047 = vperm.slane %v1039, %v1046
        %v1048 = vrot.slane %v1033, 4
        %v1049 = vsel %vm1036, %v1048, %v1027
        %v1050 = vrot.slane %v1027, 4
        %v1051 = vsel %vm1036, %v1033, %v1050
        %v1053 = vunpack.c.l.s4 1983009808
        %v1054 = vunpack.c.0.s8 %v1053
        %v1055 = vperm.slane %v1049, %v1054
        %v1057 = vunpack.c.l.s4 1983009808
        %v1058 = vunpack.c.0.s8 %v1057
        %v1059 = vperm.slane %v1051, %v1058
        %v1060 = vrot.slane %v1055, 4
        %v1061 = vsel %vm1036, %v1060, %v1043
        %v1062 = vrot.slane %v1043, 4
        %v1063 = vsel %vm1036, %v1055, %v1062
        %v1065 = vunpack.c.l.s4 1934713408
        %v1066 = vunpack.c.0.s8 %v1065
        %v1067 = vperm.slane %v1061, %v1066
        %v1069 = vunpack.c.l.s4 1934713408
        %v1070 = vunpack.c.0.s8 %v1069
        %v1071 = vperm.slane %v1063, %v1070
        %v1072 = vrot.slane %v1059, 4
        %v1073 = vsel %vm1036, %v1072, %v1047
        %v1074 = vrot.slane %v1047, 4
        %v1075 = vsel %vm1036, %v1059, %v1074
        %v1077 = vunpack.c.l.s4 1934713408
        %v1078 = vunpack.c.0.s8 %v1077
        %v1079 = vperm.slane %v1073, %v1078
        %v1081 = vunpack.c.l.s4 1934713408
        %v1082 = vunpack.c.0.s8 %v1081
        %v1083 = vperm.slane %v1075, %v1082
        %v1084 = vrot.slane %v1067, 4
        %v1085 = vsel %vm1036, 0.0, %v1084
        %v1086 = vrot.slane %v1071, 4
        %v1087 = vsel %vm1036, 0.0, %v1086
        %v1088 = vrot.slane %v1079, 4
        %v1089 = vsel %vm1036, 0.0, %v1088
        %v1090 = vrot.slane %v1083, 4
        %v1091 = vsel %vm1036, 0.0, %v1090
        %v1092 = vsel %vm1036, %v1086, %v1067
        %v1094 = vunpack.c.l.s4 1983009808
        %v1095 = vunpack.c.0.s8 %v1094
        %v1096 = vperm.slane %v1092, %v1095
        %v1097 = vrot.slane %v1087, 4
        %v1098 = vsel %vm1036, %v1097, %v1085
        %v1100 = vunpack.c.l.s4 1983009808
        %v1101 = vunpack.c.0.s8 %v1100
        %v1102 = vperm.slane %v1098, %v1101
        %v1103 = vsel %vm1036, %v1090, %v1079
        %v1105 = vunpack.c.l.s4 1983009808
        %v1106 = vunpack.c.0.s8 %v1105
        %v1107 = vperm.slane %v1103, %v1106
        %v1108 = vrot.slane %v1091, 4
        %v1109 = vsel %vm1036, %v1108, %v1089
        %v1111 = vunpack.c.l.s4 1983009808
        %v1112 = vunpack.c.0.s8 %v1111
        %v1113 = vperm.slane %v1109, %v1112
        %v1114 = vrot.slane %v1102, 4
        %v1115 = vsel %vm1036, %v1114, %v1096
        %v1116 = vrot.slane %v1096, 4
        %v1117 = vsel %vm1036, %v1102, %v1116
        %v1119 = vunpack.c.l.s4 1934713408
        %v1120 = vunpack.c.0.s8 %v1119
        %v1121 = vperm.slane %v1115, %v1120
        %v1123 = vunpack.c.l.s4 1934713408
        %v1124 = vunpack.c.0.s8 %v1123
        %v1125 = vperm.slane %v1117, %v1124
        %v1126 = vrot.slane %v1113, 4
        %v1127 = vsel %vm1036, %v1126, %v1107
        %v1128 = vrot.slane %v1107, 4
        %v1129 = vsel %vm1036, %v1113, %v1128
        %v1131 = vunpack.c.l.s4 1934713408
        %v1132 = vunpack.c.0.s8 %v1131
        %v1133 = vperm.slane %v1127, %v1132
        %v1135 = vunpack.c.l.s4 1934713408
        %v1136 = vunpack.c.0.s8 %v1135
        %v1137 = vperm.slane %v1129, %v1136
        %v1138 = vrot.slane %v1133, 4
        %v1139 = vsel %vm1036, %v1138, %v1121
        %v1140 = vrot.slane %v1121, 4
        %v1141 = vsel %vm1036, %v1133, %v1140
        %v1142 = vrot.slane %v1137, 4
        %v1143 = vsel %vm1036, %v1142, %v1125
        %v1144 = vrot.slane %v1125, 4
        %v1145 = vsel %vm1036, %v1137, %v1144
        %v1146 = vpack.c.bf16 %v1139, %v1139
        %v1147 = vpack.c.bf16 %v1141, %v1141
        %v1148 = vpack.c.bf16 %v1143, %v1143
        %v1149 = vpack.c.bf16 %v1145, %v1145
        %v1150 = vld [vmem:[%s1] sm:$0x1]
        %v1151 = vld [vmem:[%s1 + $0x1] sm:$0x1]
        %v1152 = vld [vmem:[%s1 + $0x2] sm:$0x1]
        %v1153 = vld [vmem:[%s1 + $0x3] sm:$0x1]
        %v1154 = vlaneseq
        %v1155 = vshrl.u32 %v1154, 7
        %v1156 = vstv %s930
        %v1157 = vadd.s32 %v1156, %v1155
        %v1158 = vlaneseq
        %v1159 = vand.u32 %v1158, 127
        %v1160 = vsub.s32 %v1159, %v1157
        %v1161 = vld [vmem:[#allocation2] sm:$0xf]
        %v1162 = vld [vmem:[#allocation2 + $0x4] sm:$0xf]
        %v1163 = vld [vmem:[#allocation2 + $0x8] sm:$0xf]
        %v1164 = vld [vmem:[#allocation2 + $0xc] sm:$0xf]
        %v1165 = vld [vmem:[#allocation3] sm:$0xf]
        %v1166 = vld [vmem:[#allocation3 + $0x4] sm:$0xf]
        %v1167 = vld [vmem:[#allocation3 + $0x8] sm:$0xf]
        %v1168 = vld [vmem:[#allocation3 + $0xc] sm:$0xf]
        %vm1169 = vcmask 64512
        %v1171 = vsel %vm1169, %v1146, 0
        %v1174 = vsel %vm1169, %v1161, 0
        %1176 = vmatpush.bf16.xpose.msra.mxu0 0
        %1177 = vmatpush.bf16.xpose.msra.mxu0 0
        %1178 = vmatpush.bf16.xpose.msra.mxu0 0
        %1179 = vmatpush.bf16.xpose.msra.mxu0 0
        %1180 = vmatpush.bf16.xpose.msra.mxu0 0
        %1181 = vmatpush.bf16.xpose.msra.mxu0 0
        %1182 = vmatpush.bf16.xpose.msra.mxu0 0
        %1183 = vmatpush.bf16.xpose.msra.mxu0 %v1174
        %1184 = vmatmul.bf16.gmra.mxu0 %v1171
        %v1185 = vpop.f32.mrf.mxu0
        %v1186 = vadd.f32 0.0, %v1185
        %v1187 = vpop.f32.mrf.mxu0
        %1188 = vdwg.mxu0
        %v1190 = vsel %vm1169, %v1147, 0
        %v1193 = vsel %vm1169, %v1162, 0
        %1195 = vmatpush.bf16.xpose.msra.mxu0 0
        %1196 = vmatpush.bf16.xpose.msra.mxu0 0
        %1197 = vmatpush.bf16.xpose.msra.mxu0 0
        %1198 = vmatpush.bf16.xpose.msra.mxu0 0
        %1199 = vmatpush.bf16.xpose.msra.mxu0 0
        %1200 = vmatpush.bf16.xpose.msra.mxu0 0
        %1201 = vmatpush.bf16.xpose.msra.mxu0 0
        %1202 = vmatpush.bf16.xpose.msra.mxu0 %v1193
        %1203 = vmatmul.bf16.gmra.mxu0 %v1190
        %v1204 = vpop.f32.mrf.mxu0
        %v1205 = vadd.f32 0.0, %v1204
        %v1206 = vpop.f32.mrf.mxu0
        %1207 = vdwg.mxu0
        %v1209 = vsel %vm1169, %v1148, 0
        %v1212 = vsel %vm1169, %v1163, 0
        %1214 = vmatpush.bf16.xpose.msra.mxu0 0
        %1215 = vmatpush.bf16.xpose.msra.mxu0 0
        %1216 = vmatpush.bf16.xpose.msra.mxu0 0
        %1217 = vmatpush.bf16.xpose.msra.mxu0 0
        %1218 = vmatpush.bf16.xpose.msra.mxu0 0
        %1219 = vmatpush.bf16.xpose.msra.mxu0 0
        %1220 = vmatpush.bf16.xpose.msra.mxu0 0
        %1221 = vmatpush.bf16.xpose.msra.mxu0 %v1212
        %1222 = vmatmul.bf16.gmra.mxu0 %v1209
        %v1223 = vpop.f32.mrf.mxu0
        %v1224 = vadd.f32 0.0, %v1223
        %v1225 = vpop.f32.mrf.mxu0
        %1226 = vdwg.mxu0
        %v1228 = vsel %vm1169, %v1149, 0
        %v1231 = vsel %vm1169, %v1164, 0
        %1233 = vmatpush.bf16.xpose.msra.mxu0 0
        %1234 = vmatpush.bf16.xpose.msra.mxu0 0
        %1235 = vmatpush.bf16.xpose.msra.mxu0 0
        %1236 = vmatpush.bf16.xpose.msra.mxu0 0
        %1237 = vmatpush.bf16.xpose.msra.mxu0 0
        %1238 = vmatpush.bf16.xpose.msra.mxu0 0
        %1239 = vmatpush.bf16.xpose.msra.mxu0 0
        %1240 = vmatpush.bf16.xpose.msra.mxu0 %v1231
        %1241 = vmatmul.bf16.gmra.mxu0 %v1228
        %v1242 = vpop.f32.mrf.mxu0
        %v1243 = vadd.f32 0.0, %v1242
        %v1244 = vpop.f32.mrf.mxu0
        %1245 = vdwg.mxu0
        %v1246 = vmul.f32 %v1186, 0.35355338
        %v1247 = vmul.f32 %v1205, 0.35355338
        %v1248 = vmul.f32 %v1224, 0.35355338
        %v1249 = vmul.f32 %v1243, 0.35355338
        %v1250 = vstv 0
        %v1251 = vadd.s32 %v1160, %v1250
        %vm1252 = vcmp.gt.s32.totalorder %v1251, 0
        %v1253 = vsel %vm1252, -1e+09, 0.0
        %v1254 = vcvt.s32.f32 %v1251
        %v1259 = vperm.slane %v1150, 0
        %v1260 = vperm.slane %v1151, 0
        %v1261 = vperm.slane %v1152, 0
        %v1262 = vperm.slane %v1153, 0
        %1263 = vset.pattern.permute.xlu0 0
        %1264 = vperm.xlu0 %1263, %v1259
        %v1265 = vpop.permute.xlu0 %1264
        %1267 = vset.pattern.permute.xlu0 0
        %1268 = vperm.xlu0 %1267, %v1260
        %v1269 = vpop.permute.xlu0 %1268
        %1271 = vset.pattern.permute.xlu0 0
        %1272 = vperm.xlu0 %1271, %v1261
        %v1273 = vpop.permute.xlu0 %1272
        %1275 = vset.pattern.permute.xlu0 0
        %1276 = vperm.xlu0 %1275, %v1262
        %v1277 = vpop.permute.xlu0 %1276
        %v1279 = vmul.f32 %v1265, %v1254
        %v1280 = vmul.f32 %v1269, %v1254
        %v1281 = vmul.f32 %v1273, %v1254
        %v1282 = vmul.f32 %v1277, %v1254
        %v1283 = vadd.f32 %v1253, %v1279
        %v1284 = vadd.f32 %v1253, %v1280
        %v1285 = vadd.f32 %v1253, %v1281
        %v1286 = vadd.f32 %v1253, %v1282
        %v1287 = vadd.f32 %v1246, %v1283
        %v1288 = vadd.f32 %v1247, %v1284
        %v1289 = vadd.f32 %v1248, %v1285
        %v1290 = vadd.f32 %v1249, %v1286
        %v1291 = vsel %vm1169, %v1287, -inf
        %1292 = vmax.xlane.f32.xlu0 %v1291
        %v1293 = vpop.xlane.xlu0 %1292
        %v1294 = vsel %vm1169, %v1288, -inf
        %1295 = vmax.xlane.f32.xlu0 %v1294
        %v1296 = vpop.xlane.xlu0 %1295
        %v1297 = vsel %vm1169, %v1289, -inf
        %1298 = vmax.xlane.f32.xlu0 %v1297
        %v1299 = vpop.xlane.xlu0 %1298
        %v1300 = vsel %vm1169, %v1290, -inf
        %1301 = vmax.xlane.f32.xlu0 %v1300
        %v1302 = vpop.xlane.xlu0 %1301
        %v1303 = vmax.f32 %v1293, -1e+30
        %v1304 = vmax.f32 %v1296, -1e+30
        %v1305 = vmax.f32 %v1299, -1e+30
        %v1306 = vmax.f32 %v1302, -1e+30
        %v1307 = vsub.f32 -1e+30, %v1303
        %v1308 = vsub.f32 -1e+30, %v1304
        %v1309 = vsub.f32 -1e+30, %v1305
        %v1310 = vsub.f32 -1e+30, %v1306
        %v1311 = vmul.f32 %v1307, 1.442695
        %v1312 = vpow.pop %v1311
        %v1313 = vmul.f32 %v1308, 1.442695
        %v1314 = vpow.pop %v1313
        %v1315 = vmul.f32 %v1309, 1.442695
        %v1316 = vpow.pop %v1315
        %v1317 = vmul.f32 %v1310, 1.442695
        %v1318 = vpow.pop %v1317
        %v1319 = vsub.f32 %v1287, %v1303
        %v1320 = vsub.f32 %v1288, %v1304
        %v1321 = vsub.f32 %v1289, %v1305
        %v1322 = vsub.f32 %v1290, %v1306
        %v1323 = vmul.f32 %v1319, 1.442695
        %v1324 = vpow.pop %v1323
        %v1325 = vmul.f32 %v1320, 1.442695
        %v1326 = vpow.pop %v1325
        %v1327 = vmul.f32 %v1321, 1.442695
        %v1328 = vpow.pop %v1327
        %v1329 = vmul.f32 %v1322, 1.442695
        %v1330 = vpow.pop %v1329
        %v1331 = vmul.f32 %v1312, 0.0
        %v1332 = vmul.f32 %v1314, 0.0
        %v1333 = vmul.f32 %v1316, 0.0
        %v1334 = vmul.f32 %v1318, 0.0
        %v1335 = vsel %vm1169, %v1324, 0.0
        %1336 = vadd.xlane.f32.xlu0 %v1335
        %v1337 = vpop.xlane.xlu0 %1336
        %v1338 = vsel %vm1169, %v1326, 0.0
        %1339 = vadd.xlane.f32.xlu0 %v1338
        %v1340 = vpop.xlane.xlu0 %1339
        %v1341 = vsel %vm1169, %v1328, 0.0
        %1342 = vadd.xlane.f32.xlu0 %v1341
        %v1343 = vpop.xlane.xlu0 %1342
        %v1344 = vsel %vm1169, %v1330, 0.0
        %1345 = vadd.xlane.f32.xlu0 %v1344
        %v1346 = vpop.xlane.xlu0 %1345
        %v1347 = vadd.f32 %v1331, %v1337
        %v1348 = vadd.f32 %v1332, %v1340
        %v1349 = vadd.f32 %v1333, %v1343
        %v1350 = vadd.f32 %v1334, %v1346
        %v1351 = vpack.c.bf16 %v1324, %v1324
        %v1352 = vpack.c.bf16 %v1326, %v1326
        %v1353 = vpack.c.bf16 %v1328, %v1328
        %v1354 = vpack.c.bf16 %v1330, %v1330
        %v1356 = vsel %vm1169, %v1351, 0
        %vm1358 = vcmask 1043456
        %v1360 = vsel %vm1358, %v1165, 0
        %1362 = vmatpush.bf16.msra.mxu0 0
        %1363 = vmatpush.bf16.msra.mxu0 0
        %1364 = vmatpush.bf16.msra.mxu0 0
        %1365 = vmatpush.bf16.msra.mxu0 0
        %1366 = vmatpush.bf16.msra.mxu0 0
        %1367 = vmatpush.bf16.msra.mxu0 0
        %1368 = vmatpush.bf16.msra.mxu0 0
        %1369 = vmatpush.bf16.msra.mxu0 %v1360
        %1370 = vmatmul.bf16.gmra.mxu0 %v1356
        %v1371 = vpop.f32.mrf.mxu0
        %v1372 = vadd.f32 0.0, %v1371
        %v1373 = vpop.f32.mrf.mxu0
        %1374 = vdwg.mxu0
        %v1376 = vsel %vm1169, %v1352, 0
        %v1379 = vsel %vm1358, %v1166, 0
        %1381 = vmatpush.bf16.msra.mxu0 0
        %1382 = vmatpush.bf16.msra.mxu0 0
        %1383 = vmatpush.bf16.msra.mxu0 0
        %1384 = vmatpush.bf16.msra.mxu0 0
        %1385 = vmatpush.bf16.msra.mxu0 0
        %1386 = vmatpush.bf16.msra.mxu0 0
        %1387 = vmatpush.bf16.msra.mxu0 0
        %1388 = vmatpush.bf16.msra.mxu0 %v1379
        %1389 = vmatmul.bf16.gmra.mxu0 %v1376
        %v1390 = vpop.f32.mrf.mxu0
        %v1391 = vadd.f32 0.0, %v1390
        %v1392 = vpop.f32.mrf.mxu0
        %1393 = vdwg.mxu0
        %v1395 = vsel %vm1169, %v1353, 0
        %v1398 = vsel %vm1358, %v1167, 0
        %1400 = vmatpush.bf16.msra.mxu0 0
        %1401 = vmatpush.bf16.msra.mxu0 0
        %1402 = vmatpush.bf16.msra.mxu0 0
        %1403 = vmatpush.bf16.msra.mxu0 0
        %1404 = vmatpush.bf16.msra.mxu0 0
        %1405 = vmatpush.bf16.msra.mxu0 0
        %1406 = vmatpush.bf16.msra.mxu0 0
        %1407 = vmatpush.bf16.msra.mxu0 %v1398
        %1408 = vmatmul.bf16.gmra.mxu0 %v1395
        %v1409 = vpop.f32.mrf.mxu0
        %v1410 = vadd.f32 0.0, %v1409
        %v1411 = vpop.f32.mrf.mxu0
        %1412 = vdwg.mxu0
        %v1414 = vsel %vm1169, %v1354, 0
        %v1417 = vsel %vm1358, %v1168, 0
        %1419 = vmatpush.bf16.msra.mxu0 0
        %1420 = vmatpush.bf16.msra.mxu0 0
        %1421 = vmatpush.bf16.msra.mxu0 0
        %1422 = vmatpush.bf16.msra.mxu0 0
        %1423 = vmatpush.bf16.msra.mxu0 0
        %1424 = vmatpush.bf16.msra.mxu0 0
        %1425 = vmatpush.bf16.msra.mxu0 0
        %1426 = vmatpush.bf16.msra.mxu0 %v1417
        %1427 = vmatmul.bf16.gmra.mxu0 %v1414
        %v1428 = vpop.f32.mrf.mxu0
        %v1429 = vadd.f32 0.0, %v1428
        %v1430 = vpop.f32.mrf.mxu0
        %1431 = vdwg.mxu0
        %v1432 = vadd.f32 %v1331, %v1372
        %v1433 = vadd.f32 %v1332, %v1391
        %v1434 = vadd.f32 %v1333, %v1410
        %v1435 = vadd.f32 %v1334, %v1429
        %v1436 = vrcp.pop %v1347
        %v1437 = vrcp.pop %v1348
        %v1438 = vrcp.pop %v1349
        %v1439 = vrcp.pop %v1350
        %v1440 = vmul.f32 %v1432, %v1436
        %v1441 = vmul.f32 %v1433, %v1437
        %v1442 = vmul.f32 %v1434, %v1438
        %v1443 = vmul.f32 %v1435, %v1439
        %v1444 = vrot.slane %v1442, 4
        %v1445 = vsel %vm1036, %v1444, %v1440
        %v1446 = vrot.slane %v1440, 4
        %v1447 = vsel %vm1036, %v1442, %v1446
        %v1449 = vunpack.c.l.s4 1983009808
        %v1450 = vunpack.c.0.s8 %v1449
        %v1451 = vperm.slane %v1445, %v1450
        %v1453 = vunpack.c.l.s4 1983009808
        %v1454 = vunpack.c.0.s8 %v1453
        %v1455 = vperm.slane %v1447, %v1454
        %v1456 = vrot.slane %v1443, 4
        %v1457 = vsel %vm1036, %v1456, %v1441
        %v1458 = vrot.slane %v1441, 4
        %v1459 = vsel %vm1036, %v1443, %v1458
        %v1461 = vunpack.c.l.s4 1983009808
        %v1462 = vunpack.c.0.s8 %v1461
        %v1463 = vperm.slane %v1457, %v1462
        %v1465 = vunpack.c.l.s4 1983009808
        %v1466 = vunpack.c.0.s8 %v1465
        %v1467 = vperm.slane %v1459, %v1466
        %v1468 = vrot.slane %v1463, 4
        %v1469 = vsel %vm1036, %v1468, %v1451
        %v1470 = vrot.slane %v1451, 4
        %v1471 = vsel %vm1036, %v1463, %v1470
        %v1473 = vunpack.c.l.s4 1934713408
        %v1474 = vunpack.c.0.s8 %v1473
        %v1475 = vperm.slane %v1469, %v1474
        %v1477 = vunpack.c.l.s4 1934713408
        %v1478 = vunpack.c.0.s8 %v1477
        %v1479 = vperm.slane %v1471, %v1478
        %v1480 = vrot.slane %v1467, 4
        %v1481 = vsel %vm1036, %v1480, %v1455
        %v1482 = vrot.slane %v1455, 4
        %v1483 = vsel %vm1036, %v1467, %v1482
        %v1485 = vunpack.c.l.s4 1934713408
        %v1486 = vunpack.c.0.s8 %v1485
        %v1487 = vperm.slane %v1481, %v1486
        %v1489 = vunpack.c.l.s4 1934713408
        %v1490 = vunpack.c.0.s8 %v1489
        %v1491 = vperm.slane %v1483, %v1490
        %v1492 = vrot.slane %v1475, 4
        %v1493 = vsel %vm1036, 0.0, %v1492
        %v1494 = vrot.slane %v1479, 4
        %v1495 = vsel %vm1036, 0.0, %v1494
        %v1496 = vrot.slane %v1487, 4
        %v1497 = vsel %vm1036, 0.0, %v1496
        %v1498 = vrot.slane %v1491, 4
        %v1499 = vsel %vm1036, 0.0, %v1498
        %v1500 = vsel %vm1036, %v1494, %v1475
        %v1502 = vunpack.c.l.s4 1983009808
        %v1503 = vunpack.c.0.s8 %v1502
        %v1504 = vperm.slane %v1500, %v1503
        %v1505 = vrot.slane %v1495, 4
        %v1506 = vsel %vm1036, %v1505, %v1493
        %v1508 = vunpack.c.l.s4 1983009808
        %v1509 = vunpack.c.0.s8 %v1508
        %v1510 = vperm.slane %v1506, %v1509
        %v1511 = vsel %vm1036, %v1498, %v1487
        %v1513 = vunpack.c.l.s4 1983009808
        %v1514 = vunpack.c.0.s8 %v1513
        %v1515 = vperm.slane %v1511, %v1514
        %v1516 = vrot.slane %v1499, 4
        %v1517 = vsel %vm1036, %v1516, %v1497
        %v1519 = vunpack.c.l.s4 1983009808
        %v1520 = vunpack.c.0.s8 %v1519
        %v1521 = vperm.slane %v1517, %v1520
        %v1522 = vrot.slane %v1510, 4
        %v1523 = vsel %vm1036, %v1522, %v1504
        %v1524 = vrot.slane %v1504, 4
        %v1525 = vsel %vm1036, %v1510, %v1524
        %v1527 = vunpack.c.l.s4 1934713408
        %v1528 = vunpack.c.0.s8 %v1527
        %v1529 = vperm.slane %v1523, %v1528
        %v1531 = vunpack.c.l.s4 1934713408
        %v1532 = vunpack.c.0.s8 %v1531
        %v1533 = vperm.slane %v1525, %v1532
        %v1534 = vrot.slane %v1521, 4
        %v1535 = vsel %vm1036, %v1534, %v1515
        %v1536 = vrot.slane %v1515, 4
        %v1537 = vsel %vm1036, %v1521, %v1536
        %v1539 = vunpack.c.l.s4 1934713408
        %v1540 = vunpack.c.0.s8 %v1539
        %v1541 = vperm.slane %v1535, %v1540
        %v1543 = vunpack.c.l.s4 1934713408
        %v1544 = vunpack.c.0.s8 %v1543
        %v1545 = vperm.slane %v1537, %v1544
        %v1546 = vrot.slane %v1541, 4
        %v1547 = vsel %vm1036, %v1546, %v1529
        %v1548 = vrot.slane %v1529, 4
        %v1549 = vsel %vm1036, %v1541, %v1548
        %v1550 = vrot.slane %v1545, 4
        %v1551 = vsel %vm1036, %v1550, %v1533
        %v1552 = vrot.slane %v1533, 4
        %v1553 = vsel %vm1036, %v1545, %v1552
        %1555 = vrot.lane.b32.xlu0 %v1549, 8
        %v1556 = vpop.permute.xlu0 %1555
        %1559 = vrot.lane.b32.xlu0 %v1551, 16
        %v1560 = vpop.permute.xlu0 %1559
        %1563 = vrot.lane.b32.xlu0 %v1553, 24
        %v1564 = vpop.permute.xlu0 %1563
        %v1566 = vsel %vm1169, %v1547, %v1556
        %vm1567 = vcmask 130048
        %v1568 = vsel %vm1567, %v1566, %v1560
        %vm1569 = vcmask 195584
        %v1570 = vsel %vm1569, %v1568, %v1564
        %v1571 = vpack.c.bf16 %v1570, %v1570
        %v1572 = vld [vmem:[%s5] sm:$0xf]
        %v1573 = vld [vmem:[%s5 + $0x4] sm:$0xf]
        %v1574 = vld [vmem:[%s5 + $0x8] sm:$0xf]
        %v1575 = vld [vmem:[%s5 + $0xc] sm:$0xf]
        %v1580 = vunpack.c.l.b16 %v1572
        %v1581 = vunpack.c.l.b16 %v1573
        %v1582 = vunpack.c.l.b16 %v1574
        %v1583 = vunpack.c.l.b16 %v1575
        %v1584 = vpack.c.b16 %v1581, %v1580
        %v1585 = vpack.c.b16 %v1583, %v1582
        %v1589 = vsel %vm933, %v1571, 0
        %1591 = vmatpush.bf16.msra.mxu0 0
        %1592 = vmatpush.bf16.msra.mxu0 0
        %1593 = vmatpush.bf16.msra.mxu0 0
        %1594 = vmatpush.bf16.msra.mxu0 0
        %1595 = vmatpush.bf16.msra.mxu0 0
        %1596 = vmatpush.bf16.msra.mxu0 0
        %1597 = vmatpush.bf16.msra.mxu0 %v1585
        %1598 = vmatpush.bf16.msra.mxu0 %v1584
        %1599 = vmatmul.bf16.gmra.mxu0 %v1589
        %v1600 = vpop.f32.mrf.mxu0
        %v1601 = vadd.f32 0.0, %v1600
        %v1602 = vpop.f32.mrf.mxu0
        %1603 = vdwg.mxu0
        %v1604 = vld [vmem:[%s9 + $0x1] sm:$0x1]
        %v1605 = vld [vmem:[%s10 + $0x1] sm:$0x1]
        %v1606 = vsel %vm933, %v1601, 0.0
        %1607 = vadd.xlane.f32.xlu0 %v1606
        %v1608 = vpop.xlane.xlu0 %1607
        %v1609 = vmul.f32 %v1608, %v943
        %v1610 = vsub.f32 %v1601, %v1609
        %v1611 = vmul.f32 %v1610, %v1610
        %v1612 = vsel %vm933, %v1611, 0.0
        %1613 = vadd.xlane.f32.xlu0 %v1612
        %v1614 = vpop.xlane.xlu0 %1613
        %v1615 = vmul.f32 %v1614, %v943
        %v1616 = vadd.f32 %v1615, 1e-05
        %v1617 = vrsqrt.pop %v1616
        %v1618 = vmul.f32 %v1617, %v1616
        %v1619 = vmul.f32 %v1618, %v1617
        %v1620 = vmul.f32 0.5, %v1619
        %v1621 = vsub.f32 1.5, %v1620
        %v1622 = vmul.f32 %v1617, %v1621
        %vm1623 = vweird.f32 %v1616
        %vm1624 = vweird.f32 %v1617
        %vm1625 = vmor %vm1623, %vm1624
        %v1626 = vsel %vm1625, %v1617, %v1622
        %v1627 = vmul.f32 %v1610, %v1626
        %v1628 = vperm.slane %v1604, 0
        %v1629 = vmul.f32 %v1627, %v1628
        %v1630 = vperm.slane %v1605, 0
        %v1631 = vadd.f32 %v1629, %v1630
        %v1632 = vadd.f32 %v963, %v1631
        %v1633 = vld [vmem:[%s9 + $0x2] sm:$0x1]
        %v1634 = vld [vmem:[%s10 + $0x2] sm:$0x1]
        %v1635 = vsel %vm933, %v1632, 0.0
        %1636 = vadd.xlane.f32.xlu0 %v1635
        %v1637 = vpop.xlane.xlu0 %1636
        %v1638 = vmul.f32 %v1637, %v943
        %v1639 = vsub.f32 %v1632, %v1638
        %v1640 = vmul.f32 %v1639, %v1639
        %v1641 = vsel %vm933, %v1640, 0.0
        %1642 = vadd.xlane.f32.xlu0 %v1641
        %v1643 = vpop.xlane.xlu0 %1642
        %v1644 = vmul.f32 %v1643, %v943
        %v1645 = vadd.f32 %v1644, 1e-05
        %v1646 = vrsqrt.pop %v1645
        %v1647 = vmul.f32 %v1646, %v1645
        %v1648 = vmul.f32 %v1647, %v1646
        %v1649 = vmul.f32 0.5, %v1648
        %v1650 = vsub.f32 1.5, %v1649
        %v1651 = vmul.f32 %v1646, %v1650
        %vm1652 = vweird.f32 %v1645
        %vm1653 = vweird.f32 %v1646
        %vm1654 = vmor %vm1652, %vm1653
        %v1655 = vsel %vm1654, %v1646, %v1651
        %v1656 = vmul.f32 %v1639, %v1655
        %v1657 = vperm.slane %v1633, 0
        %v1658 = vmul.f32 %v1656, %v1657
        %v1659 = vperm.slane %v1634, 0
        %v1660 = vadd.f32 %v1658, %v1659
        %v1661 = vpack.c.bf16 %v1660, %v1660
        %v1662 = vld [vmem:[#allocation4] sm:$0xf]
        %v1663 = vld [vmem:[#allocation4 + $0x4] sm:$0xf]
        %v1664 = vld [vmem:[#allocation4 + $0x8] sm:$0xf]
        %v1665 = vld [vmem:[#allocation4 + $0xc] sm:$0xf]
        %v1670 = vunpack.c.l.b16 %v1662
        %v1671 = vunpack.c.l.b16 %v1663
        %v1672 = vunpack.c.l.b16 %v1664
        %v1673 = vunpack.c.l.b16 %v1665
        %v1674 = vpack.c.b16 %v1671, %v1670
        %v1675 = vpack.c.b16 %v1673, %v1672
        %v1679 = vsel %vm933, %v1661, 0
        %1681 = vmatpush.bf16.msra.mxu0 0
        %1682 = vmatpush.bf16.msra.mxu0 0
        %1683 = vmatpush.bf16.msra.mxu0 0
        %1684 = vmatpush.bf16.msra.mxu0 0
        %1685 = vmatpush.bf16.msra.mxu0 0
        %1686 = vmatpush.bf16.msra.mxu0 0
        %1687 = vmatpush.bf16.msra.mxu0 %v1675
        %1688 = vmatpush.bf16.msra.mxu0 %v1674
        %1689 = vmatmul.bf16.gmra.mxu0 %v1679
        %v1690 = vpop.f32.mrf.mxu0
        %v1691 = vadd.f32 0.0, %v1690
        %v1692 = vpop.f32.mrf.mxu0
        %1693 = vdwg.mxu0
        %v1694 = vld [vmem:[#allocation7] sm:$0xf]
        %v1695 = vld [vmem:[#allocation7 + $0x4] sm:$0xf]
        %v1696 = vld [vmem:[#allocation7 + $0x8] sm:$0xf]
        %v1697 = vld [vmem:[#allocation7 + $0xc] sm:$0xf]
        %v1702 = vunpack.c.l.b16 %v1694
        %v1703 = vunpack.c.l.b16 %v1695
        %v1704 = vunpack.c.l.b16 %v1696
        %v1705 = vunpack.c.l.b16 %v1697
        %v1706 = vpack.c.b16 %v1703, %v1702
        %v1707 = vpack.c.b16 %v1705, %v1704
        %1710 = vmatpush.bf16.msra.mxu0 0
        %1711 = vmatpush.bf16.msra.mxu0 0
        %1712 = vmatpush.bf16.msra.mxu0 0
        %1713 = vmatpush.bf16.msra.mxu0 0
        %1714 = vmatpush.bf16.msra.mxu0 0
        %1715 = vmatpush.bf16.msra.mxu0 0
        %1716 = vmatpush.bf16.msra.mxu0 %v1707
        %1717 = vmatpush.bf16.msra.mxu0 %v1706
        %1718 = vmatmul.bf16.gmra.mxu0 %v1679
        %v1719 = vpop.f32.mrf.mxu0
        %v1720 = vadd.f32 0.0, %v1719
        %v1721 = vpop.f32.mrf.mxu0
        %1722 = vdwg.mxu0
        %v1723 = vmul.f32 %v1691, %v1720
        %v1724 = vpack.c.bf16 %v1723, %v1723
        %v1725 = vld [vmem:[%s8] sm:$0xf]
        %v1726 = vld [vmem:[%s8 + $0x4] sm:$0xf]
        %v1727 = vld [vmem:[%s8 + $0x8] sm:$0xf]
        %v1728 = vld [vmem:[%s8 + $0xc] sm:$0xf]
        %v1729 = vld [vmem:[%s8 + $0x10] sm:$0xf]
        %v1730 = vld [vmem:[%s8 + $0x14] sm:$0xf]
        %v1731 = vld [vmem:[%s8 + $0x18] sm:$0xf]
        %v1732 = vld [vmem:[%s8 + $0x1c] sm:$0xf]
        %v1733 = vld [vmem:[%s8 + $0x20] sm:$0xf]
        %v1734 = vld [vmem:[%s8 + $0x24] sm:$0xf]
        %v1735 = vld [vmem:[%s8 + $0x28] sm:$0xf]
        %v1736 = vld [vmem:[%s8 + $0x2c] sm:$0xf]
        %v1737 = vld [vmem:[%s8 + $0x30] sm:$0xf]
        %v1738 = vld [vmem:[%s8 + $0x34] sm:$0xf]
        %v1739 = vld [vmem:[%s8 + $0x38] sm:$0xf]
        %v1740 = vld [vmem:[%s8 + $0x3c] sm:$0xf]
        %v1757 = vunpack.c.l.b16 %v1725
        %v1758 = vunpack.c.l.b16 %v1726
        %v1759 = vunpack.c.l.b16 %v1727
        %v1760 = vunpack.c.l.b16 %v1728
        %v1761 = vunpack.c.l.b16 %v1729
        %v1762 = vunpack.c.l.b16 %v1730
        %v1763 = vunpack.c.l.b16 %v1731
        %v1764 = vunpack.c.l.b16 %v1732
        %v1765 = vunpack.c.l.b16 %v1733
        %v1766 = vunpack.c.l.b16 %v1734
        %v1767 = vunpack.c.l.b16 %v1735
        %v1768 = vunpack.c.l.b16 %v1736
        %v1769 = vunpack.c.l.b16 %v1737
        %v1770 = vunpack.c.l.b16 %v1738
        %v1771 = vunpack.c.l.b16 %v1739
        %v1772 = vunpack.c.l.b16 %v1740
        %v1773 = vpack.c.b16 %v1758, %v1757
        %v1774 = vpack.c.b16 %v1760, %v1759
        %v1775 = vpack.c.b16 %v1762, %v1761
        %v1776 = vpack.c.b16 %v1764, %v1763
        %v1777 = vpack.c.b16 %v1766, %v1765
        %v1778 = vpack.c.b16 %v1768, %v1767
        %v1779 = vpack.c.b16 %v1770, %v1769
        %v1780 = vpack.c.b16 %v1772, %v1771
        %1789 = vmatpush.bf16.msra.mxu0 %v1780
        %1790 = vmatpush.bf16.msra.mxu0 %v1779
        %1791 = vmatpush.bf16.msra.mxu0 %v1778
        %1792 = vmatpush.bf16.msra.mxu0 %v1777
        %1793 = vmatpush.bf16.msra.mxu0 %v1776
        %1794 = vmatpush.bf16.msra.mxu0 %v1775
        %1795 = vmatpush.bf16.msra.mxu0 %v1774
        %1796 = vmatpush.bf16.msra.mxu0 %v1773
        %1797 = vmatmul.bf16.gmra.mxu0 %v1724
        %v1798 = vpop.f32.mrf.mxu0
        %v1799 = vadd.f32 0.0, %v1798
        %v1800 = vpop.f32.mrf.mxu0
        %1801 = vdwg.mxu0
        %v1802 = vld [vmem:[%s9 + $0x3] sm:$0x1]
        %v1803 = vld [vmem:[%s10 + $0x3] sm:$0x1]
        %v1804 = vsel %vm933, %v1799, 0.0
        %1805 = vadd.xlane.f32.xlu0 %v1804
        %v1806 = vpop.xlane.xlu0 %1805
        %v1807 = vmul.f32 %v1806, %v943
        %v1808 = vsub.f32 %v1799, %v1807
        %v1809 = vmul.f32 %v1808, %v1808
        %v1810 = vsel %vm933, %v1809, 0.0
        %1811 = vadd.xlane.f32.xlu0 %v1810
        %v1812 = vpop.xlane.xlu0 %1811
        %v1813 = vmul.f32 %v1812, %v943
        %v1814 = vadd.f32 %v1813, 1e-05
        %v1815 = vrsqrt.pop %v1814
        %v1816 = vmul.f32 %v1815, %v1814
        %v1817 = vmul.f32 %v1816, %v1815
        %v1818 = vmul.f32 0.5, %v1817
        %v1819 = vsub.f32 1.5, %v1818
        %v1820 = vmul.f32 %v1815, %v1819
        %vm1821 = vweird.f32 %v1814
        %vm1822 = vweird.f32 %v1815
        %vm1823 = vmor %vm1821, %vm1822
        %v1824 = vsel %vm1823, %v1815, %v1820
        %v1825 = vmul.f32 %v1808, %v1824
        %v1826 = vperm.slane %v1802, 0
        %v1827 = vmul.f32 %v1825, %v1826
        %v1828 = vperm.slane %v1803, 0
        %v1829 = vadd.f32 %v1827, %v1828
        %v1830 = vadd.f32 %v1632, %v1829
        %1831 = vst.msk [vmem:[%s519] sm:$0xff] %vm933, %v1632
        %1832 = vst.msk [vmem:[%s526] sm:$0xff] %vm933, %v1830
        %1833 = vst.msk [vmem:[%s533] sm:$0xff] %vm933, %v1570
        %1834 = vst.msk [vmem:[%s540] sm:$0xff] %vm933, %v1799
        %s1835 = sand.u32 %s295, 1
        %s1836 = scalar_lea.sflag [#allocation6], %s1835
        %s1837 = sand.u32 %s295, 1
        %s1838 = smul.addr %s1837, 8
        %s1839 = scalar_lea.vmem [#allocation9], %s1838
        %s1840 = sand.u32 %s37, 1
        %s1841 = scalar_lea.sflag [#allocation11], %s1840
        %s1842 = sand.u32 %s323, 1
        %s1843 = smul.addr %s1842, 8
        %s1844 = scalar_lea.vmem [#allocation10], %s1843
        %s1845 = sand.u32 %s37, 1
        %s1846 = scalar_lea.sflag [#allocation11], %s1845
        %s1847 = sand.u32 %s351, 1
        %s1848 = smul.addr %s1847, 8
        %s1849 = scalar_lea.vmem [#allocation12], %s1848
        %s1850 = sand.u32 %s379, 1
        %s1851 = scalar_lea.sflag [#allocation14], %s1850
        %s1852 = sand.u32 %s379, 1
        %s1853 = smul.addr %s1852, 8
        %s1854 = scalar_lea.vmem [#allocation13], %s1853
        // Predicated region
        $region77: #{tpu_custom_call.1} parent=63 // pred_check
          %p1855 = pneg %p305
        $region78: #{tpu_custom_call.1} parent=63 // pred_check_branch
          %1857 = sbr.rel (%p1855) target = $region80
        $region79: #{tpu_custom_call.1} parent=63 // pred_region
          %1859 = vsyncadd %s1836, 0
          %s1860 = sadd.s32 %s42, %s41
          %s1861 = smul.addr %s1860, 8
          %s1862 = scalar_lea.hbm %s11, %s1861
          %s1864 = sshll.u32 %s1839, 4
          %s1865 = int_to_ptr.vmem [resolvable:$true] %s1864
          %s1866 = sshll.u32 %s1862, 4
          %s1867 = int_to_ptr.hbm [resolvable:$true] %s1866
          %1869 = dma.vmem_to_hbm [thread:$0]  %s1865, 128, %s1867, %s1836
        $region80: #{tpu_custom_call.1} parent=63 // pred_fallthru
          _
        // Predicated region
        $region81: #{tpu_custom_call.1} parent=63 // pred_check
          %p1870 = pneg %p333
        $region82: #{tpu_custom_call.1} parent=63 // pred_check_branch
          %1872 = sbr.rel (%p1870) target = $region84
        $region83: #{tpu_custom_call.1} parent=63 // pred_region
          %1874 = vsyncadd %s1841, 0
          %s1875 = sadd.s32 %s42, %s41
          %s1876 = smul.addr %s1875, 8
          %s1877 = scalar_lea.hbm %s12, %s1876
          %s1879 = sshll.u32 %s1844, 4
          %s1880 = int_to_ptr.vmem [resolvable:$true] %s1879
          %s1881 = sshll.u32 %s1877, 4
          %s1882 = int_to_ptr.hbm [resolvable:$true] %s1881
          %1884 = dma.vmem_to_hbm [thread:$0]  %s1880, 128, %s1882, %s1841
        $region84: #{tpu_custom_call.1} parent=63 // pred_fallthru
          _
        // Predicated region
        $region85: #{tpu_custom_call.1} parent=63 // pred_check
          %p1885 = pneg %p361
        $region86: #{tpu_custom_call.1} parent=63 // pred_check_branch
          %1887 = sbr.rel (%p1885) target = $region88
        $region87: #{tpu_custom_call.1} parent=63 // pred_region
          %1889 = vsyncadd %s1846, 0
          %s1890 = sadd.s32 %s42, %s41
          %s1891 = smul.addr %s1890, 8
          %s1892 = scalar_lea.hbm %s13, %s1891
          %s1894 = sshll.u32 %s1849, 4
          %s1895 = int_to_ptr.vmem [resolvable:$true] %s1894
          %s1896 = sshll.u32 %s1892, 4
          %s1897 = int_to_ptr.hbm [resolvable:$true] %s1896
          %1899 = dma.vmem_to_hbm [thread:$0]  %s1895, 128, %s1897, %s1846
        $region88: #{tpu_custom_call.1} parent=63 // pred_fallthru
          _
        // Predicated region
        $region89: #{tpu_custom_call.1} parent=63 // pred_check
          %p1900 = pneg %p389
        $region90: #{tpu_custom_call.1} parent=63 // pred_check_branch
          %1902 = sbr.rel (%p1900) target = $region92
        $region91: #{tpu_custom_call.1} parent=63 // pred_region
          %1904 = vsyncadd %s1851, 0
          %s1905 = sadd.s32 %s42, %s41
          %s1906 = smul.addr %s1905, 8
          %s1907 = scalar_lea.hbm %s14, %s1906
          %s1909 = sshll.u32 %s1854, 4
          %s1910 = int_to_ptr.vmem [resolvable:$true] %s1909
          %s1911 = sshll.u32 %s1907, 4
          %s1912 = int_to_ptr.hbm [resolvable:$true] %s1911
          %1914 = dma.vmem_to_hbm [thread:$0]  %s1910, 128, %s1912, %s1851
        $region92: #{tpu_custom_call.1} parent=63 // pred_fallthru
          _
      $region64: #{tpu_custom_call.1} parent=5 // pred_fallthru
        _
      %p1915 = scmp.le.s32.totalorder 2, %s32
      // Predicated region
      $region93: #{tpu_custom_call.1} parent=5 // pred_check
        %p1916 = pneg %p1915
      $region94: #{tpu_custom_call.1} parent=5 // pred_check_branch
        %1918 = sbr.rel (%p1916) target = $region96
      $region95: #{tpu_custom_call.1} parent=5 // pred_region
        %s1919 = ssub.s32 %s32, 2
        // Predicated region
        $region97: #{tpu_custom_call.1} parent=95 // pred_check
          %p1920 = pneg %p311
        $region98: #{tpu_custom_call.1} parent=95 // pred_check_branch
          %1922 = sbr.rel (%p1920) target = $region100
        $region99: #{tpu_custom_call.1} parent=95 // pred_region
          %s1923 = sand.u32 %s296, 1
          %s1924 = scalar_lea.sflag [#allocation6], %s1923
          %s1925 = sand.u32 %s296, 1
          %s1926 = smul.addr %s1925, 8
          %s1927 = scalar_lea.vmem [#allocation9], %s1926
          %1929 = dma.done %s1924, 128
        $region100: #{tpu_custom_call.1} parent=95 // pred_fallthru
          _
        // Predicated region
        $region101: #{tpu_custom_call.1} parent=95 // pred_check
          %p1930 = pneg %p339
        $region102: #{tpu_custom_call.1} parent=95 // pred_check_branch
          %1932 = sbr.rel (%p1930) target = $region104
        $region103: #{tpu_custom_call.1} parent=95 // pred_region
          %s1933 = sand.u32 %s38, 1
          %s1934 = scalar_lea.sflag [#allocation11], %s1933
          %s1935 = sand.u32 %s324, 1
          %s1936 = smul.addr %s1935, 8
          %s1937 = scalar_lea.vmem [#allocation10], %s1936
          %1939 = dma.done %s1934, 128
        $region104: #{tpu_custom_call.1} parent=95 // pred_fallthru
          _
        // Predicated region
        $region105: #{tpu_custom_call.1} parent=95 // pred_check
          %p1940 = pneg %p367
        $region106: #{tpu_custom_call.1} parent=95 // pred_check_branch
          %1942 = sbr.rel (%p1940) target = $region108
        $region107: #{tpu_custom_call.1} parent=95 // pred_region
          %s1943 = sand.u32 %s38, 1
          %s1944 = scalar_lea.sflag [#allocation11], %s1943
          %s1945 = sand.u32 %s352, 1
          %s1946 = smul.addr %s1945, 8
          %s1947 = scalar_lea.vmem [#allocation12], %s1946
          %1949 = dma.done %s1944, 128
        $region108: #{tpu_custom_call.1} parent=95 // pred_fallthru
          _
        // Predicated region
        $region109: #{tpu_custom_call.1} parent=95 // pred_check
          %p1950 = pneg %p395
        $region110: #{tpu_custom_call.1} parent=95 // pred_check_branch
          %1952 = sbr.rel (%p1950) target = $region112
        $region111: #{tpu_custom_call.1} parent=95 // pred_region
          %s1953 = sand.u32 %s380, 1
          %s1954 = scalar_lea.sflag [#allocation14], %s1953
          %s1955 = sand.u32 %s380, 1
          %s1956 = smul.addr %s1955, 8
          %s1957 = scalar_lea.vmem [#allocation13], %s1956
          %1959 = dma.done %s1954, 128
        $region112: #{tpu_custom_call.1} parent=95 // pred_fallthru
          _
      $region96: #{tpu_custom_call.1} parent=5 // pred_fallthru
        _
    $region6: #{tpu_custom_call.1} parent=1 // loop_footer
      %s36 = sadd.s32 1, %s32
    $region7: #{tpu_custom_call.1} parent=1 // loop_footer_branch
      %31 = sbr.rel target = $region3
    $region8: #{tpu_custom_call.1} parent=1 // loop_exit
      _
    %1960 = vsyncpa [#allocation5], 1
    %s1961 = scalar_lea.sflag [#allocation5], 1
    %1962 = vsyncpa %s1961, 1
    %1963 = vsyncpa [#allocation8], 1
    %1964 = vsyncpa [#allocation6], 1
    %s1965 = scalar_lea.sflag [#allocation6], 1
    %1966 = vsyncpa %s1965, 1
    %1967 = vsyncpa [#allocation11], 1
    %s1968 = scalar_lea.sflag [#allocation11], 1
    %1969 = vsyncpa %s1968, 1
    %1970 = vsyncpa [#allocation14], 1
    %s1971 = scalar_lea.sflag [#allocation14], 1
    %1972 = vsyncpa %s1971, 1

// kernel: tpu_custom_call.1
$region0: #{tpu_custom_call.1}
  #allocation0 [shape = 'u32[]', space=smem, size = 0x4, offset = 0x4, fixed_abs, tag = 'smem constant byte address 0x4 - core index']
  #allocation1 [shape = 'u32[72,128]{1,0:T(1,128)}', space=vmem, size = 0x9000, scoped, tag = 'internal scratch']
  #allocation2 [shape = 'bf16[4,8,8]{2,1,0:T(8,128)(2,1)}', space=vmem, size = 0x2000, scoped, tag = 'scratch operand']
  #allocation3 [shape = 'bf16[4,8,8]{2,1,0:T(8,128)(2,1)}', space=vmem, size = 0x2000, scoped, tag = 'scratch operand']
  %s0 = inlined_call_operand.vmem [shape: f32[2,8,32], index: 0, kind: input, shape index: {}]
  %s1 = inlined_call_operand.vmem [shape: f32[4,1,1], index: 1, kind: input, shape index: {}]
  %s2 = inlined_call_operand.vmem [shape: bf16[32,32], index: 2, kind: input, shape index: {}]
  %s3 = inlined_call_operand.vmem [shape: bf16[32,32], index: 3, kind: input, shape index: {}]
  %s4 = inlined_call_operand.vmem [shape: bf16[32,32], index: 4, kind: input, shape index: {}]
  %s5 = inlined_call_operand.vmem [shape: bf16[32,32], index: 5, kind: input, shape index: {}]
  %s6 = inlined_call_operand.hbm [shape: bf16[32,128], index: 6, kind: input, shape index: {}]
  %s7 = inlined_call_operand.hbm [shape: bf16[32,128], index: 7, kind: input, shape index: {}]
  %s8 = inlined_call_operand.vmem [shape: bf16[128,32], index: 8, kind: input, shape index: {}]
  %s9 = inlined_call_operand.vmem [shape: f32[4,32], index: 9, kind: input, shape index: {}]
  %s10 = inlined_call_operand.vmem [shape: f32[4,32], index: 10, kind: input, shape index: {}]
  %s11 = inlined_call_operand.hbm [shape: f32[2,8,32], index: 11, kind: output, shape index: {0}]
  %s12 = inlined_call_operand.hbm [shape: f32[2,8,32], index: 12, kind: output, shape index: {1}]
  %s13 = inlined_call_operand.hbm [shape: f32[2,8,32], index: 13, kind: output, shape index: {2}]
  %s14 = inlined_call_operand.hbm [shape: f32[2,8,32], index: 14, kind: output, shape index: {3}]
  %15 = xla_tuple %s11, %s12, %s13, %s14
  %s16 = sld [smem:[#allocation0]]
  $region113: #{tpu_custom_call.1} parent=0
    _
  %s18 = ssub.s32 1, %s16
  %s19 = scalar_select 0, %s18, %s16
  $region1: #{tpu_custom_call.1} parent=0
    #allocation4 [shape = 'u8[8192]{0}', space=vmem, size = 0x2000, scoped, tag = 'input window, operand 6, single buffered']
    #allocation5 [shape = 's32[2]{0}', space=sflag, size = 0x8, scoped, tag = 'scoped memory for tpu_custom_call.1']
    #allocation6 [shape = 's32[2]{0}', space=sflag, size = 0x8, scoped, tag = 'scoped memory for tpu_custom_call.1']
    #allocation7 [shape = 'u8[8192]{0}', space=vmem, size = 0x2000, scoped, tag = 'input window, operand 7, single buffered']
    #allocation8 [shape = 's32[1]{0}', space=sflag, size = 0x4, scoped, tag = 'scoped memory for tpu_custom_call.1']
    #allocation9 [shape = 'u8[8192]{0}', space=vmem, size = 0x2000, scoped, tag = 'output window, operand 0']
    #allocation10 [shape = 'u8[8192]{0}', space=vmem, size = 0x2000, scoped, tag = 'output window, operand 1']
    #allocation11 [shape = 's32[2]{0}', space=sflag, size = 0x8, scoped, tag = 'scoped memory for tpu_custom_call.1']
    #allocation12 [shape = 'u8[8192]{0}', space=vmem, size = 0x2000, scoped, tag = 'output window, operand 2']
    #allocation13 [shape = 'u8[8192]{0}', space=vmem, size = 0x2000, scoped, tag = 'output window, operand 3']
    #allocation14 [shape = 's32[2]{0}', space=sflag, size = 0x8, scoped, tag = 'scoped memory for tpu_custom_call.1']
    %20 = vsyncpa [#allocation5], 0
    %21 = vsyncpa [#allocation8], 0
    %22 = vsyncpa [#allocation6], 0
    %s23 = scalar_lea.sflag [#allocation6], 1
    %24 = vsyncpa %s23, 0
    %25 = vsyncpa [#allocation11], 0
    %s26 = scalar_lea.sflag [#allocation11], 1
    %27 = vsyncpa %s26, 0
    %28 = vsyncpa [#allocation14], 0
    %s29 = scalar_lea.sflag [#allocation14], 1
    %30 = vsyncpa %s29, 0
    loop: start=0, step=1, limit=4
    $region2: #{tpu_custom_call.1} parent=1 // loop_pre_header
      _
    $region3: #{tpu_custom_call.1} parent=1 // loop_header
      %s32 = sphi 0, %s36
      %p33 = scmp.ge.s32.totalorder %s32, 4
      %s39 = sphi 0, %s51
      %s40 = sphi 0, %s47
      %s41 = sphi 0, %s39
      %s42 = sphi 0, %s40
      %s43 = sphi 0, %s41
      %s44 = sphi 0, %s42
      %s54 = sphi 0, %s56
      %s57 = sphi 0, %s54
      %s58 = sphi 0, %s57
      %s74 = sphi 0, %s58
      %s78 = sphi 0, %s78
      %s80 = sphi 0, %s78
      %s81 = sphi 0, %s80
      %s95 = sphi 0, %s81
      %s99 = sphi 0, %s99
      %s101 = sphi 0, %s99
      %s102 = sphi 0, %s101
      %s116 = sphi 0, %s102
      %s120 = sphi 0, %s120
      %s122 = sphi 0, %s120
      %s123 = sphi 0, %s122
      %s137 = sphi 0, %s123
      %s141 = sphi 0, %s141
      %s143 = sphi 0, %s141
      %s144 = sphi 0, %s143
      %s158 = sphi 0, %s144
      %s162 = sphi 0, %s162
      %s164 = sphi 0, %s162
      %s165 = sphi 0, %s164
      %s179 = sphi 0, %s165
      %s183 = sphi 0, %s183
      %s185 = sphi 0, %s183
      %s186 = sphi 0, %s185
      %s200 = sphi 0, %s186
      %s204 = sphi 0, %s204
      %s206 = sphi 0, %s204
      %s207 = sphi 0, %s206
      %s221 = sphi 0, %s207
      %s225 = sphi 0, %s225
      %s227 = sphi 0, %s225
      %s228 = sphi 0, %s227
      %s242 = sphi 0, %s228
      %s246 = sphi 0, %s246
      %s248 = sphi 0, %s246
      %s249 = sphi 0, %s248
      %s263 = sphi 0, %s249
      %s267 = sphi 0, %s267
      %s269 = sphi 0, %s267
      %s270 = sphi 0, %s269
      %s284 = sphi 0, %s270
      %s292 = sphi 0, %s294
      %s295 = sphi 0, %s292
      %s296 = sphi 0, %s295
      %s312 = sphi 0, %s296
      %s320 = sphi 0, %s322
      %s323 = sphi 0, %s320
      %s324 = sphi 0, %s323
      %s340 = sphi 0, %s324
      %s348 = sphi 0, %s350
      %s351 = sphi 0, %s348
      %s352 = sphi 0, %s351
      %s368 = sphi 0, %s352
      %s376 = sphi 0, %s378
      %s379 = sphi 0, %s376
      %s380 = sphi 0, %s379
      %s396 = sphi 0, %s380
    $region4: #{tpu_custom_call.1} parent=1 // loop_header_branch
      %35 = sbr.rel (%p33) target = $region8
    $region5: #{tpu_custom_call.1} parent=1 // loop_body
      %s37 = ssub.s32 %s32, 1
      %s38 = ssub.s32 %s32, 2
      %s45 = sadd.s32 1, %s40
      %p46 = scmp.ge.s32.totalorder %s45, 1
      %s47 = scalar_select %p46, 0, %s45
      %s48 = sadd.s32 1, %s39
      %s49 = scalar_select %p46, %s48, %s39
      %p50 = scmp.ge.s32.totalorder %s49, 2
      %s51 = scalar_select %p50, 0, %s49
      %s52 = ssub.s32 %s39, %s51
      %p53 = scmp.eq.s32.totalorder %s52, 0
      %s55 = sadd.s32 %s54, 1
      %s56 = scalar_select %p53, %s54, %s55
      %p59 = pneg %p53
      %p60 = scmp.eq.s32.totalorder %s32, 1
      %p61 = por %p59, %p60
      %p62 = scmp.ne.s32.totalorder %s54, %s57
      %p63 = scmp.eq.s32.totalorder %s32, 0
      %p64 = por %p62, %p63
      %p65 = scmp.ne.s32.totalorder %s54, %s57
      %p66 = scmp.eq.s32.totalorder %s37, 1
      %p67 = por %p65, %p66
      %p68 = scmp.ne.s32.totalorder %s57, %s58
      %p69 = scmp.eq.s32.totalorder %s37, 0
      %p70 = por %p68, %p69
      %p71 = scmp.ne.s32.totalorder %s57, %s58
      %p72 = scmp.eq.s32.totalorder %s38, 1
      %p73 = por %p71, %p72
      %p75 = scmp.ne.s32.totalorder %s58, %s74
      %p76 = scmp.eq.s32.totalorder %s38, 0
      %p77 = por %p75, %p76
      %s79 = sadd.s32 %s78, 1
      %p82 = scmp.eq.s32.totalorder %s32, 1
      %p83 = scmp.ne.s32.totalorder %s78, %s80
      %p84 = scmp.eq.s32.totalorder %s32, 0
      %p85 = por %p83, %p84
      %p86 = scmp.ne.s32.totalorder %s78, %s80
      %p87 = scmp.eq.s32.totalorder %s37, 1
      %p88 = por %p86, %p87
      %p89 = scmp.ne.s32.totalorder %s80, %s81
      %p90 = scmp.eq.s32.totalorder %s37, 0
      %p91 = por %p89, %p90
      %p92 = scmp.ne.s32.totalorder %s80, %s81
      %p93 = scmp.eq.s32.totalorder %s38, 1
      %p94 = por %p92, %p93
      %p96 = scmp.ne.s32.totalorder %s81, %s95
      %p97 = scmp.eq.s32.totalorder %s38, 0
      %p98 = por %p96, %p97
      %s100 = sadd.s32 %s99, 1
      %p103 = scmp.eq.s32.totalorder %s32, 1
      %p104 = scmp.ne.s32.totalorder %s99, %s101
      %p105 = scmp.eq.s32.totalorder %s32, 0
      %p106 = por %p104, %p105
      %p107 = scmp.ne.s32.totalorder %s99, %s101
      %p108 = scmp.eq.s32.totalorder %s37, 1
      %p109 = por %p107, %p108
      %p110 = scmp.ne.s32.totalorder %s101, %s102
      %p111 = scmp.eq.s32.totalorder %s37, 0
      %p112 = por %p110, %p111
      %p113 = scmp.ne.s32.totalorder %s101, %s102
      %p114 = scmp.eq.s32.totalorder %s38, 1
      %p115 = por %p113, %p114
      %p117 = scmp.ne.s32.totalorder %s102, %s116
      %p118 = scmp.eq.s32.totalorder %s38, 0
      %p119 = por %p117, %p118
      %s121 = sadd.s32 %s120, 1
      %p124 = scmp.eq.s32.totalorder %s32, 1
      %p125 = scmp.ne.s32.totalorder %s120, %s122
      %p126 = scmp.eq.s32.totalorder %s32, 0
      %p127 = por %p125, %p126
      %p128 = scmp.ne.s32.totalorder %s120, %s122
      %p129 = scmp.eq.s32.totalorder %s37, 1
      %p130 = por %p128, %p129
      %p131 = scmp.ne.s32.totalorder %s122, %s123
      %p132 = scmp.eq.s32.totalorder %s37, 0
      %p133 = por %p131, %p132
      %p134 = scmp.ne.s32.totalorder %s122, %s123
      %p135 = scmp.eq.s32.totalorder %s38, 1
      %p136 = por %p134, %p135
      %p138 = scmp.ne.s32.totalorder %s123, %s137
      %p139 = scmp.eq.s32.totalorder %s38, 0
      %p140 = por %p138, %p139
      %s142 = sadd.s32 %s141, 1
      %p145 = scmp.eq.s32.totalorder %s32, 1
      %p146 = scmp.ne.s32.totalorder %s141, %s143
      %p147 = scmp.eq.s32.totalorder %s32, 0
      %p148 = por %p146, %p147
      %p149 = scmp.ne.s32.totalorder %s141, %s143
      %p150 = scmp.eq.s32.totalorder %s37, 1
      %p151 = por %p149, %p150
      %p152 = scmp.ne.s32.totalorder %s143, %s144
      %p153 = scmp.eq.s32.totalorder %s37, 0
      %p154 = por %p152, %p153
      %p155 = scmp.ne.s32.totalorder %s143, %s144
      %p156 = scmp.eq.s32.totalorder %s38, 1
      %p157 = por %p155, %p156
      %p159 = scmp.ne.s32.totalorder %s144, %s158
      %p160 = scmp.eq.s32.totalorder %s38, 0
      %p161 = por %p159, %p160
      %s163 = sadd.s32 %s162, 1
      %p166 = scmp.eq.s32.totalorder %s32, 1
      %p167 = scmp.ne.s32.totalorder %s162, %s164
      %p168 = scmp.eq.s32.totalorder %s32, 0
      %p169 = por %p167, %p168
      %p170 = scmp.ne.s32.totalorder %s162, %s164
      %p171 = scmp.eq.s32.totalorder %s37, 1
      %p172 = por %p170, %p171
      %p173 = scmp.ne.s32.totalorder %s164, %s165
      %p174 = scmp.eq.s32.totalorder %s37, 0
      %p175 = por %p173, %p174
      %p176 = scmp.ne.s32.totalorder %s164, %s165
      %p177 = scmp.eq.s32.totalorder %s38, 1
      %p178 = por %p176, %p177
      %p180 = scmp.ne.s32.totalorder %s165, %s179
      %p181 = scmp.eq.s32.totalorder %s38, 0
      %p182 = por %p180, %p181
      %s184 = sadd.s32 %s183, 1
      %p187 = scmp.eq.s32.totalorder %s32, 1
      %p188 = scmp.ne.s32.totalorder %s183, %s185
      %p189 = scmp.eq.s32.totalorder %s32, 0
      %p190 = por %p188, %p189
      %p191 = scmp.ne.s32.totalorder %s183, %s185
      %p192 = scmp.eq.s32.totalorder %s37, 1
      %p193 = por %p191, %p192
      %p194 = scmp.ne.s32.totalorder %s185, %s186
      %p195 = scmp.eq.s32.totalorder %s37, 0
      %p196 = por %p194, %p195
      %p197 = scmp.ne.s32.totalorder %s185, %s186
      %p198 = scmp.eq.s32.totalorder %s38, 1
      %p199 = por %p197, %p198
      %p201 = scmp.ne.s32.totalorder %s186, %s200
      %p202 = scmp.eq.s32.totalorder %s38, 0
      %p203 = por %p201, %p202
      %s205 = sadd.s32 %s204, 1
      %p208 = scmp.eq.s32.totalorder %s32, 1
      %p209 = scmp.ne.s32.totalorder %s204, %s206
      %p210 = scmp.eq.s32.totalorder %s32, 0
      %p211 = por %p209, %p210
      %p212 = scmp.ne.s32.totalorder %s204, %s206
      %p213 = scmp.eq.s32.totalorder %s37, 1
      %p214 = por %p212, %p213
      %p215 = scmp.ne.s32.totalorder %s206, %s207
      %p216 = scmp.eq.s32.totalorder %s37, 0
      %p217 = por %p215, %p216
      %p218 = scmp.ne.s32.totalorder %s206, %s207
      %p219 = scmp.eq.s32.totalorder %s38, 1
      %p220 = por %p218, %p219
      %p222 = scmp.ne.s32.totalorder %s207, %s221
      %p223 = scmp.eq.s32.totalorder %s38, 0
      %p224 = por %p222, %p223
      %s226 = sadd.s32 %s225, 1
      %p229 = scmp.eq.s32.totalorder %s32, 1
      %p230 = scmp.ne.s32.totalorder %s225, %s227
      %p231 = scmp.eq.s32.totalorder %s32, 0
      %p232 = por %p230, %p231
      %p233 = scmp.ne.s32.totalorder %s225, %s227
      %p234 = scmp.eq.s32.totalorder %s37, 1
      %p235 = por %p233, %p234
      %p236 = scmp.ne.s32.totalorder %s227, %s228
      %p237 = scmp.eq.s32.totalorder %s37, 0
      %p238 = por %p236, %p237
      %p239 = scmp.ne.s32.totalorder %s227, %s228
      %p240 = scmp.eq.s32.totalorder %s38, 1
      %p241 = por %p239, %p240
      %p243 = scmp.ne.s32.totalorder %s228, %s242
      %p244 = scmp.eq.s32.totalorder %s38, 0
      %p245 = por %p243, %p244
      %s247 = sadd.s32 %s246, 1
      %p250 = scmp.eq.s32.totalorder %s32, 1
      %p251 = scmp.ne.s32.totalorder %s246, %s248
      %p252 = scmp.eq.s32.totalorder %s32, 0
      %p253 = por %p251, %p252
      %p254 = scmp.ne.s32.totalorder %s246, %s248
      %p255 = scmp.eq.s32.totalorder %s37, 1
      %p256 = por %p254, %p255
      %p257 = scmp.ne.s32.totalorder %s248, %s249
      %p258 = scmp.eq.s32.totalorder %s37, 0
      %p259 = por %p257, %p258
      %p260 = scmp.ne.s32.totalorder %s248, %s249
      %p261 = scmp.eq.s32.totalorder %s38, 1
      %p262 = por %p260, %p261
      %p264 = scmp.ne.s32.totalorder %s249, %s263
      %p265 = scmp.eq.s32.totalorder %s38, 0
      %p266 = por %p264, %p265
      %s268 = sadd.s32 %s267, 1
      %p271 = scmp.eq.s32.totalorder %s32, 1
      %p272 = scmp.ne.s32.totalorder %s267, %s269
      %p273 = scmp.eq.s32.totalorder %s32, 0
      %p274 = por %p272, %p273
      %p275 = scmp.ne.s32.totalorder %s267, %s269
      %p276 = scmp.eq.s32.totalorder %s37, 1
      %p277 = por %p275, %p276
      %p278 = scmp.ne.s32.totalorder %s269, %s270
      %p279 = scmp.eq.s32.totalorder %s37, 0
      %p280 = por %p278, %p279
      %p281 = scmp.ne.s32.totalorder %s269, %s270
      %p282 = scmp.eq.s32.totalorder %s38, 1
      %p283 = por %p281, %p282
      %p285 = scmp.ne.s32.totalorder %s270, %s284
      %p286 = scmp.eq.s32.totalorder %s38, 0
      %p287 = por %p285, %p286
      %s288 = ssub.s32 %s39, %s51
      %s289 = ssub.s32 %s40, %s47
      %s290 = sor.u32 %s288, %s289
      %p291 = scmp.eq.s32.totalorder %s290, 0
      %s293 = sadd.s32 %s292, 1
      %s294 = scalar_select %p291, %s292, %s293
      %p297 = pneg %p291
      %p298 = scmp.eq.s32.totalorder %s32, 1
      %p299 = por %p297, %p298
      %p300 = scmp.ne.s32.totalorder %s292, %s295
      %p301 = scmp.eq.s32.totalorder %s32, 0
      %p302 = por %p300, %p301
      %p303 = scmp.ne.s32.totalorder %s292, %s295
      %p304 = scmp.eq.s32.totalorder %s37, 1
      %p305 = por %p303, %p304
      %p306 = scmp.ne.s32.totalorder %s295, %s296
      %p307 = scmp.eq.s32.totalorder %s37, 0
      %p308 = por %p306, %p307
      %p309 = scmp.ne.s32.totalorder %s295, %s296
      %p310 = scmp.eq.s32.totalorder %s38, 1
      %p311 = por %p309, %p310
      %p313 = scmp.ne.s32.totalorder %s296, %s312
      %p314 = scmp.eq.s32.totalorder %s38, 0
      %p315 = por %p313, %p314
      %s316 = ssub.s32 %s39, %s51
      %s317 = ssub.s32 %s40, %s47
      %s318 = sor.u32 %s316, %s317
      %p319 = scmp.eq.s32.totalorder %s318, 0
      %s321 = sadd.s32 %s320, 1
      %s322 = scalar_select %p319, %s320, %s321
      %p325 = pneg %p319
      %p326 = scmp.eq.s32.totalorder %s32, 1
      %p327 = por %p325, %p326
      %p328 = scmp.ne.s32.totalorder %s320, %s323
      %p329 = scmp.eq.s32.totalorder %s32, 0
      %p330 = por %p328, %p329
      %p331 = scmp.ne.s32.totalorder %s320, %s323
      %p332 = scmp.eq.s32.totalorder %s37, 1
      %p333 = por %p331, %p332
      %p334 = scmp.ne.s32.totalorder %s323, %s324
      %p335 = scmp.eq.s32.totalorder %s37, 0
      %p336 = por %p334, %p335
      %p337 = scmp.ne.s32.totalorder %s323, %s324
      %p338 = scmp.eq.s32.totalorder %s38, 1
      %p339 = por %p337, %p338
      %p341 = scmp.ne.s32.totalorder %s324, %s340
      %p342 = scmp.eq.s32.totalorder %s38, 0
      %p343 = por %p341, %p342
      %s344 = ssub.s32 %s39, %s51
      %s345 = ssub.s32 %s40, %s47
      %s346 = sor.u32 %s344, %s345
      %p347 = scmp.eq.s32.totalorder %s346, 0
      %s349 = sadd.s32 %s348, 1
      %s350 = scalar_select %p347, %s348, %s349
      %p353 = pneg %p347
      %p354 = scmp.eq.s32.totalorder %s32, 1
      %p355 = por %p353, %p354
      %p356 = scmp.ne.s32.totalorder %s348, %s351
      %p357 = scmp.eq.s32.totalorder %s32, 0
      %p358 = por %p356, %p357
      %p359 = scmp.ne.s32.totalorder %s348, %s351
      %p360 = scmp.eq.s32.totalorder %s37, 1
      %p361 = por %p359, %p360
      %p362 = scmp.ne.s32.totalorder %s351, %s352
      %p363 = scmp.eq.s32.totalorder %s37, 0
      %p364 = por %p362, %p363
      %p365 = scmp.ne.s32.totalorder %s351, %s352
      %p366 = scmp.eq.s32.totalorder %s38, 1
      %p367 = por %p365, %p366
      %p369 = scmp.ne.s32.totalorder %s352, %s368
      %p370 = scmp.eq.s32.totalorder %s38, 0
      %p371 = por %p369, %p370
      %s372 = ssub.s32 %s39, %s51
      %s373 = ssub.s32 %s40, %s47
      %s374 = sor.u32 %s372, %s373
      %p375 = scmp.eq.s32.totalorder %s374, 0
      %s377 = sadd.s32 %s376, 1
      %s378 = scalar_select %p375, %s376, %s377
      %p381 = pneg %p375
      %p382 = scmp.eq.s32.totalorder %s32, 1
      %p383 = por %p381, %p382
      %p384 = scmp.ne.s32.totalorder %s376, %s379
      %p385 = scmp.eq.s32.totalorder %s32, 0
      %p386 = por %p384, %p385
      %p387 = scmp.ne.s32.totalorder %s376, %s379
      %p388 = scmp.eq.s32.totalorder %s37, 1
      %p389 = por %p387, %p388
      %p390 = scmp.ne.s32.totalorder %s379, %s380
      %p391 = scmp.eq.s32.totalorder %s37, 0
      %p392 = por %p390, %p391
      %p393 = scmp.ne.s32.totalorder %s379, %s380
      %p394 = scmp.eq.s32.totalorder %s38, 1
      %p395 = por %p393, %p394
      %p397 = scmp.ne.s32.totalorder %s380, %s396
      %p398 = scmp.eq.s32.totalorder %s38, 0
      %p399 = por %p397, %p398
      %p400 = scmp.le.s32.totalorder 1, %s32
      %p401 = scmp.lt.s32.totalorder %s32, 3
      %p402 = pnand %p400, %p401
      %p403 = pneg %p402
      // Predicated region
      $region9: #{tpu_custom_call.1} parent=5 // pred_check
        _
      $region10: #{tpu_custom_call.1} parent=5 // pred_check_branch
        %405 = sbr.rel (%p402) target = $region12
      $region11: #{tpu_custom_call.1} parent=5 // pred_region
        %s406 = ssub.s32 %s32, 1
        // Predicated region
        $region13: #{tpu_custom_call.1} parent=11 // pred_check
          %p407 = pneg %p91
        $region14: #{tpu_custom_call.1} parent=11 // pred_check_branch
          %409 = sbr.rel (%p407) target = $region16
        $region15: #{tpu_custom_call.1} parent=11 // pred_region
          _
        $region16: #{tpu_custom_call.1} parent=11 // pred_fallthru
          _
        // Predicated region
        $region17: #{tpu_custom_call.1} parent=11 // pred_check
          %p410 = pneg %p112
        $region18: #{tpu_custom_call.1} parent=11 // pred_check_branch
          %412 = sbr.rel (%p410) target = $region20
        $region19: #{tpu_custom_call.1} parent=11 // pred_region
          _
        $region20: #{tpu_custom_call.1} parent=11 // pred_fallthru
          _
        // Predicated region
        $region21: #{tpu_custom_call.1} parent=11 // pred_check
          %p413 = pneg %p133
        $region22: #{tpu_custom_call.1} parent=11 // pred_check_branch
          %415 = sbr.rel (%p413) target = $region24
        $region23: #{tpu_custom_call.1} parent=11 // pred_region
          _
        $region24: #{tpu_custom_call.1} parent=11 // pred_fallthru
          _
        // Predicated region
        $region25: #{tpu_custom_call.1} parent=11 // pred_check
          %p416 = pneg %p154
        $region26: #{tpu_custom_call.1} parent=11 // pred_check_branch
          %418 = sbr.rel (%p416) target = $region28
        $region27: #{tpu_custom_call.1} parent=11 // pred_region
          _
        $region28: #{tpu_custom_call.1} parent=11 // pred_fallthru
          _
        // Predicated region
        $region29: #{tpu_custom_call.1} parent=11 // pred_check
          %p419 = pneg %p175
        $region30: #{tpu_custom_call.1} parent=11 // pred_check_branch
          %421 = sbr.rel (%p419) target = $region32
        $region31: #{tpu_custom_call.1} parent=11 // pred_region
          _
        $region32: #{tpu_custom_call.1} parent=11 // pred_fallthru
          _
        // Predicated region
        $region33: #{tpu_custom_call.1} parent=11 // pred_check
          %p422 = pneg %p196
        $region34: #{tpu_custom_call.1} parent=11 // pred_check_branch
          %424 = sbr.rel (%p422) target = $region36
        $region35: #{tpu_custom_call.1} parent=11 // pred_region
          %426 = vsyncadd [#allocation5], 0
          %s427 = sshll.u32 %s6, 4
          %s428 = int_to_ptr.hbm [resolvable:$true] %s427
          %s429 = sshll.u32 [#allocation4], 4
          %s430 = int_to_ptr.vmem [resolvable:$true] %s429
          %435 = dma.hbm_to_vmem [thread:$0]  %s428, 256, %s430, [#allocation5], 64, 64, 4
        $region36: #{tpu_custom_call.1} parent=11 // pred_fallthru
          _
        // Predicated region
        $region37: #{tpu_custom_call.1} parent=11 // pred_check
          %p436 = pneg %p217
        $region38: #{tpu_custom_call.1} parent=11 // pred_check_branch
          %438 = sbr.rel (%p436) target = $region40
        $region39: #{tpu_custom_call.1} parent=11 // pred_region
          %440 = vsyncadd [#allocation8], 0
          %s441 = sshll.u32 %s7, 4
          %s442 = int_to_ptr.hbm [resolvable:$true] %s441
          %s443 = sshll.u32 [#allocation7], 4
          %s444 = int_to_ptr.vmem [resolvable:$true] %s443
          %449 = dma.hbm_to_vmem [thread:$0]  %s442, 256, %s444, [#allocation8], 64, 64, 4
        $region40: #{tpu_custom_call.1} parent=11 // pred_fallthru
          _
        // Predicated region
        $region41: #{tpu_custom_call.1} parent=11 // pred_check
          %p450 = pneg %p238
        $region42: #{tpu_custom_call.1} parent=11 // pred_check_branch
          %452 = sbr.rel (%p450) target = $region44
        $region43: #{tpu_custom_call.1} parent=11 // pred_region
          _
        $region44: #{tpu_custom_call.1} parent=11 // pred_fallthru
          _
        // Predicated region
        $region45: #{tpu_custom_call.1} parent=11 // pred_check
          %p453 = pneg %p259
        $region46: #{tpu_custom_call.1} parent=11 // pred_check_branch
          %455 = sbr.rel (%p453) target = $region48
        $region47: #{tpu_custom_call.1} parent=11 // pred_region
          _
        $region48: #{tpu_custom_call.1} parent=11 // pred_fallthru
          _
        // Predicated region
        $region49: #{tpu_custom_call.1} parent=11 // pred_check
          %p456 = pneg %p280
        $region50: #{tpu_custom_call.1} parent=11 // pred_check_branch
          %458 = sbr.rel (%p456) target = $region52
        $region51: #{tpu_custom_call.1} parent=11 // pred_region
          _
        $region52: #{tpu_custom_call.1} parent=11 // pred_fallthru
          _
      $region12: #{tpu_custom_call.1} parent=5 // pred_fallthru
        _
      %p459 = scmp.lt.s32.totalorder %s32, 2
      // Predicated region
      $region53: #{tpu_custom_call.1} parent=5 // pred_check
        %p460 = pneg %p459
      $region54: #{tpu_custom_call.1} parent=5 // pred_check_branch
        %462 = sbr.rel (%p460) target = $region56
      $region55: #{tpu_custom_call.1} parent=5 // pred_region
        // Predicated region
        $region57: #{tpu_custom_call.1} parent=55 // pred_check
          %p463 = pneg %p64
        $region58: #{tpu_custom_call.1} parent=55 // pred_check_branch
          %465 = sbr.rel (%p463) target = $region60
        $region59: #{tpu_custom_call.1} parent=55 // pred_region
          %p466 = scmp.lt.s32.totalorder %s39, 1
          %s467 = scalar_select %p466, %s39, 1
          %s468 = smul.addr %s467, 8
          %s469 = scalar_lea.vmem %s0, %s468
        $region60: #{tpu_custom_call.1} parent=55 // pred_fallthru
          _
      $region56: #{tpu_custom_call.1} parent=5 // pred_fallthru
        _
      %p470 = scmp.le.s32.totalorder 1, %s32
      %p471 = scmp.lt.s32.totalorder %s32, 3
      %p472 = pnand %p470, %p471
      %p473 = pneg %p472
      // Predicated region
      $region61: #{tpu_custom_call.1} parent=5 // pred_check
        _
      $region62: #{tpu_custom_call.1} parent=5 // pred_check_branch
        %475 = sbr.rel (%p472) target = $region64
      $region63: #{tpu_custom_call.1} parent=5 // pred_region
        %s476 = ssub.s32 %s32, 1
        // Predicated region
        $region65: #{tpu_custom_call.1} parent=63 // pred_check
          %p477 = pneg %p196
        $region66: #{tpu_custom_call.1} parent=63 // pred_check_branch
          %479 = sbr.rel (%p477) target = $region68
        $region67: #{tpu_custom_call.1} parent=63 // pred_region
          %481 = dma.done [#allocation5], 256
        $region68: #{tpu_custom_call.1} parent=63 // pred_fallthru
          _
        // Predicated region
        $region69: #{tpu_custom_call.1} parent=63 // pred_check
          %p482 = pneg %p217
        $region70: #{tpu_custom_call.1} parent=63 // pred_check_branch
          %484 = sbr.rel (%p482) target = $region72
        $region71: #{tpu_custom_call.1} parent=63 // pred_region
          %486 = dma.done [#allocation8], 256
        $region72: #{tpu_custom_call.1} parent=63 // pred_fallthru
          _
        %p487 = scmp.lt.s32.totalorder %s41, 1
        %s488 = scalar_select %p487, %s41, 1
        %s489 = smul.addr %s488, 8
        %s490 = scalar_lea.vmem %s0, %s489
        %p491 = pneg %p70
        %p492 = pneg %p67
        %p493 = pneg %p91
        %p494 = pneg %p88
        %p495 = pneg %p112
        %p496 = pneg %p109
        %p497 = pneg %p133
        %p498 = pneg %p130
        %p499 = pneg %p154
        %p500 = pneg %p151
        %p501 = pneg %p175
        %p502 = pneg %p172
        %p503 = pneg %p196
        %p504 = pneg %p193
        %p505 = pneg %p217
        %p506 = pneg %p214
        %p507 = pneg %p238
        %p508 = pneg %p235
        %p509 = pneg %p259
        %p510 = pneg %p256
        %p511 = pneg %p280
        %p512 = pneg %p277
        %p513 = pneg %p308
        %p514 = pneg %p305
        %s515 = sand.u32 %s295, 1
        %s516 = scalar_lea.sflag [#allocation6], %s515
        %s517 = sand.u32 %s295, 1
        %s518 = smul.addr %s517, 8
        %s519 = scalar_lea.vmem [#allocation9], %s518
        %p520 = pneg %p336
        %p521 = pneg %p333
        %s522 = sand.u32 %s37, 1
        %s523 = scalar_lea.sflag [#allocation11], %s522
        %s524 = sand.u32 %s323, 1
        %s525 = smul.addr %s524, 8
        %s526 = scalar_lea.vmem [#allocation10], %s525
        %p527 = pneg %p364
        %p528 = pneg %p361
        %s529 = sand.u32 %s37, 1
        %s530 = scalar_lea.sflag [#allocation11], %s529
        %s531 = sand.u32 %s351, 1
        %s532 = smul.addr %s531, 8
        %s533 = scalar_lea.vmem [#allocation12], %s532
        %p534 = pneg %p392
        %p535 = pneg %p389
        %s536 = sand.u32 %s379, 1
        %s537 = scalar_lea.sflag [#allocation14], %s536
        %s538 = sand.u32 %s379, 1
        %s539 = smul.addr %s538, 8
        %s540 = scalar_lea.vmem [#allocation13], %s539
        %p541 = scmp.lt.s32.totalorder %s41, 1
        %s542 = scalar_select %p541, %s41, 1
        %s543 = smul.addr %s542, 8
        %s544 = scalar_lea.vmem %s0, %s543
        %p546 = scmp.eq.s32.totalorder %s42, 0
        // Predicated region
        $region73: #{tpu_custom_call.1} parent=63 // pred_check
          %p547 = pneg %p546
        $region74: #{tpu_custom_call.1} parent=63 // pred_check_branch
          %549 = sbr.rel (%p547) target = $region76
        $region75: #{tpu_custom_call.1} parent=63 // pred_region
          %v550 = vld [vmem:[%s544] sm:$0xff]
          %vm551 = vcmask 261120
          %v552 = vsel %vm551, %v550, 0.0
          %553 = vadd.xlane.f32.xlu0 %v552
          %v554 = vpop.xlane.xlu0 %553
          %v555 = vrcp.pop 32.0
          %v556 = vmul.f32 32.0, %v555
          %v557 = vsub.f32 1.0, %v556
          %v558 = vmul.f32 %v555, %v557
          %v559 = vadd.f32 %v555, %v558
          %vm560 = vweird.f32 %v555
          %v561 = vsel %vm560, %v555, %v559
          %v562 = vmul.f32 %v554, %v561
          %v563 = vsub.f32 %v550, %v562
          %v564 = vmul.f32 %v563, %v563
          %v565 = vsel %vm551, %v564, 0.0
          %566 = vadd.xlane.f32.xlu0 %v565
          %v567 = vpop.xlane.xlu0 %566
          %v568 = vmul.f32 %v567, %v561
          %v569 = vadd.f32 %v568, 1e-05
          %v570 = vrsqrt.pop %v569
          %v571 = vmul.f32 %v570, %v569
          %v572 = vmul.f32 %v571, %v570
          %v573 = vmul.f32 0.5, %v572
          %v574 = vsub.f32 1.5, %v573
          %v575 = vmul.f32 %v570, %v574
          %vm576 = vweird.f32 %v569
          %vm577 = vweird.f32 %v570
          %vm578 = vmor %vm576, %vm577
          %v579 = vsel %vm578, %v570, %v575
          %v580 = vmul.f32 %v563, %v579
          %v581 = vadd.f32 %v580, 0.0
          %v582 = vld [vmem:[%s9] sm:$0x1]
          %v583 = vld [vmem:[%s10] sm:$0x1]
          %v584 = vsel %vm551, %v581, 0.0
          %585 = vadd.xlane.f32.xlu0 %v584
          %v586 = vpop.xlane.xlu0 %585
          %v587 = vmul.f32 %v586, %v561
          %v588 = vsub.f32 %v581, %v587
          %v589 = vmul.f32 %v588, %v588
          %v590 = vsel %vm551, %v589, 0.0
          %591 = vadd.xlane.f32.xlu0 %v590
          %v592 = vpop.xlane.xlu0 %591
          %v593 = vmul.f32 %v592, %v561
          %v594 = vadd.f32 %v593, 1e-05
          %v595 = vrsqrt.pop %v594
          %v596 = vmul.f32 %v595, %v594
          %v597 = vmul.f32 %v596, %v595
          %v598 = vmul.f32 0.5, %v597
          %v599 = vsub.f32 1.5, %v598
          %v600 = vmul.f32 %v595, %v599
          %vm601 = vweird.f32 %v594
          %vm602 = vweird.f32 %v595
          %vm603 = vmor %vm601, %vm602
          %v604 = vsel %vm603, %v595, %v600
          %v605 = vmul.f32 %v588, %v604
          %v606 = vperm.slane %v582, 0
          %v607 = vmul.f32 %v605, %v606
          %v608 = vperm.slane %v583, 0
          %v609 = vadd.f32 %v607, %v608
          %v610 = vpack.c.bf16 %v609, %v609
          %v611 = vld [vmem:[%s3] sm:$0xf]
          %v612 = vld [vmem:[%s3 + $0x4] sm:$0xf]
          %v613 = vld [vmem:[%s3 + $0x8] sm:$0xf]
          %v614 = vld [vmem:[%s3 + $0xc] sm:$0xf]
          %v619 = vunpack.c.l.b16 %v611
          %v620 = vunpack.c.l.b16 %v612
          %v621 = vunpack.c.l.b16 %v613
          %v622 = vunpack.c.l.b16 %v614
          %v623 = vpack.c.b16 %v620, %v619
          %v624 = vpack.c.b16 %v622, %v621
          %v628 = vsel %vm551, %v610, 0
          %630 = vmatpush.bf16.msra.mxu0 0
          %631 = vmatpush.bf16.msra.mxu0 0
          %632 = vmatpush.bf16.msra.mxu0 0
          %633 = vmatpush.bf16.msra.mxu0 0
          %634 = vmatpush.bf16.msra.mxu0 0
          %635 = vmatpush.bf16.msra.mxu0 0
          %636 = vmatpush.bf16.msra.mxu0 %v624
          %637 = vmatpush.bf16.msra.mxu0 %v623
          %638 = vmatmul.bf16.gmra.mxu0 %v628
          %v639 = vpop.f32.mrf.mxu0
          %v640 = vadd.f32 0.0, %v639
          %v641 = vpop.f32.mrf.mxu0
          %642 = vdwg.mxu0
          %644 = vrot.lane.b32.xlu0 %v640, 120
          %v645 = vpop.permute.xlu0 %644
          %647 = vrot.lane.b32.xlu0 %v640, 112
          %v648 = vpop.permute.xlu0 %647
          %650 = vrot.lane.b32.xlu0 %v640, 104
          %v651 = vpop.permute.xlu0 %650
          %v653 = vrot.slane %v648, 4
          %vm654 = vcmask 1047556
          %v655 = vsel %vm654, %v653, %v640
          %v656 = vrot.slane %v640, 4
          %v657 = vsel %vm654, %v648, %v656
          %v659 = vunpack.c.l.s4 1983009808
          %v660 = vunpack.c.0.s8 %v659
          %v661 = vperm.slane %v655, %v660
          %v663 = vunpack.c.l.s4 1983009808
          %v664 = vunpack.c.0.s8 %v663
          %v665 = vperm.slane %v657, %v664
          %v666 = vrot.slane %v651, 4
          %v667 = vsel %vm654, %v666, %v645
          %v668 = vrot.slane %v645, 4
          %v669 = vsel %vm654, %v651, %v668
          %v671 = vunpack.c.l.s4 1983009808
          %v672 = vunpack.c.0.s8 %v671
          %v673 = vperm.slane %v667, %v672
          %v675 = vunpack.c.l.s4 1983009808
          %v676 = vunpack.c.0.s8 %v675
          %v677 = vperm.slane %v669, %v676
          %v678 = vrot.slane %v673, 4
          %v679 = vsel %vm654, %v678, %v661
          %v680 = vrot.slane %v661, 4
          %v681 = vsel %vm654, %v673, %v680
          %v683 = vunpack.c.l.s4 1934713408
          %v684 = vunpack.c.0.s8 %v683
          %v685 = vperm.slane %v679, %v684
          %v687 = vunpack.c.l.s4 1934713408
          %v688 = vunpack.c.0.s8 %v687
          %v689 = vperm.slane %v681, %v688
          %v690 = vrot.slane %v677, 4
          %v691 = vsel %vm654, %v690, %v665
          %v692 = vrot.slane %v665, 4
          %v693 = vsel %vm654, %v677, %v692
          %v695 = vunpack.c.l.s4 1934713408
          %v696 = vunpack.c.0.s8 %v695
          %v697 = vperm.slane %v691, %v696
          %v699 = vunpack.c.l.s4 1934713408
          %v700 = vunpack.c.0.s8 %v699
          %v701 = vperm.slane %v693, %v700
          %v702 = vrot.slane %v685, 4
          %v703 = vsel %vm654, 0.0, %v702
          %v704 = vrot.slane %v689, 4
          %v705 = vsel %vm654, 0.0, %v704
          %v706 = vrot.slane %v697, 4
          %v707 = vsel %vm654, 0.0, %v706
          %v708 = vrot.slane %v701, 4
          %v709 = vsel %vm654, 0.0, %v708
          %v710 = vsel %vm654, %v704, %v685
          %v712 = vunpack.c.l.s4 1983009808
          %v713 = vunpack.c.0.s8 %v712
          %v714 = vperm.slane %v710, %v713
          %v715 = vrot.slane %v705, 4
          %v716 = vsel %vm654, %v715, %v703
          %v718 = vunpack.c.l.s4 1983009808
          %v719 = vunpack.c.0.s8 %v718
          %v720 = vperm.slane %v716, %v719
          %v721 = vsel %vm654, %v708, %v697
          %v723 = vunpack.c.l.s4 1983009808
          %v724 = vunpack.c.0.s8 %v723
          %v725 = vperm.slane %v721, %v724
          %v726 = vrot.slane %v709, 4
          %v727 = vsel %vm654, %v726, %v707
          %v729 = vunpack.c.l.s4 1983009808
          %v730 = vunpack.c.0.s8 %v729
          %v731 = vperm.slane %v727, %v730
          %v732 = vrot.slane %v720, 4
          %v733 = vsel %vm654, %v732, %v714
          %v734 = vrot.slane %v714, 4
          %v735 = vsel %vm654, %v720, %v734
          %v737 = vunpack.c.l.s4 1934713408
          %v738 = vunpack.c.0.s8 %v737
          %v739 = vperm.slane %v733, %v738
          %v741 = vunpack.c.l.s4 1934713408
          %v742 = vunpack.c.0.s8 %v741
          %v743 = vperm.slane %v735, %v742
          %v744 = vrot.slane %v731, 4
          %v745 = vsel %vm654, %v744, %v725
          %v746 = vrot.slane %v725, 4
          %v747 = vsel %vm654, %v731, %v746
          %v749 = vunpack.c.l.s4 1934713408
          %v750 = vunpack.c.0.s8 %v749
          %v751 = vperm.slane %v745, %v750
          %v753 = vunpack.c.l.s4 1934713408
          %v754 = vunpack.c.0.s8 %v753
          %v755 = vperm.slane %v747, %v754
          %v756 = vrot.slane %v751, 4
          %v757 = vsel %vm654, %v756, %v739
          %v758 = vrot.slane %v739, 4
          %v759 = vsel %vm654, %v751, %v758
          %v760 = vrot.slane %v755, 4
          %v761 = vsel %vm654, %v760, %v743
          %v762 = vrot.slane %v743, 4
          %v763 = vsel %vm654, %v755, %v762
          %v764 = vpack.c.bf16 %v757, %v757
          %v765 = vpack.c.bf16 %v759, %v759
          %v766 = vpack.c.bf16 %v761, %v761
          %v767 = vpack.c.bf16 %v763, %v763
          %vm768 = vcmask 60416
          %769 = vst.msk [vmem:[#allocation2] sm:$0xf] %vm768, %v764
          %770 = vst.msk [vmem:[#allocation2 + $0x4] sm:$0xf] %vm768, %v765
          %771 = vst.msk [vmem:[#allocation2 + $0x8] sm:$0xf] %vm768, %v766
          %772 = vst.msk [vmem:[#allocation2 + $0xc] sm:$0xf] %vm768, %v767
          %v773 = vld [vmem:[%s4] sm:$0xf]
          %v774 = vld [vmem:[%s4 + $0x4] sm:$0xf]
          %v775 = vld [vmem:[%s4 + $0x8] sm:$0xf]
          %v776 = vld [vmem:[%s4 + $0xc] sm:$0xf]
          %v781 = vunpack.c.l.b16 %v773
          %v782 = vunpack.c.l.b16 %v774
          %v783 = vunpack.c.l.b16 %v775
          %v784 = vunpack.c.l.b16 %v776
          %v785 = vpack.c.b16 %v782, %v781
          %v786 = vpack.c.b16 %v784, %v783
          %789 = vmatpush.bf16.msra.mxu0 0
          %790 = vmatpush.bf16.msra.mxu0 0
          %791 = vmatpush.bf16.msra.mxu0 0
          %792 = vmatpush.bf16.msra.mxu0 0
          %793 = vmatpush.bf16.msra.mxu0 0
          %794 = vmatpush.bf16.msra.mxu0 0
          %795 = vmatpush.bf16.msra.mxu0 %v786
          %796 = vmatpush.bf16.msra.mxu0 %v785
          %797 = vmatmul.bf16.gmra.mxu0 %v628
          %v798 = vpop.f32.mrf.mxu0
          %v799 = vadd.f32 0.0, %v798
          %v800 = vpop.f32.mrf.mxu0
          %801 = vdwg.mxu0
          %803 = vrot.lane.b32.xlu0 %v799, 120
          %v804 = vpop.permute.xlu0 %803
          %806 = vrot.lane.b32.xlu0 %v799, 112
          %v807 = vpop.permute.xlu0 %806
          %809 = vrot.lane.b32.xlu0 %v799, 104
          %v810 = vpop.permute.xlu0 %809
          %v812 = vrot.slane %v807, 4
          %v813 = vsel %vm654, %v812, %v799
          %v814 = vrot.slane %v799, 4
          %v815 = vsel %vm654, %v807, %v814
          %v817 = vunpack.c.l.s4 1983009808
          %v818 = vunpack.c.0.s8 %v817
          %v819 = vperm.slane %v813, %v818
          %v821 = vunpack.c.l.s4 1983009808
          %v822 = vunpack.c.0.s8 %v821
          %v823 = vperm.slane %v815, %v822
          %v824 = vrot.slane %v810, 4
          %v825 = vsel %vm654, %v824, %v804
          %v826 = vrot.slane %v804, 4
          %v827 = vsel %vm654, %v810, %v826
          %v829 = vunpack.c.l.s4 1983009808
          %v830 = vunpack.c.0.s8 %v829
          %v831 = vperm.slane %v825, %v830
          %v833 = vunpack.c.l.s4 1983009808
          %v834 = vunpack.c.0.s8 %v833
          %v835 = vperm.slane %v827, %v834
          %v836 = vrot.slane %v831, 4
          %v837 = vsel %vm654, %v836, %v819
          %v838 = vrot.slane %v819, 4
          %v839 = vsel %vm654, %v831, %v838
          %v841 = vunpack.c.l.s4 1934713408
          %v842 = vunpack.c.0.s8 %v841
          %v843 = vperm.slane %v837, %v842
          %v845 = vunpack.c.l.s4 1934713408
          %v846 = vunpack.c.0.s8 %v845
          %v847 = vperm.slane %v839, %v846
          %v848 = vrot.slane %v835, 4
          %v849 = vsel %vm654, %v848, %v823
          %v850 = vrot.slane %v823, 4
          %v851 = vsel %vm654, %v835, %v850
          %v853 = vunpack.c.l.s4 1934713408
          %v854 = vunpack.c.0.s8 %v853
          %v855 = vperm.slane %v849, %v854
          %v857 = vunpack.c.l.s4 1934713408
          %v858 = vunpack.c.0.s8 %v857
          %v859 = vperm.slane %v851, %v858
          %v860 = vrot.slane %v843, 4
          %v861 = vsel %vm654, 0.0, %v860
          %v862 = vrot.slane %v847, 4
          %v863 = vsel %vm654, 0.0, %v862
          %v864 = vrot.slane %v855, 4
          %v865 = vsel %vm654, 0.0, %v864
          %v866 = vrot.slane %v859, 4
          %v867 = vsel %vm654, 0.0, %v866
          %v868 = vsel %vm654, %v862, %v843
          %v870 = vunpack.c.l.s4 1983009808
          %v871 = vunpack.c.0.s8 %v870
          %v872 = vperm.slane %v868, %v871
          %v873 = vrot.slane %v863, 4
          %v874 = vsel %vm654, %v873, %v861
          %v876 = vunpack.c.l.s4 1983009808
          %v877 = vunpack.c.0.s8 %v876
          %v878 = vperm.slane %v874, %v877
          %v879 = vsel %vm654, %v866, %v855
          %v881 = vunpack.c.l.s4 1983009808
          %v882 = vunpack.c.0.s8 %v881
          %v883 = vperm.slane %v879, %v882
          %v884 = vrot.slane %v867, 4
          %v885 = vsel %vm654, %v884, %v865
          %v887 = vunpack.c.l.s4 1983009808
          %v888 = vunpack.c.0.s8 %v887
          %v889 = vperm.slane %v885, %v888
          %v890 = vrot.slane %v878, 4
          %v891 = vsel %vm654, %v890, %v872
          %v892 = vrot.slane %v872, 4
          %v893 = vsel %vm654, %v878, %v892
          %v895 = vunpack.c.l.s4 1934713408
          %v896 = vunpack.c.0.s8 %v895
          %v897 = vperm.slane %v891, %v896
          %v899 = vunpack.c.l.s4 1934713408
          %v900 = vunpack.c.0.s8 %v899
          %v901 = vperm.slane %v893, %v900
          %v902 = vrot.slane %v889, 4
          %v903 = vsel %vm654, %v902, %v883
          %v904 = vrot.slane %v883, 4
          %v905 = vsel %vm654, %v889, %v904
          %v907 = vunpack.c.l.s4 1934713408
          %v908 = vunpack.c.0.s8 %v907
          %v909 = vperm.slane %v903, %v908
          %v911 = vunpack.c.l.s4 1934713408
          %v912 = vunpack.c.0.s8 %v911
          %v913 = vperm.slane %v905, %v912
          %v914 = vrot.slane %v909, 4
          %v915 = vsel %vm654, %v914, %v897
          %v916 = vrot.slane %v897, 4
          %v917 = vsel %vm654, %v909, %v916
          %v918 = vrot.slane %v913, 4
          %v919 = vsel %vm654, %v918, %v901
          %v920 = vrot.slane %v901, 4
          %v921 = vsel %vm654, %v913, %v920
          %v922 = vpack.c.bf16 %v915, %v915
          %v923 = vpack.c.bf16 %v917, %v917
          %v924 = vpack.c.bf16 %v919, %v919
          %v925 = vpack.c.bf16 %v921, %v921
          %926 = vst.msk [vmem:[#allocation3] sm:$0xf] %vm768, %v922
          %927 = vst.msk [vmem:[#allocation3 + $0x4] sm:$0xf] %vm768, %v923
          %928 = vst.msk [vmem:[#allocation3 + $0x8] sm:$0xf] %vm768, %v924
          %929 = vst.msk [vmem:[#allocation3 + $0xc] sm:$0xf] %vm768, %v925
        $region76: #{tpu_custom_call.1} parent=63 // pred_fallthru
          _
        %s930 = smul.u32 %s42, 8
        %s931 = scalar_lea.vmem %s544, %s930
        %v932 = vld [vmem:[%s931] sm:$0xff]
        %vm933 = vcmask 261120
        %v934 = vsel %vm933, %v932, 0.0
        %935 = vadd.xlane.f32.xlu0 %v934
        %v936 = vpop.xlane.xlu0 %935
        %v937 = vrcp.pop 32.0
        %v938 = vmul.f32 32.0, %v937
        %v939 = vsub.f32 1.0, %v938
        %v940 = vmul.f32 %v937, %v939
        %v941 = vadd.f32 %v937, %v940
        %vm942 = vweird.f32 %v937
        %v943 = vsel %vm942, %v937, %v941
        %v944 = vmul.f32 %v936, %v943
        %v945 = vsub.f32 %v932, %v944
        %v946 = vmul.f32 %v945, %v945
        %v947 = vsel %vm933, %v946, 0.0
        %948 = vadd.xlane.f32.xlu0 %v947
        %v949 = vpop.xlane.xlu0 %948
        %v950 = vmul.f32 %v949, %v943
        %v951 = vadd.f32 %v950, 1e-05
        %v952 = vrsqrt.pop %v951
        %v953 = vmul.f32 %v952, %v951
        %v954 = vmul.f32 %v953, %v952
        %v955 = vmul.f32 0.5, %v954
        %v956 = vsub.f32 1.5, %v955
        %v957 = vmul.f32 %v952, %v956
        %vm958 = vweird.f32 %v951
        %vm959 = vweird.f32 %v952
        %vm960 = vmor %vm958, %vm959
        %v961 = vsel %vm960, %v952, %v957
        %v962 = vmul.f32 %v945, %v961
        %v963 = vadd.f32 %v962, 0.0
        %v964 = vld [vmem:[%s9] sm:$0x1]
        %v965 = vld [vmem:[%s10] sm:$0x1]
        %v966 = vsel %vm933, %v963, 0.0
        %967 = vadd.xlane.f32.xlu0 %v966
        %v968 = vpop.xlane.xlu0 %967
        %v969 = vmul.f32 %v968, %v943
        %v970 = vsub.f32 %v963, %v969
        %v971 = vmul.f32 %v970, %v970
        %v972 = vsel %vm933, %v971, 0.0
        %973 = vadd.xlane.f32.xlu0 %v972
        %v974 = vpop.xlane.xlu0 %973
        %v975 = vmul.f32 %v974, %v943
        %v976 = vadd.f32 %v975, 1e-05
        %v977 = vrsqrt.pop %v976
        %v978 = vmul.f32 %v977, %v976
        %v979 = vmul.f32 %v978, %v977
        %v980 = vmul.f32 0.5, %v979
        %v981 = vsub.f32 1.5, %v980
        %v982 = vmul.f32 %v977, %v981
        %vm983 = vweird.f32 %v976
        %vm984 = vweird.f32 %v977
        %vm985 = vmor %vm983, %vm984
        %v986 = vsel %vm985, %v977, %v982
        %v987 = vmul.f32 %v970, %v986
        %v988 = vperm.slane %v964, 0
        %v989 = vmul.f32 %v987, %v988
        %v990 = vperm.slane %v965, 0
        %v991 = vadd.f32 %v989, %v990
        %v992 = vpack.c.bf16 %v991, %v991
        %v993 = vld [vmem:[%s2] sm:$0xf]
        %v994 = vld [vmem:[%s2 + $0x4] sm:$0xf]
        %v995 = vld [vmem:[%s2 + $0x8] sm:$0xf]
        %v996 = vld [vmem:[%s2 + $0xc] sm:$0xf]
        %v1001 = vunpack.c.l.b16 %v993
        %v1002 = vunpack.c.l.b16 %v994
        %v1003 = vunpack.c.l.b16 %v995
        %v1004 = vunpack.c.l.b16 %v996
        %v1005 = vpack.c.b16 %v1002, %v1001
        %v1006 = vpack.c.b16 %v1004, %v1003
        %v1010 = vsel %vm933, %v992, 0
        %1012 = vmatpush.bf16.msra.mxu0 0
        %1013 = vmatpush.bf16.msra.mxu0 0
        %1014 = vmatpush.bf16.msra.mxu0 0
        %1015 = vmatpush.bf16.msra.mxu0 0
        %1016 = vmatpush.bf16.msra.mxu0 0
        %1017 = vmatpush.bf16.msra.mxu0 0
        %1018 = vmatpush.bf16.msra.mxu0 %v1006
        %1019 = vmatpush.bf16.msra.mxu0 %v1005
        %1020 = vmatmul.bf16.gmra.mxu0 %v1010
        %v1021 = vpop.f32.mrf.mxu0
        %v1022 = vadd.f32 0.0, %v1021
        %v1023 = vpop.f32.mrf.mxu0
        %1024 = vdwg.mxu0
        %1026 = vrot.lane.b32.xlu0 %v1022, 120
        %v1027 = vpop.permute.xlu0 %1026
        %1029 = vrot.lane.b32.xlu0 %v1022, 112
        %v1030 = vpop.permute.xlu0 %1029
        %1032 = vrot.lane.b32.xlu0 %v1022, 104
        %v1033 = vpop.permute.xlu0 %1032
        %v1035 = vrot.slane %v1030, 4
        %vm1036 = vcmask 1047556
        %v1037 = vsel %vm1036, %v1035, %v1022
        %v1038 = vrot.slane %v1022, 4
        %v1039 = vsel %vm1036, %v1030, %v1038
        %v1041 = vunpack.c.l.s4 1983009808
        %v1042 = vunpack.c.0.s8 %v1041
        %v1043 = vperm.slane %v1037, %v1042
        %v1045 = vunpack.c.l.s4 1983009808
        %v1046 = vunpack.c.0.s8 %v1045
        %v1047 = vperm.slane %v1039, %v1046
        %v1048 = vrot.slane %v1033, 4
        %v1049 = vsel %vm1036, %v1048, %v1027
        %v1050 = vrot.slane %v1027, 4
        %v1051 = vsel %vm1036, %v1033, %v1050
        %v1053 = vunpack.c.l.s4 1983009808
        %v1054 = vunpack.c.0.s8 %v1053
        %v1055 = vperm.slane %v1049, %v1054
        %v1057 = vunpack.c.l.s4 1983009808
        %v1058 = vunpack.c.0.s8 %v1057
        %v1059 = vperm.slane %v1051, %v1058
        %v1060 = vrot.slane %v1055, 4
        %v1061 = vsel %vm1036, %v1060, %v1043
        %v1062 = vrot.slane %v1043, 4
        %v1063 = vsel %vm1036, %v1055, %v1062
        %v1065 = vunpack.c.l.s4 1934713408
        %v1066 = vunpack.c.0.s8 %v1065
        %v1067 = vperm.slane %v1061, %v1066
        %v1069 = vunpack.c.l.s4 1934713408
        %v1070 = vunpack.c.0.s8 %v1069
        %v1071 = vperm.slane %v1063, %v1070
        %v1072 = vrot.slane %v1059, 4
        %v1073 = vsel %vm1036, %v1072, %v1047
        %v1074 = vrot.slane %v1047, 4
        %v1075 = vsel %vm1036, %v1059, %v1074
        %v1077 = vunpack.c.l.s4 1934713408
        %v1078 = vunpack.c.0.s8 %v1077
        %v1079 = vperm.slane %v1073, %v1078
        %v1081 = vunpack.c.l.s4 1934713408
        %v1082 = vunpack.c.0.s8 %v1081
        %v1083 = vperm.slane %v1075, %v1082
        %v1084 = vrot.slane %v1067, 4
        %v1085 = vsel %vm1036, 0.0, %v1084
        %v1086 = vrot.slane %v1071, 4
        %v1087 = vsel %vm1036, 0.0, %v1086
        %v1088 = vrot.slane %v1079, 4
        %v1089 = vsel %vm1036, 0.0, %v1088
        %v1090 = vrot.slane %v1083, 4
        %v1091 = vsel %vm1036, 0.0, %v1090
        %v1092 = vsel %vm1036, %v1086, %v1067
        %v1094 = vunpack.c.l.s4 1983009808
        %v1095 = vunpack.c.0.s8 %v1094
        %v1096 = vperm.slane %v1092, %v1095
        %v1097 = vrot.slane %v1087, 4
        %v1098 = vsel %vm1036, %v1097, %v1085
        %v1100 = vunpack.c.l.s4 1983009808
        %v1101 = vunpack.c.0.s8 %v1100
        %v1102 = vperm.slane %v1098, %v1101
        %v1103 = vsel %vm1036, %v1090, %v1079
        %v1105 = vunpack.c.l.s4 1983009808
        %v1106 = vunpack.c.0.s8 %v1105
        %v1107 = vperm.slane %v1103, %v1106
        %v1108 = vrot.slane %v1091, 4
        %v1109 = vsel %vm1036, %v1108, %v1089
        %v1111 = vunpack.c.l.s4 1983009808
        %v1112 = vunpack.c.0.s8 %v1111
        %v1113 = vperm.slane %v1109, %v1112
        %v1114 = vrot.slane %v1102, 4
        %v1115 = vsel %vm1036, %v1114, %v1096
        %v1116 = vrot.slane %v1096, 4
        %v1117 = vsel %vm1036, %v1102, %v1116
        %v1119 = vunpack.c.l.s4 1934713408
        %v1120 = vunpack.c.0.s8 %v1119
        %v1121 = vperm.slane %v1115, %v1120
        %v1123 = vunpack.c.l.s4 1934713408
        %v1124 = vunpack.c.0.s8 %v1123
        %v1125 = vperm.slane %v1117, %v1124
        %v1126 = vrot.slane %v1113, 4
        %v1127 = vsel %vm1036, %v1126, %v1107
        %v1128 = vrot.slane %v1107, 4
        %v1129 = vsel %vm1036, %v1113, %v1128
        %v1131 = vunpack.c.l.s4 1934713408
        %v1132 = vunpack.c.0.s8 %v1131
        %v1133 = vperm.slane %v1127, %v1132
        %v1135 = vunpack.c.l.s4 1934713408
        %v1136 = vunpack.c.0.s8 %v1135
        %v1137 = vperm.slane %v1129, %v1136
        %v1138 = vrot.slane %v1133, 4
        %v1139 = vsel %vm1036, %v1138, %v1121
        %v1140 = vrot.slane %v1121, 4
        %v1141 = vsel %vm1036, %v1133, %v1140
        %v1142 = vrot.slane %v1137, 4
        %v1143 = vsel %vm1036, %v1142, %v1125
        %v1144 = vrot.slane %v1125, 4
        %v1145 = vsel %vm1036, %v1137, %v1144
        %v1146 = vpack.c.bf16 %v1139, %v1139
        %v1147 = vpack.c.bf16 %v1141, %v1141
        %v1148 = vpack.c.bf16 %v1143, %v1143
        %v1149 = vpack.c.bf16 %v1145, %v1145
        %v1150 = vld [vmem:[%s1] sm:$0x1]
        %v1151 = vld [vmem:[%s1 + $0x1] sm:$0x1]
        %v1152 = vld [vmem:[%s1 + $0x2] sm:$0x1]
        %v1153 = vld [vmem:[%s1 + $0x3] sm:$0x1]
        %v1154 = vlaneseq
        %v1155 = vshrl.u32 %v1154, 7
        %v1156 = vstv %s930
        %v1157 = vadd.s32 %v1156, %v1155
        %v1158 = vlaneseq
        %v1159 = vand.u32 %v1158, 127
        %v1160 = vsub.s32 %v1159, %v1157
        %v1161 = vld [vmem:[#allocation2] sm:$0xf]
        %v1162 = vld [vmem:[#allocation2 + $0x4] sm:$0xf]
        %v1163 = vld [vmem:[#allocation2 + $0x8] sm:$0xf]
        %v1164 = vld [vmem:[#allocation2 + $0xc] sm:$0xf]
        %v1165 = vld [vmem:[#allocation3] sm:$0xf]
        %v1166 = vld [vmem:[#allocation3 + $0x4] sm:$0xf]
        %v1167 = vld [vmem:[#allocation3 + $0x8] sm:$0xf]
        %v1168 = vld [vmem:[#allocation3 + $0xc] sm:$0xf]
        %vm1169 = vcmask 64512
        %v1171 = vsel %vm1169, %v1146, 0
        %v1174 = vsel %vm1169, %v1161, 0
        %1176 = vmatpush.bf16.xpose.msra.mxu0 0
        %1177 = vmatpush.bf16.xpose.msra.mxu0 0
        %1178 = vmatpush.bf16.xpose.msra.mxu0 0
        %1179 = vmatpush.bf16.xpose.msra.mxu0 0
        %1180 = vmatpush.bf16.xpose.msra.mxu0 0
        %1181 = vmatpush.bf16.xpose.msra.mxu0 0
        %1182 = vmatpush.bf16.xpose.msra.mxu0 0
        %1183 = vmatpush.bf16.xpose.msra.mxu0 %v1174
        %1184 = vmatmul.bf16.gmra.mxu0 %v1171
        %v1185 = vpop.f32.mrf.mxu0
        %v1186 = vadd.f32 0.0, %v1185
        %v1187 = vpop.f32.mrf.mxu0
        %1188 = vdwg.mxu0
        %v1190 = vsel %vm1169, %v1147, 0
        %v1193 = vsel %vm1169, %v1162, 0
        %1195 = vmatpush.bf16.xpose.msra.mxu0 0
        %1196 = vmatpush.bf16.xpose.msra.mxu0 0
        %1197 = vmatpush.bf16.xpose.msra.mxu0 0
        %1198 = vmatpush.bf16.xpose.msra.mxu0 0
        %1199 = vmatpush.bf16.xpose.msra.mxu0 0
        %1200 = vmatpush.bf16.xpose.msra.mxu0 0
        %1201 = vmatpush.bf16.xpose.msra.mxu0 0
        %1202 = vmatpush.bf16.xpose.msra.mxu0 %v1193
        %1203 = vmatmul.bf16.gmra.mxu0 %v1190
        %v1204 = vpop.f32.mrf.mxu0
        %v1205 = vadd.f32 0.0, %v1204
        %v1206 = vpop.f32.mrf.mxu0
        %1207 = vdwg.mxu0
        %v1209 = vsel %vm1169, %v1148, 0
        %v1212 = vsel %vm1169, %v1163, 0
        %1214 = vmatpush.bf16.xpose.msra.mxu0 0
        %1215 = vmatpush.bf16.xpose.msra.mxu0 0
        %1216 = vmatpush.bf16.xpose.msra.mxu0 0
        %1217 = vmatpush.bf16.xpose.msra.mxu0 0
        %1218 = vmatpush.bf16.xpose.msra.mxu0 0
        %1219 = vmatpush.bf16.xpose.msra.mxu0 0
        %1220 = vmatpush.bf16.xpose.msra.mxu0 0
        %1221 = vmatpush.bf16.xpose.msra.mxu0 %v1212
        %1222 = vmatmul.bf16.gmra.mxu0 %v1209
        %v1223 = vpop.f32.mrf.mxu0
        %v1224 = vadd.f32 0.0, %v1223
        %v1225 = vpop.f32.mrf.mxu0
        %1226 = vdwg.mxu0
        %v1228 = vsel %vm1169, %v1149, 0
        %v1231 = vsel %vm1169, %v1164, 0
        %1233 = vmatpush.bf16.xpose.msra.mxu0 0
        %1234 = vmatpush.bf16.xpose.msra.mxu0 0
        %1235 = vmatpush.bf16.xpose.msra.mxu0 0
        %1236 = vmatpush.bf16.xpose.msra.mxu0 0
        %1237 = vmatpush.bf16.xpose.msra.mxu0 0
        %1238 = vmatpush.bf16.xpose.msra.mxu0 0
        %1239 = vmatpush.bf16.xpose.msra.mxu0 0
        %1240 = vmatpush.bf16.xpose.msra.mxu0 %v1231
        %1241 = vmatmul.bf16.gmra.mxu0 %v1228
        %v1242 = vpop.f32.mrf.mxu0
        %v1243 = vadd.f32 0.0, %v1242
        %v1244 = vpop.f32.mrf.mxu0
        %1245 = vdwg.mxu0
        %v1246 = vmul.f32 %v1186, 0.35355338
        %v1247 = vmul.f32 %v1205, 0.35355338
        %v1248 = vmul.f32 %v1224, 0.35355338
        %v1249 = vmul.f32 %v1243, 0.35355338
        %v1250 = vstv 0
        %v1251 = vadd.s32 %v1160, %v1250
        %vm1252 = vcmp.gt.s32.totalorder %v1251, 0
        %v1253 = vsel %vm1252, -1e+09, 0.0
        %v1254 = vcvt.s32.f32 %v1251
        %v1259 = vperm.slane %v1150, 0
        %v1260 = vperm.slane %v1151, 0
        %v1261 = vperm.slane %v1152, 0
        %v1262 = vperm.slane %v1153, 0
        %1263 = vset.pattern.permute.xlu0 0
        %1264 = vperm.xlu0 %1263, %v1259
        %v1265 = vpop.permute.xlu0 %1264
        %1267 = vset.pattern.permute.xlu0 0
        %1268 = vperm.xlu0 %1267, %v1260
        %v1269 = vpop.permute.xlu0 %1268
        %1271 = vset.pattern.permute.xlu0 0
        %1272 = vperm.xlu0 %1271, %v1261
        %v1273 = vpop.permute.xlu0 %1272
        %1275 = vset.pattern.permute.xlu0 0
        %1276 = vperm.xlu0 %1275, %v1262
        %v1277 = vpop.permute.xlu0 %1276
        %v1279 = vmul.f32 %v1265, %v1254
        %v1280 = vmul.f32 %v1269, %v1254
        %v1281 = vmul.f32 %v1273, %v1254
        %v1282 = vmul.f32 %v1277, %v1254
        %v1283 = vadd.f32 %v1253, %v1279
        %v1284 = vadd.f32 %v1253, %v1280
        %v1285 = vadd.f32 %v1253, %v1281
        %v1286 = vadd.f32 %v1253, %v1282
        %v1287 = vadd.f32 %v1246, %v1283
        %v1288 = vadd.f32 %v1247, %v1284
        %v1289 = vadd.f32 %v1248, %v1285
        %v1290 = vadd.f32 %v1249, %v1286
        %v1291 = vsel %vm1169, %v1287, -inf
        %1292 = vmax.xlane.f32.xlu0 %v1291
        %v1293 = vpop.xlane.xlu0 %1292
        %v1294 = vsel %vm1169, %v1288, -inf
        %1295 = vmax.xlane.f32.xlu0 %v1294
        %v1296 = vpop.xlane.xlu0 %1295
        %v1297 = vsel %vm1169, %v1289, -inf
        %1298 = vmax.xlane.f32.xlu0 %v1297
        %v1299 = vpop.xlane.xlu0 %1298
        %v1300 = vsel %vm1169, %v1290, -inf
        %1301 = vmax.xlane.f32.xlu0 %v1300
        %v1302 = vpop.xlane.xlu0 %1301
        %v1303 = vmax.f32 %v1293, -1e+30
        %v1304 = vmax.f32 %v1296, -1e+30
        %v1305 = vmax.f32 %v1299, -1e+30
        %v1306 = vmax.f32 %v1302, -1e+30
        %v1307 = vsub.f32 -1e+30, %v1303
        %v1308 = vsub.f32 -1e+30, %v1304
        %v1309 = vsub.f32 -1e+30, %v1305
        %v1310 = vsub.f32 -1e+30, %v1306
        %v1311 = vmul.f32 %v1307, 1.442695
        %v1312 = vpow.pop %v1311
        %v1313 = vmul.f32 %v1308, 1.442695
        %v1314 = vpow.pop %v1313
        %v1315 = vmul.f32 %v1309, 1.442695
        %v1316 = vpow.pop %v1315
        %v1317 = vmul.f32 %v1310, 1.442695
        %v1318 = vpow.pop %v1317
        %v1319 = vsub.f32 %v1287, %v1303
        %v1320 = vsub.f32 %v1288, %v1304
        %v1321 = vsub.f32 %v1289, %v1305
        %v1322 = vsub.f32 %v1290, %v1306
        %v1323 = vmul.f32 %v1319, 1.442695
        %v1324 = vpow.pop %v1323
        %v1325 = vmul.f32 %v1320, 1.442695
        %v1326 = vpow.pop %v1325
        %v1327 = vmul.f32 %v1321, 1.442695
        %v1328 = vpow.pop %v1327
        %v1329 = vmul.f32 %v1322, 1.442695
        %v1330 = vpow.pop %v1329
        %v1331 = vmul.f32 %v1312, 0.0
        %v1332 = vmul.f32 %v1314, 0.0
        %v1333 = vmul.f32 %v1316, 0.0
        %v1334 = vmul.f32 %v1318, 0.0
        %v1335 = vsel %vm1169, %v1324, 0.0
        %1336 = vadd.xlane.f32.xlu0 %v1335
        %v1337 = vpop.xlane.xlu0 %1336
        %v1338 = vsel %vm1169, %v1326, 0.0
        %1339 = vadd.xlane.f32.xlu0 %v1338
        %v1340 = vpop.xlane.xlu0 %1339
        %v1341 = vsel %vm1169, %v1328, 0.0
        %1342 = vadd.xlane.f32.xlu0 %v1341
        %v1343 = vpop.xlane.xlu0 %1342
        %v1344 = vsel %vm1169, %v1330, 0.0
        %1345 = vadd.xlane.f32.xlu0 %v1344
        %v1346 = vpop.xlane.xlu0 %1345
        %v1347 = vadd.f32 %v1331, %v1337
        %v1348 = vadd.f32 %v1332, %v1340
        %v1349 = vadd.f32 %v1333, %v1343
        %v1350 = vadd.f32 %v1334, %v1346
        %v1351 = vpack.c.bf16 %v1324, %v1324
        %v1352 = vpack.c.bf16 %v1326, %v1326
        %v1353 = vpack.c.bf16 %v1328, %v1328
        %v1354 = vpack.c.bf16 %v1330, %v1330
        %v1356 = vsel %vm1169, %v1351, 0
        %vm1358 = vcmask 1043456
        %v1360 = vsel %vm1358, %v1165, 0
        %1362 = vmatpush.bf16.msra.mxu0 0
        %1363 = vmatpush.bf16.msra.mxu0 0
        %1364 = vmatpush.bf16.msra.mxu0 0
        %1365 = vmatpush.bf16.msra.mxu0 0
        %1366 = vmatpush.bf16.msra.mxu0 0
        %1367 = vmatpush.bf16.msra.mxu0 0
        %1368 = vmatpush.bf16.msra.mxu0 0
        %1369 = vmatpush.bf16.msra.mxu0 %v1360
        %1370 = vmatmul.bf16.gmra.mxu0 %v1356
        %v1371 = vpop.f32.mrf.mxu0
        %v1372 = vadd.f32 0.0, %v1371
        %v1373 = vpop.f32.mrf.mxu0
        %1374 = vdwg.mxu0
        %v1376 = vsel %vm1169, %v1352, 0
        %v1379 = vsel %vm1358, %v1166, 0
        %1381 = vmatpush.bf16.msra.mxu0 0
        %1382 = vmatpush.bf16.msra.mxu0 0
        %1383 = vmatpush.bf16.msra.mxu0 0
        %1384 = vmatpush.bf16.msra.mxu0 0
        %1385 = vmatpush.bf16.msra.mxu0 0
        %1386 = vmatpush.bf16.msra.mxu0 0
        %1387 = vmatpush.bf16.msra.mxu0 0
        %1388 = vmatpush.bf16.msra.mxu0 %v1379
        %1389 = vmatmul.bf16.gmra.mxu0 %v1376
        %v1390 = vpop.f32.mrf.mxu0
        %v1391 = vadd.f32 0.0, %v1390
        %v1392 = vpop.f32.mrf.mxu0
        %1393 = vdwg.mxu0
        %v1395 = vsel %vm1169, %v1353, 0
        %v1398 = vsel %vm1358, %v1167, 0
        %1400 = vmatpush.bf16.msra.mxu0 0
        %1401 = vmatpush.bf16.msra.mxu0 0
        %1402 = vmatpush.bf16.msra.mxu0 0
        %1403 = vmatpush.bf16.msra.mxu0 0
        %1404 = vmatpush.bf16.msra.mxu0 0
        %1405 = vmatpush.bf16.msra.mxu0 0
        %1406 = vmatpush.bf16.msra.mxu0 0
        %1407 = vmatpush.bf16.msra.mxu0 %v1398
        %1408 = vmatmul.bf16.gmra.mxu0 %v1395
        %v1409 = vpop.f32.mrf.mxu0
        %v1410 = vadd.f32 0.0, %v1409
        %v1411 = vpop.f32.mrf.mxu0
        %1412 = vdwg.mxu0
        %v1414 = vsel %vm1169, %v1354, 0
        %v1417 = vsel %vm1358, %v1168, 0
        %1419 = vmatpush.bf16.msra.mxu0 0
        %1420 = vmatpush.bf16.msra.mxu0 0
        %1421 = vmatpush.bf16.msra.mxu0 0
        %1422 = vmatpush.bf16.msra.mxu0 0
        %1423 = vmatpush.bf16.msra.mxu0 0
        %1424 = vmatpush.bf16.msra.mxu0 0
        %1425 = vmatpush.bf16.msra.mxu0 0
        %1426 = vmatpush.bf16.msra.mxu0 %v1417
        %1427 = vmatmul.bf16.gmra.mxu0 %v1414
        %v1428 = vpop.f32.mrf.mxu0
        %v1429 = vadd.f32 0.0, %v1428
        %v1430 = vpop.f32.mrf.mxu0
        %1431 = vdwg.mxu0
        %v1432 = vadd.f32 %v1331, %v1372
        %v1433 = vadd.f32 %v1332, %v1391
        %v1434 = vadd.f32 %v1333, %v1410
        %v1435 = vadd.f32 %v1334, %v1429
        %v1436 = vrcp.pop %v1347
        %v1437 = vrcp.pop %v1348
        %v1438 = vrcp.pop %v1349
        %v1439 = vrcp.pop %v1350
        %v1440 = vmul.f32 %v1432, %v1436
        %v1441 = vmul.f32 %v1433, %v1437
        %v1442 = vmul.f32 %v1434, %v1438
        %v1443 = vmul.f32 %v1435, %v1439
        %v1444 = vrot.slane %v1442, 4
        %v1445 = vsel %vm1036, %v1444, %v1440
        %v1446 = vrot.slane %v1440, 4
        %v1447 = vsel %vm1036, %v1442, %v1446
        %v1449 = vunpack.c.l.s4 1983009808
        %v1450 = vunpack.c.0.s8 %v1449
        %v1451 = vperm.slane %v1445, %v1450
        %v1453 = vunpack.c.l.s4 1983009808
        %v1454 = vunpack.c.0.s8 %v1453
        %v1455 = vperm.slane %v1447, %v1454
        %v1456 = vrot.slane %v1443, 4
        %v1457 = vsel %vm1036, %v1456, %v1441
        %v1458 = vrot.slane %v1441, 4
        %v1459 = vsel %vm1036, %v1443, %v1458
        %v1461 = vunpack.c.l.s4 1983009808
        %v1462 = vunpack.c.0.s8 %v1461
        %v1463 = vperm.slane %v1457, %v1462
        %v1465 = vunpack.c.l.s4 1983009808
        %v1466 = vunpack.c.0.s8 %v1465
        %v1467 = vperm.slane %v1459, %v1466
        %v1468 = vrot.slane %v1463, 4
        %v1469 = vsel %vm1036, %v1468, %v1451
        %v1470 = vrot.slane %v1451, 4
        %v1471 = vsel %vm1036, %v1463, %v1470
        %v1473 = vunpack.c.l.s4 1934713408
        %v1474 = vunpack.c.0.s8 %v1473
        %v1475 = vperm.slane %v1469, %v1474
        %v1477 = vunpack.c.l.s4 1934713408
        %v1478 = vunpack.c.0.s8 %v1477
        %v1479 = vperm.slane %v1471, %v1478
        %v1480 = vrot.slane %v1467, 4
        %v1481 = vsel %vm1036, %v1480, %v1455
        %v1482 = vrot.slane %v1455, 4
        %v1483 = vsel %vm1036, %v1467, %v1482
        %v1485 = vunpack.c.l.s4 1934713408
        %v1486 = vunpack.c.0.s8 %v1485
        %v1487 = vperm.slane %v1481, %v1486
        %v1489 = vunpack.c.l.s4 1934713408
        %v1490 = vunpack.c.0.s8 %v1489
        %v1491 = vperm.slane %v1483, %v1490
        %v1492 = vrot.slane %v1475, 4
        %v1493 = vsel %vm1036, 0.0, %v1492
        %v1494 = vrot.slane %v1479, 4
        %v1495 = vsel %vm1036, 0.0, %v1494
        %v1496 = vrot.slane %v1487, 4
        %v1497 = vsel %vm1036, 0.0, %v1496
        %v1498 = vrot.slane %v1491, 4
        %v1499 = vsel %vm1036, 0.0, %v1498
        %v1500 = vsel %vm1036, %v1494, %v1475
        %v1502 = vunpack.c.l.s4 1983009808
        %v1503 = vunpack.c.0.s8 %v1502
        %v1504 = vperm.slane %v1500, %v1503
        %v1505 = vrot.slane %v1495, 4
        %v1506 = vsel %vm1036, %v1505, %v1493
        %v1508 = vunpack.c.l.s4 1983009808
        %v1509 = vunpack.c.0.s8 %v1508
        %v1510 = vperm.slane %v1506, %v1509
        %v1511 = vsel %vm1036, %v1498, %v1487
        %v1513 = vunpack.c.l.s4 1983009808
        %v1514 = vunpack.c.0.s8 %v1513
        %v1515 = vperm.slane %v1511, %v1514
        %v1516 = vrot.slane %v1499, 4
        %v1517 = vsel %vm1036, %v1516, %v1497
        %v1519 = vunpack.c.l.s4 1983009808
        %v1520 = vunpack.c.0.s8 %v1519
        %v1521 = vperm.slane %v1517, %v1520
        %v1522 = vrot.slane %v1510, 4
        %v1523 = vsel %vm1036, %v1522, %v1504
        %v1524 = vrot.slane %v1504, 4
        %v1525 = vsel %vm1036, %v1510, %v1524
        %v1527 = vunpack.c.l.s4 1934713408
        %v1528 = vunpack.c.0.s8 %v1527
        %v1529 = vperm.slane %v1523, %v1528
        %v1531 = vunpack.c.l.s4 1934713408
        %v1532 = vunpack.c.0.s8 %v1531
        %v1533 = vperm.slane %v1525, %v1532
        %v1534 = vrot.slane %v1521, 4
        %v1535 = vsel %vm1036, %v1534, %v1515
        %v1536 = vrot.slane %v1515, 4
        %v1537 = vsel %vm1036, %v1521, %v1536
        %v1539 = vunpack.c.l.s4 1934713408
        %v1540 = vunpack.c.0.s8 %v1539
        %v1541 = vperm.slane %v1535, %v1540
        %v1543 = vunpack.c.l.s4 1934713408
        %v1544 = vunpack.c.0.s8 %v1543
        %v1545 = vperm.slane %v1537, %v1544
        %v1546 = vrot.slane %v1541, 4
        %v1547 = vsel %vm1036, %v1546, %v1529
        %v1548 = vrot.slane %v1529, 4
        %v1549 = vsel %vm1036, %v1541, %v1548
        %v1550 = vrot.slane %v1545, 4
        %v1551 = vsel %vm1036, %v1550, %v1533
        %v1552 = vrot.slane %v1533, 4
        %v1553 = vsel %vm1036, %v1545, %v1552
        %1555 = vrot.lane.b32.xlu0 %v1549, 8
        %v1556 = vpop.permute.xlu0 %1555
        %1559 = vrot.lane.b32.xlu0 %v1551, 16
        %v1560 = vpop.permute.xlu0 %1559
        %1563 = vrot.lane.b32.xlu0 %v1553, 24
        %v1564 = vpop.permute.xlu0 %1563
        %v1566 = vsel %vm1169, %v1547, %v1556
        %vm1567 = vcmask 130048
        %v1568 = vsel %vm1567, %v1566, %v1560
        %vm1569 = vcmask 195584
        %v1570 = vsel %vm1569, %v1568, %v1564
        %v1571 = vpack.c.bf16 %v1570, %v1570
        %v1572 = vld [vmem:[%s5] sm:$0xf]
        %v1573 = vld [vmem:[%s5 + $0x4] sm:$0xf]
        %v1574 = vld [vmem:[%s5 + $0x8] sm:$0xf]
        %v1575 = vld [vmem:[%s5 + $0xc] sm:$0xf]
        %v1580 = vunpack.c.l.b16 %v1572
        %v1581 = vunpack.c.l.b16 %v1573
        %v1582 = vunpack.c.l.b16 %v1574
        %v1583 = vunpack.c.l.b16 %v1575
        %v1584 = vpack.c.b16 %v1581, %v1580
        %v1585 = vpack.c.b16 %v1583, %v1582
        %v1589 = vsel %vm933, %v1571, 0
        %1591 = vmatpush.bf16.msra.mxu0 0
        %1592 = vmatpush.bf16.msra.mxu0 0
        %1593 = vmatpush.bf16.msra.mxu0 0
        %1594 = vmatpush.bf16.msra.mxu0 0
        %1595 = vmatpush.bf16.msra.mxu0 0
        %1596 = vmatpush.bf16.msra.mxu0 0
        %1597 = vmatpush.bf16.msra.mxu0 %v1585
        %1598 = vmatpush.bf16.msra.mxu0 %v1584
        %1599 = vmatmul.bf16.gmra.mxu0 %v1589
        %v1600 = vpop.f32.mrf.mxu0
        %v1601 = vadd.f32 0.0, %v1600
        %v1602 = vpop.f32.mrf.mxu0
        %1603 = vdwg.mxu0
        %v1604 = vld [vmem:[%s9 + $0x1] sm:$0x1]
        %v1605 = vld [vmem:[%s10 + $0x1] sm:$0x1]
        %v1606 = vsel %vm933, %v1601, 0.0
        %1607 = vadd.xlane.f32.xlu0 %v1606
        %v1608 = vpop.xlane.xlu0 %1607
        %v1609 = vmul.f32 %v1608, %v943
        %v1610 = vsub.f32 %v1601, %v1609
        %v1611 = vmul.f32 %v1610, %v1610
        %v1612 = vsel %vm933, %v1611, 0.0
        %1613 = vadd.xlane.f32.xlu0 %v1612
        %v1614 = vpop.xlane.xlu0 %1613
        %v1615 = vmul.f32 %v1614, %v943
        %v1616 = vadd.f32 %v1615, 1e-05
        %v1617 = vrsqrt.pop %v1616
        %v1618 = vmul.f32 %v1617, %v1616
        %v1619 = vmul.f32 %v1618, %v1617
        %v1620 = vmul.f32 0.5, %v1619
        %v1621 = vsub.f32 1.5, %v1620
        %v1622 = vmul.f32 %v1617, %v1621
        %vm1623 = vweird.f32 %v1616
        %vm1624 = vweird.f32 %v1617
        %vm1625 = vmor %vm1623, %vm1624
        %v1626 = vsel %vm1625, %v1617, %v1622
        %v1627 = vmul.f32 %v1610, %v1626
        %v1628 = vperm.slane %v1604, 0
        %v1629 = vmul.f32 %v1627, %v1628
        %v1630 = vperm.slane %v1605, 0
        %v1631 = vadd.f32 %v1629, %v1630
        %v1632 = vadd.f32 %v963, %v1631
        %v1633 = vld [vmem:[%s9 + $0x2] sm:$0x1]
        %v1634 = vld [vmem:[%s10 + $0x2] sm:$0x1]
        %v1635 = vsel %vm933, %v1632, 0.0
        %1636 = vadd.xlane.f32.xlu0 %v1635
        %v1637 = vpop.xlane.xlu0 %1636
        %v1638 = vmul.f32 %v1637, %v943
        %v1639 = vsub.f32 %v1632, %v1638
        %v1640 = vmul.f32 %v1639, %v1639
        %v1641 = vsel %vm933, %v1640, 0.0
        %1642 = vadd.xlane.f32.xlu0 %v1641
        %v1643 = vpop.xlane.xlu0 %1642
        %v1644 = vmul.f32 %v1643, %v943
        %v1645 = vadd.f32 %v1644, 1e-05
        %v1646 = vrsqrt.pop %v1645
        %v1647 = vmul.f32 %v1646, %v1645
        %v1648 = vmul.f32 %v1647, %v1646
        %v1649 = vmul.f32 0.5, %v1648
        %v1650 = vsub.f32 1.5, %v1649
        %v1651 = vmul.f32 %v1646, %v1650
        %vm1652 = vweird.f32 %v1645
        %vm1653 = vweird.f32 %v1646
        %vm1654 = vmor %vm1652, %vm1653
        %v1655 = vsel %vm1654, %v1646, %v1651
        %v1656 = vmul.f32 %v1639, %v1655
        %v1657 = vperm.slane %v1633, 0
        %v1658 = vmul.f32 %v1656, %v1657
        %v1659 = vperm.slane %v1634, 0
        %v1660 = vadd.f32 %v1658, %v1659
        %v1661 = vpack.c.bf16 %v1660, %v1660
        %v1662 = vld [vmem:[#allocation4] sm:$0xf]
        %v1663 = vld [vmem:[#allocation4 + $0x4] sm:$0xf]
        %v1664 = vld [vmem:[#allocation4 + $0x8] sm:$0xf]
        %v1665 = vld [vmem:[#allocation4 + $0xc] sm:$0xf]
        %v1670 = vunpack.c.l.b16 %v1662
        %v1671 = vunpack.c.l.b16 %v1663
        %v1672 = vunpack.c.l.b16 %v1664
        %v1673 = vunpack.c.l.b16 %v1665
        %v1674 = vpack.c.b16 %v1671, %v1670
        %v1675 = vpack.c.b16 %v1673, %v1672
        %v1679 = vsel %vm933, %v1661, 0
        %1681 = vmatpush.bf16.msra.mxu0 0
        %1682 = vmatpush.bf16.msra.mxu0 0
        %1683 = vmatpush.bf16.msra.mxu0 0
        %1684 = vmatpush.bf16.msra.mxu0 0
        %1685 = vmatpush.bf16.msra.mxu0 0
        %1686 = vmatpush.bf16.msra.mxu0 0
        %1687 = vmatpush.bf16.msra.mxu0 %v1675
        %1688 = vmatpush.bf16.msra.mxu0 %v1674
        %1689 = vmatmul.bf16.gmra.mxu0 %v1679
        %v1690 = vpop.f32.mrf.mxu0
        %v1691 = vadd.f32 0.0, %v1690
        %v1692 = vpop.f32.mrf.mxu0
        %1693 = vdwg.mxu0
        %v1694 = vld [vmem:[#allocation7] sm:$0xf]
        %v1695 = vld [vmem:[#allocation7 + $0x4] sm:$0xf]
        %v1696 = vld [vmem:[#allocation7 + $0x8] sm:$0xf]
        %v1697 = vld [vmem:[#allocation7 + $0xc] sm:$0xf]
        %v1702 = vunpack.c.l.b16 %v1694
        %v1703 = vunpack.c.l.b16 %v1695
        %v1704 = vunpack.c.l.b16 %v1696
        %v1705 = vunpack.c.l.b16 %v1697
        %v1706 = vpack.c.b16 %v1703, %v1702
        %v1707 = vpack.c.b16 %v1705, %v1704
        %1710 = vmatpush.bf16.msra.mxu0 0
        %1711 = vmatpush.bf16.msra.mxu0 0
        %1712 = vmatpush.bf16.msra.mxu0 0
        %1713 = vmatpush.bf16.msra.mxu0 0
        %1714 = vmatpush.bf16.msra.mxu0 0
        %1715 = vmatpush.bf16.msra.mxu0 0
        %1716 = vmatpush.bf16.msra.mxu0 %v1707
        %1717 = vmatpush.bf16.msra.mxu0 %v1706
        %1718 = vmatmul.bf16.gmra.mxu0 %v1679
        %v1719 = vpop.f32.mrf.mxu0
        %v1720 = vadd.f32 0.0, %v1719
        %v1721 = vpop.f32.mrf.mxu0
        %1722 = vdwg.mxu0
        %v1723 = vmul.f32 %v1691, %v1720
        %v1724 = vpack.c.bf16 %v1723, %v1723
        %v1725 = vld [vmem:[%s8] sm:$0xf]
        %v1726 = vld [vmem:[%s8 + $0x4] sm:$0xf]
        %v1727 = vld [vmem:[%s8 + $0x8] sm:$0xf]
        %v1728 = vld [vmem:[%s8 + $0xc] sm:$0xf]
        %v1729 = vld [vmem:[%s8 + $0x10] sm:$0xf]
        %v1730 = vld [vmem:[%s8 + $0x14] sm:$0xf]
        %v1731 = vld [vmem:[%s8 + $0x18] sm:$0xf]
        %v1732 = vld [vmem:[%s8 + $0x1c] sm:$0xf]
        %v1733 = vld [vmem:[%s8 + $0x20] sm:$0xf]
        %v1734 = vld [vmem:[%s8 + $0x24] sm:$0xf]
        %v1735 = vld [vmem:[%s8 + $0x28] sm:$0xf]
        %v1736 = vld [vmem:[%s8 + $0x2c] sm:$0xf]
        %v1737 = vld [vmem:[%s8 + $0x30] sm:$0xf]
        %v1738 = vld [vmem:[%s8 + $0x34] sm:$0xf]
        %v1739 = vld [vmem:[%s8 + $0x38] sm:$0xf]
        %v1740 = vld [vmem:[%s8 + $0x3c] sm:$0xf]
        %v1757 = vunpack.c.l.b16 %v1725
        %v1758 = vunpack.c.l.b16 %v1726
        %v1759 = vunpack.c.l.b16 %v1727
        %v1760 = vunpack.c.l.b16 %v1728
        %v1761 = vunpack.c.l.b16 %v1729
        %v1762 = vunpack.c.l.b16 %v1730
        %v1763 = vunpack.c.l.b16 %v1731
        %v1764 = vunpack.c.l.b16 %v1732
        %v1765 = vunpack.c.l.b16 %v1733
        %v1766 = vunpack.c.l.b16 %v1734
        %v1767 = vunpack.c.l.b16 %v1735
        %v1768 = vunpack.c.l.b16 %v1736
        %v1769 = vunpack.c.l.b16 %v1737
        %v1770 = vunpack.c.l.b16 %v1738
        %v1771 = vunpack.c.l.b16 %v1739
        %v1772 = vunpack.c.l.b16 %v1740
        %v1773 = vpack.c.b16 %v1758, %v1757
        %v1774 = vpack.c.b16 %v1760, %v1759
        %v1775 = vpack.c.b16 %v1762, %v1761
        %v1776 = vpack.c.b16 %v1764, %v1763
        %v1777 = vpack.c.b16 %v1766, %v1765
        %v1778 = vpack.c.b16 %v1768, %v1767
        %v1779 = vpack.c.b16 %v1770, %v1769
        %v1780 = vpack.c.b16 %v1772, %v1771
        %1789 = vmatpush.bf16.msra.mxu0 %v1780
        %1790 = vmatpush.bf16.msra.mxu0 %v1779
        %1791 = vmatpush.bf16.msra.mxu0 %v1778
        %1792 = vmatpush.bf16.msra.mxu0 %v1777
        %1793 = vmatpush.bf16.msra.mxu0 %v1776
        %1794 = vmatpush.bf16.msra.mxu0 %v1775
        %1795 = vmatpush.bf16.msra.mxu0 %v1774
        %1796 = vmatpush.bf16.msra.mxu0 %v1773
        %1797 = vmatmul.bf16.gmra.mxu0 %v1724
        %v1798 = vpop.f32.mrf.mxu0
        %v1799 = vadd.f32 0.0, %v1798
        %v1800 = vpop.f32.mrf.mxu0
        %1801 = vdwg.mxu0
        %v1802 = vld [vmem:[%s9 + $0x3] sm:$0x1]
        %v1803 = vld [vmem:[%s10 + $0x3] sm:$0x1]
        %v1804 = vsel %vm933, %v1799, 0.0
        %1805 = vadd.xlane.f32.xlu0 %v1804
        %v1806 = vpop.xlane.xlu0 %1805
        %v1807 = vmul.f32 %v1806, %v943
        %v1808 = vsub.f32 %v1799, %v1807
        %v1809 = vmul.f32 %v1808, %v1808
        %v1810 = vsel %vm933, %v1809, 0.0
        %1811 = vadd.xlane.f32.xlu0 %v1810
        %v1812 = vpop.xlane.xlu0 %1811
        %v1813 = vmul.f32 %v1812, %v943
        %v1814 = vadd.f32 %v1813, 1e-05
        %v1815 = vrsqrt.pop %v1814
        %v1816 = vmul.f32 %v1815, %v1814
        %v1817 = vmul.f32 %v1816, %v1815
        %v1818 = vmul.f32 0.5, %v1817
        %v1819 = vsub.f32 1.5, %v1818
        %v1820 = vmul.f32 %v1815, %v1819
        %vm1821 = vweird.f32 %v1814
        %vm1822 = vweird.f32 %v1815
        %vm1823 = vmor %vm1821, %vm1822
        %v1824 = vsel %vm1823, %v1815, %v1820
        %v1825 = vmul.f32 %v1808, %v1824
        %v1826 = vperm.slane %v1802, 0
        %v1827 = vmul.f32 %v1825, %v1826
        %v1828 = vperm.slane %v1803, 0
        %v1829 = vadd.f32 %v1827, %v1828
        %v1830 = vadd.f32 %v1632, %v1829
        %1831 = vst.msk [vmem:[%s519] sm:$0xff] %vm933, %v1632
        %1832 = vst.msk [vmem:[%s526] sm:$0xff] %vm933, %v1830
        %1833 = vst.msk [vmem:[%s533] sm:$0xff] %vm933, %v1570
        %1834 = vst.msk [vmem:[%s540] sm:$0xff] %vm933, %v1799
        %s1835 = sand.u32 %s295, 1
        %s1836 = scalar_lea.sflag [#allocation6], %s1835
        %s1837 = sand.u32 %s295, 1
        %s1838 = smul.addr %s1837, 8
        %s1839 = scalar_lea.vmem [#allocation9], %s1838
        %s1840 = sand.u32 %s37, 1
        %s1841 = scalar_lea.sflag [#allocation11], %s1840
        %s1842 = sand.u32 %s323, 1
        %s1843 = smul.addr %s1842, 8
        %s1844 = scalar_lea.vmem [#allocation10], %s1843
        %s1845 = sand.u32 %s37, 1
        %s1846 = scalar_lea.sflag [#allocation11], %s1845
        %s1847 = sand.u32 %s351, 1
        %s1848 = smul.addr %s1847, 8
        %s1849 = scalar_lea.vmem [#allocation12], %s1848
        %s1850 = sand.u32 %s379, 1
        %s1851 = scalar_lea.sflag [#allocation14], %s1850
        %s1852 = sand.u32 %s379, 1
        %s1853 = smul.addr %s1852, 8
        %s1854 = scalar_lea.vmem [#allocation13], %s1853
        // Predicated region
        $region77: #{tpu_custom_call.1} parent=63 // pred_check
          %p1855 = pneg %p305
        $region78: #{tpu_custom_call.1} parent=63 // pred_check_branch
          %1857 = sbr.rel (%p1855) target = $region80
        $region79: #{tpu_custom_call.1} parent=63 // pred_region
          %1859 = vsyncadd %s1836, 0
          %s1860 = sadd.s32 %s42, %s41
          %s1861 = smul.addr %s1860, 8
          %s1862 = scalar_lea.hbm %s11, %s1861
          %s1864 = sshll.u32 %s1839, 4
          %s1865 = int_to_ptr.vmem [resolvable:$true] %s1864
          %s1866 = sshll.u32 %s1862, 4
          %s1867 = int_to_ptr.hbm [resolvable:$true] %s1866
          %1869 = dma.vmem_to_hbm [thread:$0]  %s1865, 128, %s1867, %s1836
        $region80: #{tpu_custom_call.1} parent=63 // pred_fallthru
          _
        // Predicated region
        $region81: #{tpu_custom_call.1} parent=63 // pred_check
          %p1870 = pneg %p333
        $region82: #{tpu_custom_call.1} parent=63 // pred_check_branch
          %1872 = sbr.rel (%p1870) target = $region84
        $region83: #{tpu_custom_call.1} parent=63 // pred_region
          %1874 = vsyncadd %s1841, 0
          %s1875 = sadd.s32 %s42, %s41
          %s1876 = smul.addr %s1875, 8
          %s1877 = scalar_lea.hbm %s12, %s1876
          %s1879 = sshll.u32 %s1844, 4
          %s1880 = int_to_ptr.vmem [resolvable:$true] %s1879
          %s1881 = sshll.u32 %s1877, 4
          %s1882 = int_to_ptr.hbm [resolvable:$true] %s1881
          %1884 = dma.vmem_to_hbm [thread:$0]  %s1880, 128, %s1882, %s1841
        $region84: #{tpu_custom_call.1} parent=63 // pred_fallthru
          _
        // Predicated region
        $region85: #{tpu_custom_call.1} parent=63 // pred_check
          %p1885 = pneg %p361
        $region86: #{tpu_custom_call.1} parent=63 // pred_check_branch
          %1887 = sbr.rel (%p1885) target = $region88
        $region87: #{tpu_custom_call.1} parent=63 // pred_region
          %1889 = vsyncadd %s1846, 0
          %s1890 = sadd.s32 %s42, %s41
          %s1891 = smul.addr %s1890, 8
          %s1892 = scalar_lea.hbm %s13, %s1891
          %s1894 = sshll.u32 %s1849, 4
          %s1895 = int_to_ptr.vmem [resolvable:$true] %s1894
          %s1896 = sshll.u32 %s1892, 4
          %s1897 = int_to_ptr.hbm [resolvable:$true] %s1896
          %1899 = dma.vmem_to_hbm [thread:$0]  %s1895, 128, %s1897, %s1846
        $region88: #{tpu_custom_call.1} parent=63 // pred_fallthru
          _
        // Predicated region
        $region89: #{tpu_custom_call.1} parent=63 // pred_check
          %p1900 = pneg %p389
        $region90: #{tpu_custom_call.1} parent=63 // pred_check_branch
          %1902 = sbr.rel (%p1900) target = $region92
        $region91: #{tpu_custom_call.1} parent=63 // pred_region
          %1904 = vsyncadd %s1851, 0
          %s1905 = sadd.s32 %s42, %s41
          %s1906 = smul.addr %s1905, 8
          %s1907 = scalar_lea.hbm %s14, %s1906
          %s1909 = sshll.u32 %s1854, 4
          %s1910 = int_to_ptr.vmem [resolvable:$true] %s1909
          %s1911 = sshll.u32 %s1907, 4
          %s1912 = int_to_ptr.hbm [resolvable:$true] %s1911
          %1914 = dma.vmem_to_hbm [thread:$0]  %s1910, 128, %s1912, %s1851
        $region92: #{tpu_custom_call.1} parent=63 // pred_fallthru
          _
      $region64: #{tpu_custom_call.1} parent=5 // pred_fallthru
        _
      %p1915 = scmp.le.s32.totalorder 2, %s32
      // Predicated region
      $region93: #{tpu_custom_call.1} parent=5 // pred_check
        %p1916 = pneg %p1915
      $region94: #{tpu_custom_call.1} parent=5 // pred_check_branch
        %1918 = sbr.rel (%p1916) target = $region96
      $region95: #{tpu_custom_call.1} parent=5 // pred_region
        %s1919 = ssub.s32 %s32, 2
        // Predicated region
        $region97: #{tpu_custom_call.1} parent=95 // pred_check
          %p1920 = pneg %p311
        $region98: #{tpu_custom_call.1} parent=95 // pred_check_branch
          %1922 = sbr.rel (%p1920) target = $region100
        $region99: #{tpu_custom_call.1} parent=95 // pred_region
          %s1923 = sand.u32 %s296, 1
          %s1924 = scalar_lea.sflag [#allocation6], %s1923
          %s1925 = sand.u32 %s296, 1
          %s1926 = smul.addr %s1925, 8
          %s1927 = scalar_lea.vmem [#allocation9], %s1926
          %1929 = dma.done %s1924, 128
        $region100: #{tpu_custom_call.1} parent=95 // pred_fallthru
          _
        // Predicated region
        $region101: #{tpu_custom_call.1} parent=95 // pred_check
          %p1930 = pneg %p339
        $region102: #{tpu_custom_call.1} parent=95 // pred_check_branch
          %1932 = sbr.rel (%p1930) target = $region104
        $region103: #{tpu_custom_call.1} parent=95 // pred_region
          %s1933 = sand.u32 %s38, 1
          %s1934 = scalar_lea.sflag [#allocation11], %s1933
          %s1935 = sand.u32 %s324, 1
          %s1936 = smul.addr %s1935, 8
          %s1937 = scalar_lea.vmem [#allocation10], %s1936
          %1939 = dma.done %s1934, 128
        $region104: #{tpu_custom_call.1} parent=95 // pred_fallthru
          _
        // Predicated region
        $region105: #{tpu_custom_call.1} parent=95 // pred_check
          %p1940 = pneg %p367
        $region106: #{tpu_custom_call.1} parent=95 // pred_check_branch
          %1942 = sbr.rel (%p1940) target = $region108
        $region107: #{tpu_custom_call.1} parent=95 // pred_region
          %s1943 = sand.u32 %s38, 1
          %s1944 = scalar_lea.sflag [#allocation11], %s1943
          %s1945 = sand.u32 %s352, 1
          %s1946 = smul.addr %s1945, 8
          %s1947 = scalar_lea.vmem [#allocation12], %s1946
          %1949 = dma.done %s1944, 128
        $region108: #{tpu_custom_call.1} parent=95 // pred_fallthru
          _
        // Predicated region
        $region109: #{tpu_custom_call.1} parent=95 // pred_check
          %p1950 = pneg %p395
        $region110: #{tpu_custom_call.1} parent=95 // pred_check_branch
          %1952 = sbr.rel (%p1950) target = $region112
        $region111: #{tpu_custom_call.1} parent=95 // pred_region
          %s1953 = sand.u32 %s380, 1
          %s1954 = scalar_lea.sflag [#allocation14], %s1953
          %s1955 = sand.u32 %s380, 1
          %s1956 = smul.addr %s1955, 8
          %s1957 = scalar_lea.vmem [#allocation13], %s1956
          %1959 = dma.done %s1954, 128
        $region112: #{tpu_custom_call.1} parent=95 // pred_fallthru
          _
      $region96: #{tpu_custom_call.1} parent=5 // pred_fallthru
        _
    $region6: #{tpu_custom_call.1} parent=1 // loop_footer
      %s36 = sadd.s32 1, %s32
    $region7: #{tpu_custom_call.1} parent=1 // loop_footer_branch
      %31 = sbr.rel target = $region3
    $region8: #{tpu_custom_call.1} parent=1 // loop_exit
      _
    %1960 = vsyncpa [#allocation5], 1
    %s1961 = scalar_lea.sflag [#allocation5], 1
    %1962 = vsyncpa %s1961, 1
    %1963 = vsyncpa [#allocation8], 1
    %1964 = vsyncpa [#allocation6], 1
    %s1965 = scalar_lea.sflag [#allocation6], 1
    %1966 = vsyncpa %s1965, 1
    %1967 = vsyncpa [#allocation11], 1
    %s1968 = scalar_lea.sflag [#allocation11], 1
    %1969 = vsyncpa %s1968, 1
    %1970 = vsyncpa [#allocation14], 1
    %s1971 = scalar_lea.sflag [#allocation14], 1
    %1972 = vsyncpa %s1971, 1

</llo_original>
